<compile_context>
chip_gen: v7x
topology: tpu7x:2x2x1
jax: 0.10.0
libtpu: 0.0.40
codegen_flags: <defaults>
</compile_context>

<pallas_src>
import jax
import jax.numpy as jnp
from jax import lax
from jax.experimental import pallas as pl
from jax.experimental.pallas import tpu as pltpu

VMEM_LIMIT = 32 * 1024 * 1024  # safe on v5e/v6e/v7x; re-derive for production tiles


def _round_up(x, m):
    return (x + m - 1) // m * m


def _pad_to(x, shape):
    return jnp.pad(x, [(0, s - d) for d, s in zip(x.shape, shape)])


# ----------------- Kernel 1: fused GRU recurrence + NARM attention (per batch tile) -----------------
def gru_attn_kernel(emb_ref, len_ref, wi_ref, wh_ref, bx_ref, bhn_ref,
                    a1t_ref, a2t_ref, v_ref, bw1_ref, bw2_ref,
                    tmp_ref, gx_scr, gru_scr):
    T, TB, Ep = emb_ref.shape
    Hp = wh_ref.shape[0]

    wh = wh_ref[...]          # (Hp, 3Hp) — stays live across the recurrence
    bhn = bhn_ref[...]        # (1, Hp)
    lens = len_ref[...]       # (TB, 1) int32

    # Hoisted input-to-hidden projection: one large MXU call instead of T tiny ones.
    gx_all = (jnp.dot(emb_ref[...].reshape(T * TB, Ep), wi_ref[...],
                      preferred_element_type=jnp.float32)
              + bx_ref[...])                                           # (T*TB, 3Hp)
    gx_scr[...] = gx_all.reshape(T, TB, 3 * Hp)

    def step(t, h):
        gx = gx_scr[t]                                                 # (TB, 3Hp)
        gh = jnp.dot(h, wh, preferred_element_type=jnp.float32)        # (TB, 3Hp)
        # lane-aligned gate slabs (Hp is a multiple of 128)
        r = jax.nn.sigmoid(gx[:, 0:Hp] + gh[:, 0:Hp])
        z = jax.nn.sigmoid(gx[:, Hp:2 * Hp] + gh[:, Hp:2 * Hp])
        n = jnp.tanh(gx[:, 2 * Hp:3 * Hp] + r * (gh[:, 2 * Hp:3 * Hp] + bhn))
        h_new = (1.0 - z) * n + z * h
        valid = (lens > t).astype(jnp.float32)                         # (TB, 1)
        out_t = valid * h_new                                          # zero past end
        gru_scr[t] = out_t                                             # VMEM only
        return out_t + (1.0 - valid) * h                               # freeze past end

    h0 = jnp.zeros((TB, Hp), jnp.float32)
    ht = lax.fori_loop(0, T, step, h0, unroll=min(T, 8))               # (TB, Hp)

    # ---- attention: one batched matmul for q1, lane-reduction for alpha ----
    go = gru_scr[...]                                                  # (T, TB, Hp)
    q1 = jnp.dot(go.reshape(T * TB, Hp), a1t_ref[...],
                 preferred_element_type=jnp.float32).reshape(T, TB, Hp)
    q2 = jnp.dot(ht, a2t_ref[...], preferred_element_type=jnp.float32)  # (TB, Hp)

    tids = lax.broadcasted_iota(jnp.int32, (T, TB, 1), 0)
    mask3 = (tids < lens[None, :, :]).astype(jnp.float32)              # (T, TB, 1)

    sig = jax.nn.sigmoid(q1 + mask3 * q2[None, :, :])                  # (T, TB, Hp)
    alpha = jnp.sum(sig * v_ref[...][None, :, :], axis=-1, keepdims=True)  # (T, TB, 1)
    c_local = jnp.sum(alpha * go, axis=0)                              # (TB, Hp)

    # tmp = [c_local, c_global] @ B_w   (item scoring happens in kernel 2)
    tmp_ref[...] = (jnp.dot(c_local, bw1_ref[...], preferred_element_type=jnp.float32)
                    + jnp.dot(ht, bw2_ref[...], preferred_element_type=jnp.float32))


# ----------------- Kernel 2: lane-dense scoring, tiled over items, transpose in-kernel -----------------
def score_kernel(tmp_ref, items_ref, scores_ref):
    # contract (Bp, Ep) x (TILE_N, Ep) along Ep -> (Bp, TILE_N); no HBM-side transpose.
    scores_ref[...] = lax.dot_general(
        tmp_ref[...].astype(items_ref.dtype), items_ref[...],
        dimension_numbers=(((1,), (1,)), ((), ())),
        preferred_element_type=jnp.float32)


# --------------------------------- Full forward ---------------------------------
def narm_forward(seq, lengths, p, item_dtype=jnp.float32):
    T, B = seq.shape
    emb_table = p["emb"]
    N, E = emb_table.shape
    H = p["w_hh"].shape[1]

    Bp = _round_up(B, 8)            # sublane multiple
    Hp = _round_up(H, 128)          # lane-aligned hidden
    Ep = _round_up(E, 128)          # lane-aligned embedding
    Np = _round_up(N, 128)          # lane-aligned vocab

    TB = next(tb for tb in (128, 64, 32, 16, 8) if Bp % tb == 0)
    TILE_N = next(tn for tn in (2048, 1024, 512, 256, 128) if Np % tn == 0)

    # glue: embedding gather + padding (pads are exact zeros -> no numeric effect)
    embs = emb_table[seq]                                        # (T, B, E)
    embs = _pad_to(embs, (T, Bp, Ep)).astype(jnp.float32)
    len2d = _pad_to(lengths.astype(jnp.int32), (Bp,)).reshape(Bp, 1)

    # GRU weights (PyTorch gate order [r, z, n]); each gate gets its own lane-aligned
    # Hp-wide slab; r/z biases folded; zero-padding keeps padded hidden lanes at 0.
    def split_gates(w):
        return w[:H], w[H:2 * H], w[2 * H:]

    wr_i, wz_i, wn_i = split_gates(p["w_ih"])     # (H, E) each
    wr_h, wz_h, wn_h = split_gates(p["w_hh"])     # (H, H) each
    br_i, bz_i, bn_i = split_gates(p["b_ih"])
    br_h, bz_h, bn_h = split_gates(p["b_hh"])

    def pack_in(wr, wz, wn, Kp):                  # -> (Kp, 3*Hp)
        return jnp.concatenate([_pad_to(w.T, (Kp, Hp)) for w in (wr, wz, wn)], axis=1)

    wi = pack_in(wr_i, wz_i, wn_i, Ep)            # (Ep, 3*Hp)
    wh = pack_in(wr_h, wz_h, wn_h, Hp)            # (Hp, 3*Hp)
    bx = jnp.concatenate([_pad_to(br_i + br_h, (Hp,)),
                          _pad_to(bz_i + bz_h, (Hp,)),
                          _pad_to(bn_i, (Hp,))]).reshape(1, 3 * Hp)
    bhn = _pad_to(bn_h, (Hp,)).reshape(1, Hp)

    a1t = _pad_to(p["a1"].T, (Hp, Hp))
    a2t = _pad_to(p["a2"].T, (Hp, Hp))
    vrow = _pad_to(p["v"].reshape(1, H), (1, Hp))
    bw1 = _pad_to(p["b"][:H], (Hp, Ep))
    bw2 = _pad_to(p["b"][H:], (Hp, Ep))

    def rep(shape):                               # replicated operand across batch tiles
        zeros = (0,) * len(shape)
        return pl.BlockSpec(shape, lambda i, _z=zeros: _z)

    tmp = pl.pallas_call(
        gru_attn_kernel,
        grid=(Bp // TB,),
        in_specs=[pl.BlockSpec((T, TB, Ep), lambda i: (0, i, 0)),
                  pl.BlockSpec((TB, 1), lambda i: (i, 0)),
                  rep((Ep, 3 * Hp)), rep((Hp, 3 * Hp)), rep((1, 3 * Hp)), rep((1, Hp)),
                  rep((Hp, Hp)), rep((Hp, Hp)), rep((1, Hp)),
                  rep((Hp, Ep)), rep((Hp, Ep))],
        out_specs=pl.BlockSpec((TB, Ep), lambda i: (i, 0)),
        out_shape=jax.ShapeDtypeStruct((Bp, Ep), jnp.float32),
        scratch_shapes=[pltpu.VMEM((T, TB, 3 * Hp), jnp.float32),   # hoisted gx
                        pltpu.VMEM((T, TB, Hp), jnp.float32)],      # gru_out
        compiler_params=pltpu.CompilerParams(
            dimension_semantics=("parallel",),
            vmem_limit_bytes=VMEM_LIMIT),
    )(embs, len2d, wi, wh, bx, bhn, a1t, a2t, vrow, bw1, bw2)

    # padded (not transposed) table; in production cache this padded table / keep it
    # pre-padded so the hot path does no HBM round trip here.
    items = _pad_to(emb_table, (Np, Ep)).astype(item_dtype)          # (Np, Ep)

    scores_pad = pl.pallas_call(
        score_kernel,
        grid=(Np // TILE_N,),
        in_specs=[pl.BlockSpec((Bp, Ep), lambda j: (0, 0)),
                  pl.BlockSpec((TILE_N, Ep), lambda j: (j, 0))],
        out_specs=pl.BlockSpec((Bp, TILE_N), lambda j: (0, j)),
        out_shape=jax.ShapeDtypeStruct((Bp, Np), jnp.float32),
        compiler_params=pltpu.CompilerParams(
            dimension_semantics=("parallel",),
            vmem_limit_bytes=VMEM_LIMIT),
    )(tmp, items)

    return scores_pad[:B, :N]


# --------------------------------- Pure-JAX reference ---------------------------------
def narm_reference(seq, lengths, p):
    T, B = seq.shape
    emb = p["emb"]
    H = p["w_hh"].shape[1]
    embs = emb[seq]
    w_ih, w_hh, b_ih, b_hh = p["w_ih"], p["w_hh"], p["b_ih"], p["b_hh"]
    h = jnp.zeros((B, H), jnp.float32)
    outs = []
    for t in range(T):
        x = embs[t]
        gi = x @ w_ih.T + b_ih
        gh = h @ w_hh.T + b_hh
        i_r, i_z, i_n = jnp.split(gi, 3, axis=1)
        h_r, h_z, h_n = jnp.split(gh, 3, axis=1)
        r = jax.nn.sigmoid(i_r + h_r)
        z = jax.nn.sigmoid(i_z + h_z)
        n = jnp.tanh(i_n + r * h_n)
        h_new = (1.0 - z) * n + z * h
        valid = (lengths > t).astype(jnp.float32)[:, None]
        h = valid * h_new + (1.0 - valid) * h
        outs.append(valid * h_new)
    gru_out = jnp.stack(outs, 0)                    # (T, B, H)
    ht = h
    go = jnp.transpose(gru_out, (1, 0, 2))          # (B, T, H)
    q1 = go @ p["a1"].T
    q2 = ht @ p["a2"].T
    mask = (seq.T > 0).astype(jnp.float32)          # (B, T)
    sig = jax.nn.sigmoid(q1 + mask[:, :, None] * q2[:, None, :])
    alpha = sig @ p["v"].T                          # (B, T, 1)
    c_local = jnp.sum(alpha * go, axis=1)
    c_t = jnp.concatenate([c_local, ht], axis=1)    # (B, 2H)
    item_trans = emb @ p["b"].T                     # (N, 2H)
    return c_t @ item_trans.T


# --------------------------------- Main ---------------------------------
if __name__ == "__main__":
    n_items, H, E = 64, 32, 32
    T, B = 8, 4

    key = jax.random.PRNGKey(0)
    ks = jax.random.split(key, 10)
    emb_table = 0.1 * jax.random.normal(ks[0], (n_items, E), jnp.float32)
    emb_table = emb_table.at[0].set(0.0)            # padding_idx=0
    params = {
        "emb": emb_table,
        "w_ih": 0.1 * jax.random.normal(ks[1], (3 * H, E), jnp.float32),
        "w_hh": 0.1 * jax.random.normal(ks[2], (3 * H, H), jnp.float32),
        "b_ih": 0.1 * jax.random.normal(ks[3], (3 * H,), jnp.float32),
        "b_hh": 0.1 * jax.random.normal(ks[4], (3 * H,), jnp.float32),
        "a1": 0.1 * jax.random.normal(ks[5], (H, H), jnp.float32),
        "a2": 0.1 * jax.random.normal(ks[6], (H, H), jnp.float32),
        "v": 0.1 * jax.random.normal(ks[7], (1, H), jnp.float32),
        "b": 0.1 * jax.random.normal(ks[8], (2 * H, E), jnp.float32),
    }

    # lengths sorted descending (pack_padded_sequence, enforce_sorted=True);
    # sequences are tail-padded with item id 0, so (t < length) == (seq > 0).
    lengths = jnp.array([8, 6, 4, 2], dtype=jnp.int32)
    seq_items = jax.random.randint(ks[9], (T, B), 1, n_items, dtype=jnp.int32)
    t_idx = jnp.arange(T)[:, None]
    seq = jnp.where(t_idx < lengths[None, :], seq_items, 0)      # (T, B), 0-padded

    scores = narm_forward(seq, lengths, params)                  # item_dtype=jnp.bfloat16 for prod
    scores = jax.block_until_ready(scores)

    ref = narm_reference(seq, lengths, params)
    assert scores.shape == (B, n_items)
    assert jnp.allclose(scores, ref, atol=1e-4, rtol=1e-4), "mismatch vs JAX reference"

    print("KERNEL_OK")
</pallas_src>

<mosaic_0001>
module attributes {stable_mosaic.version = 11 : i64} {
  func.func @gru_attn_kernel(%arg0: i32, %arg1: memref<8x8x128xf32, #tpu.memory_space<vmem>>, %arg2: memref<8x1xi32, #tpu.memory_space<vmem>>, %arg3: memref<128x384xf32, #tpu.memory_space<vmem>>, %arg4: memref<128x384xf32, #tpu.memory_space<vmem>>, %arg5: memref<1x384xf32, #tpu.memory_space<vmem>>, %arg6: memref<1x128xf32, #tpu.memory_space<vmem>>, %arg7: memref<128x128xf32, #tpu.memory_space<vmem>>, %arg8: memref<128x128xf32, #tpu.memory_space<vmem>>, %arg9: memref<1x128xf32, #tpu.memory_space<vmem>>, %arg10: memref<128x128xf32, #tpu.memory_space<vmem>>, %arg11: memref<128x128xf32, #tpu.memory_space<vmem>>, %arg12: memref<8x128xf32, #tpu.memory_space<vmem>>, %arg13: memref<8x8x384xf32, #tpu.memory_space<vmem>>, %arg14: memref<8x8x128xf32, #tpu.memory_space<vmem>>) attributes {dimension_semantics = [#tpu.dimension_semantics<parallel>], iteration_bounds = array<i64: 1>, scalar_prefetch = 0 : i64, scratch_operands = 2 : i64, tpu.core_type = #tpu.core_type<tc>, window_params = [{transform_indices = @transform_0, window_bounds = array<i64: 8, 8, 128>}, {transform_indices = @transform_1, window_bounds = array<i64: 8, 1>}, {pipeline_mode = #tpu.pipeline_mode<synchronous>, transform_indices = @transform_2, window_bounds = array<i64: 128, 384>}, {pipeline_mode = #tpu.pipeline_mode<synchronous>, transform_indices = @transform_3, window_bounds = array<i64: 128, 384>}, {pipeline_mode = #tpu.pipeline_mode<synchronous>, transform_indices = @transform_4, window_bounds = array<i64: 1, 384>}, {pipeline_mode = #tpu.pipeline_mode<synchronous>, transform_indices = @transform_5, window_bounds = array<i64: 1, 128>}, {pipeline_mode = #tpu.pipeline_mode<synchronous>, transform_indices = @transform_6, window_bounds = array<i64: 128, 128>}, {pipeline_mode = #tpu.pipeline_mode<synchronous>, transform_indices = @transform_7, window_bounds = array<i64: 128, 128>}, {pipeline_mode = #tpu.pipeline_mode<synchronous>, transform_indices = @transform_8, window_bounds = array<i64: 1, 128>}, {pipeline_mode = #tpu.pipeline_mode<synchronous>, transform_indices = @transform_9, window_bounds = array<i64: 128, 128>}, {pipeline_mode = #tpu.pipeline_mode<synchronous>, transform_indices = @transform_10, window_bounds = array<i64: 128, 128>}, {transform_indices = @transform_11, window_bounds = array<i64: 8, 128>}]} {
    %c0 = arith.constant 0 : index
    %c0_0 = arith.constant 0 : index
    %0 = vector.load %arg4[%c0, %c0_0] : memref<128x384xf32, #tpu.memory_space<vmem>>, vector<128x384xf32>
    %c0_1 = arith.constant 0 : index
    %c0_2 = arith.constant 0 : index
    %1 = vector.load %arg6[%c0_1, %c0_2] : memref<1x128xf32, #tpu.memory_space<vmem>>, vector<1x128xf32>
    %c0_3 = arith.constant 0 : index
    %c0_4 = arith.constant 0 : index
    %2 = vector.load %arg2[%c0_3, %c0_4] : memref<8x1xi32, #tpu.memory_space<vmem>>, vector<8x1xi32>
    %c0_5 = arith.constant 0 : index
    %c0_6 = arith.constant 0 : index
    %c0_7 = arith.constant 0 : index
    %3 = vector.load %arg1[%c0_5, %c0_6, %c0_7] : memref<8x8x128xf32, #tpu.memory_space<vmem>>, vector<8x8x128xf32>
    %4 = vector.shape_cast %3 : vector<8x8x128xf32> to vector<64x128xf32>
    %c0_8 = arith.constant 0 : index
    %c0_9 = arith.constant 0 : index
    %5 = vector.load %arg3[%c0_8, %c0_9] : memref<128x384xf32, #tpu.memory_space<vmem>>, vector<128x384xf32>
    %cst = arith.constant dense<0.000000e+00> : vector<64x384xf32>
    %6 = tpu.matmul %4, %5, %cst {dimension_numbers = #tpu.dot_dimension_numbers<[1], [0], [0], [1], [0, 0, 1, 1], [], []>} : vector<64x128xf32>, vector<128x384xf32>, vector<64x384xf32> -> vector<64x384xf32>
    %c0_10 = arith.constant 0 : index
    %c0_11 = arith.constant 0 : index
    %7 = vector.load %arg5[%c0_10, %c0_11] : memref<1x384xf32, #tpu.memory_space<vmem>>, vector<1x384xf32>
    %8 = vector.broadcast %7 : vector<1x384xf32> to vector<64x384xf32>
    %9 = arith.addf %6, %8 : vector<64x384xf32>
    %10 = vector.shape_cast %9 : vector<64x384xf32> to vector<8x8x384xf32>
    %c0_12 = arith.constant 0 : index
    %c0_13 = arith.constant 0 : index
    %c0_14 = arith.constant 0 : index
    %11 = vector.load %arg13[%c0_12, %c0_13, %c0_14] : memref<8x8x384xf32, #tpu.memory_space<vmem>>, vector<8x8x384xf32>
    tpu.vector_store %arg13[%c0_12, %c0_13, %c0_14], %10 {strides = array<i32>} : memref<8x8x384xf32, #tpu.memory_space<vmem>>, vector<8x8x384xf32>,
    %cst_15 = arith.constant 0.000000e+00 : f32
    %12 = vector.broadcast %cst_15 : f32 to vector<8x128xf32>
    %c0_i32 = arith.constant 0 : i32
    %13 = arith.index_cast %c0_i32 : i32 to index
    %c0_16 = arith.constant 0 : index
    %c0_17 = arith.constant 0 : index
    %14 = vector.load %arg13[%13, %c0_16, %c0_17] : memref<8x8x384xf32, #tpu.memory_space<vmem>>, vector<1x8x384xf32>
    %15 = vector.shape_cast %14 : vector<1x8x384xf32> to vector<8x384xf32>
    %cst_18 = arith.constant dense<0.000000e+00> : vector<8x384xf32>
    %16 = tpu.matmul %12, %0, %cst_18 {dimension_numbers = #tpu.dot_dimension_numbers<[1], [0], [0], [1], [0, 0, 1, 1], [], []>} : vector<8x128xf32>, vector<128x384xf32>, vector<8x384xf32> -> vector<8x384xf32>
    %17 = vector.extract_strided_slice %15 {offsets = [0, 0], sizes = [8, 128], strides = [1, 1]} : vector<8x384xf32> to vector<8x128xf32>
    %18 = vector.extract_strided_slice %16 {offsets = [0, 0], sizes = [8, 128], strides = [1, 1]} : vector<8x384xf32> to vector<8x128xf32>
    %19 = arith.addf %17, %18 : vector<8x128xf32>
    %20 = arith.negf %19 : vector<8x128xf32>
    %21 = math.exp %20 : vector<8x128xf32>
    %cst_19 = arith.constant 1.000000e+00 : f32
    %22 = vector.broadcast %cst_19 : f32 to vector<8x128xf32>
    %23 = arith.addf %22, %21 : vector<8x128xf32>
    %24 = arith.divf %22, %23 : vector<8x128xf32>
    %25 = vector.extract_strided_slice %15 {offsets = [0, 128], sizes = [8, 128], strides = [1, 1]} : vector<8x384xf32> to vector<8x128xf32>
    %26 = vector.extract_strided_slice %16 {offsets = [0, 128], sizes = [8, 128], strides = [1, 1]} : vector<8x384xf32> to vector<8x128xf32>
    %27 = arith.addf %25, %26 : vector<8x128xf32>
    %28 = arith.negf %27 : vector<8x128xf32>
    %29 = math.exp %28 : vector<8x128xf32>
    %cst_20 = arith.constant 1.000000e+00 : f32
    %30 = vector.broadcast %cst_20 : f32 to vector<8x128xf32>
    %31 = arith.addf %30, %29 : vector<8x128xf32>
    %32 = arith.divf %30, %31 : vector<8x128xf32>
    %33 = vector.extract_strided_slice %15 {offsets = [0, 256], sizes = [8, 128], strides = [1, 1]} : vector<8x384xf32> to vector<8x128xf32>
    %34 = vector.extract_strided_slice %16 {offsets = [0, 256], sizes = [8, 128], strides = [1, 1]} : vector<8x384xf32> to vector<8x128xf32>
    %35 = vector.broadcast %1 : vector<1x128xf32> to vector<8x128xf32>
    %36 = arith.addf %34, %35 : vector<8x128xf32>
    %37 = arith.mulf %24, %36 : vector<8x128xf32>
    %38 = arith.addf %33, %37 : vector<8x128xf32>
    %39 = math.tanh %38 : vector<8x128xf32>
    %cst_21 = arith.constant 1.000000e+00 : f32
    %40 = vector.broadcast %cst_21 : f32 to vector<8x128xf32>
    %41 = arith.subf %40, %32 : vector<8x128xf32>
    %42 = arith.mulf %41, %39 : vector<8x128xf32>
    %43 = arith.mulf %32, %12 : vector<8x128xf32>
    %44 = arith.addf %42, %43 : vector<8x128xf32>
    %45 = vector.broadcast %c0_i32 : i32 to vector<8x1xi32>
    %46 = arith.cmpi sgt, %2, %45 : vector<8x1xi32>
    %47 = arith.extui %46 : vector<8x1xi1> to vector<8x1xi32>
    %48 = arith.sitofp %47 : vector<8x1xi32> to vector<8x1xf32>
    %49 = vector.broadcast %48 : vector<8x1xf32> to vector<8x128xf32>
    %50 = arith.mulf %49, %44 : vector<8x128xf32>
    %51 = arith.index_cast %c0_i32 : i32 to index
    %c0_22 = arith.constant 0 : index
    %c0_23 = arith.constant 0 : index
    %52 = vector.load %arg14[%51, %c0_22, %c0_23] : memref<8x8x128xf32, #tpu.memory_space<vmem>>, vector<1x8x128xf32>
    %53 = vector.shape_cast %52 : vector<1x8x128xf32> to vector<8x128xf32>
    %54 = vector.shape_cast %50 : vector<8x128xf32> to vector<1x8x128xf32>
    tpu.vector_store %arg14[%51, %c0_22, %c0_23], %54 {strides = array<i32>} : memref<8x8x128xf32, #tpu.memory_space<vmem>>, vector<1x8x128xf32>,
    %cst_24 = arith.constant 1.000000e+00 : f32
    %55 = vector.broadcast %cst_24 : f32 to vector<8x1xf32>
    %56 = arith.subf %55, %48 : vector<8x1xf32>
    %57 = vector.broadcast %56 : vector<8x1xf32> to vector<8x128xf32>
    %58 = arith.mulf %57, %12 : vector<8x128xf32>
    %59 = arith.addf %50, %58 : vector<8x128xf32>
    %c1_i32 = arith.constant 1 : i32
    %60 = arith.index_cast %c1_i32 : i32 to index
    %c0_25 = arith.constant 0 : index
    %c0_26 = arith.constant 0 : index
    %61 = vector.load %arg13[%60, %c0_25, %c0_26] : memref<8x8x384xf32, #tpu.memory_space<vmem>>, vector<1x8x384xf32>
    %62 = vector.shape_cast %61 : vector<1x8x384xf32> to vector<8x384xf32>
    %cst_27 = arith.constant dense<0.000000e+00> : vector<8x384xf32>
    %63 = tpu.matmul %59, %0, %cst_27 {dimension_numbers = #tpu.dot_dimension_numbers<[1], [0], [0], [1], [0, 0, 1, 1], [], []>} : vector<8x128xf32>, vector<128x384xf32>, vector<8x384xf32> -> vector<8x384xf32>
    %64 = vector.extract_strided_slice %62 {offsets = [0, 0], sizes = [8, 128], strides = [1, 1]} : vector<8x384xf32> to vector<8x128xf32>
    %65 = vector.extract_strided_slice %63 {offsets = [0, 0], sizes = [8, 128], strides = [1, 1]} : vector<8x384xf32> to vector<8x128xf32>
    %66 = arith.addf %64, %65 : vector<8x128xf32>
    %67 = arith.negf %66 : vector<8x128xf32>
    %68 = math.exp %67 : vector<8x128xf32>
    %cst_28 = arith.constant 1.000000e+00 : f32
    %69 = vector.broadcast %cst_28 : f32 to vector<8x128xf32>
    %70 = arith.addf %69, %68 : vector<8x128xf32>
    %71 = arith.divf %69, %70 : vector<8x128xf32>
    %72 = vector.extract_strided_slice %62 {offsets = [0, 128], sizes = [8, 128], strides = [1, 1]} : vector<8x384xf32> to vector<8x128xf32>
    %73 = vector.extract_strided_slice %63 {offsets = [0, 128], sizes = [8, 128], strides = [1, 1]} : vector<8x384xf32> to vector<8x128xf32>
    %74 = arith.addf %72, %73 : vector<8x128xf32>
    %75 = arith.negf %74 : vector<8x128xf32>
    %76 = math.exp %75 : vector<8x128xf32>
    %cst_29 = arith.constant 1.000000e+00 : f32
    %77 = vector.broadcast %cst_29 : f32 to vector<8x128xf32>
    %78 = arith.addf %77, %76 : vector<8x128xf32>
    %79 = arith.divf %77, %78 : vector<8x128xf32>
    %80 = vector.extract_strided_slice %62 {offsets = [0, 256], sizes = [8, 128], strides = [1, 1]} : vector<8x384xf32> to vector<8x128xf32>
    %81 = vector.extract_strided_slice %63 {offsets = [0, 256], sizes = [8, 128], strides = [1, 1]} : vector<8x384xf32> to vector<8x128xf32>
    %82 = vector.broadcast %1 : vector<1x128xf32> to vector<8x128xf32>
    %83 = arith.addf %81, %82 : vector<8x128xf32>
    %84 = arith.mulf %71, %83 : vector<8x128xf32>
    %85 = arith.addf %80, %84 : vector<8x128xf32>
    %86 = math.tanh %85 : vector<8x128xf32>
    %cst_30 = arith.constant 1.000000e+00 : f32
    %87 = vector.broadcast %cst_30 : f32 to vector<8x128xf32>
    %88 = arith.subf %87, %79 : vector<8x128xf32>
    %89 = arith.mulf %88, %86 : vector<8x128xf32>
    %90 = arith.mulf %79, %59 : vector<8x128xf32>
    %91 = arith.addf %89, %90 : vector<8x128xf32>
    %92 = vector.broadcast %c1_i32 : i32 to vector<8x1xi32>
    %93 = arith.cmpi sgt, %2, %92 : vector<8x1xi32>
    %94 = arith.extui %93 : vector<8x1xi1> to vector<8x1xi32>
    %95 = arith.sitofp %94 : vector<8x1xi32> to vector<8x1xf32>
    %96 = vector.broadcast %95 : vector<8x1xf32> to vector<8x128xf32>
    %97 = arith.mulf %96, %91 : vector<8x128xf32>
    %98 = arith.index_cast %c1_i32 : i32 to index
    %c0_31 = arith.constant 0 : index
    %c0_32 = arith.constant 0 : index
    %99 = vector.load %arg14[%98, %c0_31, %c0_32] : memref<8x8x128xf32, #tpu.memory_space<vmem>>, vector<1x8x128xf32>
    %100 = vector.shape_cast %99 : vector<1x8x128xf32> to vector<8x128xf32>
    %101 = vector.shape_cast %97 : vector<8x128xf32> to vector<1x8x128xf32>
    tpu.vector_store %arg14[%98, %c0_31, %c0_32], %101 {strides = array<i32>} : memref<8x8x128xf32, #tpu.memory_space<vmem>>, vector<1x8x128xf32>,
    %cst_33 = arith.constant 1.000000e+00 : f32
    %102 = vector.broadcast %cst_33 : f32 to vector<8x1xf32>
    %103 = arith.subf %102, %95 : vector<8x1xf32>
    %104 = vector.broadcast %103 : vector<8x1xf32> to vector<8x128xf32>
    %105 = arith.mulf %104, %59 : vector<8x128xf32>
    %106 = arith.addf %97, %105 : vector<8x128xf32>
    %c2_i32 = arith.constant 2 : i32
    %107 = arith.index_cast %c2_i32 : i32 to index
    %c0_34 = arith.constant 0 : index
    %c0_35 = arith.constant 0 : index
    %108 = vector.load %arg13[%107, %c0_34, %c0_35] : memref<8x8x384xf32, #tpu.memory_space<vmem>>, vector<1x8x384xf32>
    %109 = vector.shape_cast %108 : vector<1x8x384xf32> to vector<8x384xf32>
    %cst_36 = arith.constant dense<0.000000e+00> : vector<8x384xf32>
    %110 = tpu.matmul %106, %0, %cst_36 {dimension_numbers = #tpu.dot_dimension_numbers<[1], [0], [0], [1], [0, 0, 1, 1], [], []>} : vector<8x128xf32>, vector<128x384xf32>, vector<8x384xf32> -> vector<8x384xf32>
    %111 = vector.extract_strided_slice %109 {offsets = [0, 0], sizes = [8, 128], strides = [1, 1]} : vector<8x384xf32> to vector<8x128xf32>
    %112 = vector.extract_strided_slice %110 {offsets = [0, 0], sizes = [8, 128], strides = [1, 1]} : vector<8x384xf32> to vector<8x128xf32>
    %113 = arith.addf %111, %112 : vector<8x128xf32>
    %114 = arith.negf %113 : vector<8x128xf32>
    %115 = math.exp %114 : vector<8x128xf32>
    %cst_37 = arith.constant 1.000000e+00 : f32
    %116 = vector.broadcast %cst_37 : f32 to vector<8x128xf32>
    %117 = arith.addf %116, %115 : vector<8x128xf32>
    %118 = arith.divf %116, %117 : vector<8x128xf32>
    %119 = vector.extract_strided_slice %109 {offsets = [0, 128], sizes = [8, 128], strides = [1, 1]} : vector<8x384xf32> to vector<8x128xf32>
    %120 = vector.extract_strided_slice %110 {offsets = [0, 128], sizes = [8, 128], strides = [1, 1]} : vector<8x384xf32> to vector<8x128xf32>
    %121 = arith.addf %119, %120 : vector<8x128xf32>
    %122 = arith.negf %121 : vector<8x128xf32>
    %123 = math.exp %122 : vector<8x128xf32>
    %cst_38 = arith.constant 1.000000e+00 : f32
    %124 = vector.broadcast %cst_38 : f32 to vector<8x128xf32>
    %125 = arith.addf %124, %123 : vector<8x128xf32>
    %126 = arith.divf %124, %125 : vector<8x128xf32>
    %127 = vector.extract_strided_slice %109 {offsets = [0, 256], sizes = [8, 128], strides = [1, 1]} : vector<8x384xf32> to vector<8x128xf32>
    %128 = vector.extract_strided_slice %110 {offsets = [0, 256], sizes = [8, 128], strides = [1, 1]} : vector<8x384xf32> to vector<8x128xf32>
    %129 = vector.broadcast %1 : vector<1x128xf32> to vector<8x128xf32>
    %130 = arith.addf %128, %129 : vector<8x128xf32>
    %131 = arith.mulf %118, %130 : vector<8x128xf32>
    %132 = arith.addf %127, %131 : vector<8x128xf32>
    %133 = math.tanh %132 : vector<8x128xf32>
    %cst_39 = arith.constant 1.000000e+00 : f32
    %134 = vector.broadcast %cst_39 : f32 to vector<8x128xf32>
    %135 = arith.subf %134, %126 : vector<8x128xf32>
    %136 = arith.mulf %135, %133 : vector<8x128xf32>
    %137 = arith.mulf %126, %106 : vector<8x128xf32>
    %138 = arith.addf %136, %137 : vector<8x128xf32>
    %139 = vector.broadcast %c2_i32 : i32 to vector<8x1xi32>
    %140 = arith.cmpi sgt, %2, %139 : vector<8x1xi32>
    %141 = arith.extui %140 : vector<8x1xi1> to vector<8x1xi32>
    %142 = arith.sitofp %141 : vector<8x1xi32> to vector<8x1xf32>
    %143 = vector.broadcast %142 : vector<8x1xf32> to vector<8x128xf32>
    %144 = arith.mulf %143, %138 : vector<8x128xf32>
    %145 = arith.index_cast %c2_i32 : i32 to index
    %c0_40 = arith.constant 0 : index
    %c0_41 = arith.constant 0 : index
    %146 = vector.load %arg14[%145, %c0_40, %c0_41] : memref<8x8x128xf32, #tpu.memory_space<vmem>>, vector<1x8x128xf32>
    %147 = vector.shape_cast %146 : vector<1x8x128xf32> to vector<8x128xf32>
    %148 = vector.shape_cast %144 : vector<8x128xf32> to vector<1x8x128xf32>
    tpu.vector_store %arg14[%145, %c0_40, %c0_41], %148 {strides = array<i32>} : memref<8x8x128xf32, #tpu.memory_space<vmem>>, vector<1x8x128xf32>,
    %cst_42 = arith.constant 1.000000e+00 : f32
    %149 = vector.broadcast %cst_42 : f32 to vector<8x1xf32>
    %150 = arith.subf %149, %142 : vector<8x1xf32>
    %151 = vector.broadcast %150 : vector<8x1xf32> to vector<8x128xf32>
    %152 = arith.mulf %151, %106 : vector<8x128xf32>
    %153 = arith.addf %144, %152 : vector<8x128xf32>
    %c3_i32 = arith.constant 3 : i32
    %154 = arith.index_cast %c3_i32 : i32 to index
    %c0_43 = arith.constant 0 : index
    %c0_44 = arith.constant 0 : index
    %155 = vector.load %arg13[%154, %c0_43, %c0_44] : memref<8x8x384xf32, #tpu.memory_space<vmem>>, vector<1x8x384xf32>
    %156 = vector.shape_cast %155 : vector<1x8x384xf32> to vector<8x384xf32>
    %cst_45 = arith.constant dense<0.000000e+00> : vector<8x384xf32>
    %157 = tpu.matmul %153, %0, %cst_45 {dimension_numbers = #tpu.dot_dimension_numbers<[1], [0], [0], [1], [0, 0, 1, 1], [], []>} : vector<8x128xf32>, vector<128x384xf32>, vector<8x384xf32> -> vector<8x384xf32>
    %158 = vector.extract_strided_slice %156 {offsets = [0, 0], sizes = [8, 128], strides = [1, 1]} : vector<8x384xf32> to vector<8x128xf32>
    %159 = vector.extract_strided_slice %157 {offsets = [0, 0], sizes = [8, 128], strides = [1, 1]} : vector<8x384xf32> to vector<8x128xf32>
    %160 = arith.addf %158, %159 : vector<8x128xf32>
    %161 = arith.negf %160 : vector<8x128xf32>
    %162 = math.exp %161 : vector<8x128xf32>
    %cst_46 = arith.constant 1.000000e+00 : f32
    %163 = vector.broadcast %cst_46 : f32 to vector<8x128xf32>
    %164 = arith.addf %163, %162 : vector<8x128xf32>
    %165 = arith.divf %163, %164 : vector<8x128xf32>
    %166 = vector.extract_strided_slice %156 {offsets = [0, 128], sizes = [8, 128], strides = [1, 1]} : vector<8x384xf32> to vector<8x128xf32>
    %167 = vector.extract_strided_slice %157 {offsets = [0, 128], sizes = [8, 128], strides = [1, 1]} : vector<8x384xf32> to vector<8x128xf32>
    %168 = arith.addf %166, %167 : vector<8x128xf32>
    %169 = arith.negf %168 : vector<8x128xf32>
    %170 = math.exp %169 : vector<8x128xf32>
    %cst_47 = arith.constant 1.000000e+00 : f32
    %171 = vector.broadcast %cst_47 : f32 to vector<8x128xf32>
    %172 = arith.addf %171, %170 : vector<8x128xf32>
    %173 = arith.divf %171, %172 : vector<8x128xf32>
    %174 = vector.extract_strided_slice %156 {offsets = [0, 256], sizes = [8, 128], strides = [1, 1]} : vector<8x384xf32> to vector<8x128xf32>
    %175 = vector.extract_strided_slice %157 {offsets = [0, 256], sizes = [8, 128], strides = [1, 1]} : vector<8x384xf32> to vector<8x128xf32>
    %176 = vector.broadcast %1 : vector<1x128xf32> to vector<8x128xf32>
    %177 = arith.addf %175, %176 : vector<8x128xf32>
    %178 = arith.mulf %165, %177 : vector<8x128xf32>
    %179 = arith.addf %174, %178 : vector<8x128xf32>
    %180 = math.tanh %179 : vector<8x128xf32>
    %cst_48 = arith.constant 1.000000e+00 : f32
    %181 = vector.broadcast %cst_48 : f32 to vector<8x128xf32>
    %182 = arith.subf %181, %173 : vector<8x128xf32>
    %183 = arith.mulf %182, %180 : vector<8x128xf32>
    %184 = arith.mulf %173, %153 : vector<8x128xf32>
    %185 = arith.addf %183, %184 : vector<8x128xf32>
    %186 = vector.broadcast %c3_i32 : i32 to vector<8x1xi32>
    %187 = arith.cmpi sgt, %2, %186 : vector<8x1xi32>
    %188 = arith.extui %187 : vector<8x1xi1> to vector<8x1xi32>
    %189 = arith.sitofp %188 : vector<8x1xi32> to vector<8x1xf32>
    %190 = vector.broadcast %189 : vector<8x1xf32> to vector<8x128xf32>
    %191 = arith.mulf %190, %185 : vector<8x128xf32>
    %192 = arith.index_cast %c3_i32 : i32 to index
    %c0_49 = arith.constant 0 : index
    %c0_50 = arith.constant 0 : index
    %193 = vector.load %arg14[%192, %c0_49, %c0_50] : memref<8x8x128xf32, #tpu.memory_space<vmem>>, vector<1x8x128xf32>
    %194 = vector.shape_cast %193 : vector<1x8x128xf32> to vector<8x128xf32>
    %195 = vector.shape_cast %191 : vector<8x128xf32> to vector<1x8x128xf32>
    tpu.vector_store %arg14[%192, %c0_49, %c0_50], %195 {strides = array<i32>} : memref<8x8x128xf32, #tpu.memory_space<vmem>>, vector<1x8x128xf32>,
    %cst_51 = arith.constant 1.000000e+00 : f32
    %196 = vector.broadcast %cst_51 : f32 to vector<8x1xf32>
    %197 = arith.subf %196, %189 : vector<8x1xf32>
    %198 = vector.broadcast %197 : vector<8x1xf32> to vector<8x128xf32>
    %199 = arith.mulf %198, %153 : vector<8x128xf32>
    %200 = arith.addf %191, %199 : vector<8x128xf32>
    %c4_i32 = arith.constant 4 : i32
    %201 = arith.index_cast %c4_i32 : i32 to index
    %c0_52 = arith.constant 0 : index
    %c0_53 = arith.constant 0 : index
    %202 = vector.load %arg13[%201, %c0_52, %c0_53] : memref<8x8x384xf32, #tpu.memory_space<vmem>>, vector<1x8x384xf32>
    %203 = vector.shape_cast %202 : vector<1x8x384xf32> to vector<8x384xf32>
    %cst_54 = arith.constant dense<0.000000e+00> : vector<8x384xf32>
    %204 = tpu.matmul %200, %0, %cst_54 {dimension_numbers = #tpu.dot_dimension_numbers<[1], [0], [0], [1], [0, 0, 1, 1], [], []>} : vector<8x128xf32>, vector<128x384xf32>, vector<8x384xf32> -> vector<8x384xf32>
    %205 = vector.extract_strided_slice %203 {offsets = [0, 0], sizes = [8, 128], strides = [1, 1]} : vector<8x384xf32> to vector<8x128xf32>
    %206 = vector.extract_strided_slice %204 {offsets = [0, 0], sizes = [8, 128], strides = [1, 1]} : vector<8x384xf32> to vector<8x128xf32>
    %207 = arith.addf %205, %206 : vector<8x128xf32>
    %208 = arith.negf %207 : vector<8x128xf32>
    %209 = math.exp %208 : vector<8x128xf32>
    %cst_55 = arith.constant 1.000000e+00 : f32
    %210 = vector.broadcast %cst_55 : f32 to vector<8x128xf32>
    %211 = arith.addf %210, %209 : vector<8x128xf32>
    %212 = arith.divf %210, %211 : vector<8x128xf32>
    %213 = vector.extract_strided_slice %203 {offsets = [0, 128], sizes = [8, 128], strides = [1, 1]} : vector<8x384xf32> to vector<8x128xf32>
    %214 = vector.extract_strided_slice %204 {offsets = [0, 128], sizes = [8, 128], strides = [1, 1]} : vector<8x384xf32> to vector<8x128xf32>
    %215 = arith.addf %213, %214 : vector<8x128xf32>
    %216 = arith.negf %215 : vector<8x128xf32>
    %217 = math.exp %216 : vector<8x128xf32>
    %cst_56 = arith.constant 1.000000e+00 : f32
    %218 = vector.broadcast %cst_56 : f32 to vector<8x128xf32>
    %219 = arith.addf %218, %217 : vector<8x128xf32>
    %220 = arith.divf %218, %219 : vector<8x128xf32>
    %221 = vector.extract_strided_slice %203 {offsets = [0, 256], sizes = [8, 128], strides = [1, 1]} : vector<8x384xf32> to vector<8x128xf32>
    %222 = vector.extract_strided_slice %204 {offsets = [0, 256], sizes = [8, 128], strides = [1, 1]} : vector<8x384xf32> to vector<8x128xf32>
    %223 = vector.broadcast %1 : vector<1x128xf32> to vector<8x128xf32>
    %224 = arith.addf %222, %223 : vector<8x128xf32>
    %225 = arith.mulf %212, %224 : vector<8x128xf32>
    %226 = arith.addf %221, %225 : vector<8x128xf32>
    %227 = math.tanh %226 : vector<8x128xf32>
    %cst_57 = arith.constant 1.000000e+00 : f32
    %228 = vector.broadcast %cst_57 : f32 to vector<8x128xf32>
    %229 = arith.subf %228, %220 : vector<8x128xf32>
    %230 = arith.mulf %229, %227 : vector<8x128xf32>
    %231 = arith.mulf %220, %200 : vector<8x128xf32>
    %232 = arith.addf %230, %231 : vector<8x128xf32>
    %233 = vector.broadcast %c4_i32 : i32 to vector<8x1xi32>
    %234 = arith.cmpi sgt, %2, %233 : vector<8x1xi32>
    %235 = arith.extui %234 : vector<8x1xi1> to vector<8x1xi32>
    %236 = arith.sitofp %235 : vector<8x1xi32> to vector<8x1xf32>
    %237 = vector.broadcast %236 : vector<8x1xf32> to vector<8x128xf32>
    %238 = arith.mulf %237, %232 : vector<8x128xf32>
    %239 = arith.index_cast %c4_i32 : i32 to index
    %c0_58 = arith.constant 0 : index
    %c0_59 = arith.constant 0 : index
    %240 = vector.load %arg14[%239, %c0_58, %c0_59] : memref<8x8x128xf32, #tpu.memory_space<vmem>>, vector<1x8x128xf32>
    %241 = vector.shape_cast %240 : vector<1x8x128xf32> to vector<8x128xf32>
    %242 = vector.shape_cast %238 : vector<8x128xf32> to vector<1x8x128xf32>
    tpu.vector_store %arg14[%239, %c0_58, %c0_59], %242 {strides = array<i32>} : memref<8x8x128xf32, #tpu.memory_space<vmem>>, vector<1x8x128xf32>,
    %cst_60 = arith.constant 1.000000e+00 : f32
    %243 = vector.broadcast %cst_60 : f32 to vector<8x1xf32>
    %244 = arith.subf %243, %236 : vector<8x1xf32>
    %245 = vector.broadcast %244 : vector<8x1xf32> to vector<8x128xf32>
    %246 = arith.mulf %245, %200 : vector<8x128xf32>
    %247 = arith.addf %238, %246 : vector<8x128xf32>
    %c5_i32 = arith.constant 5 : i32
    %248 = arith.index_cast %c5_i32 : i32 to index
    %c0_61 = arith.constant 0 : index
    %c0_62 = arith.constant 0 : index
    %249 = vector.load %arg13[%248, %c0_61, %c0_62] : memref<8x8x384xf32, #tpu.memory_space<vmem>>, vector<1x8x384xf32>
    %250 = vector.shape_cast %249 : vector<1x8x384xf32> to vector<8x384xf32>
    %cst_63 = arith.constant dense<0.000000e+00> : vector<8x384xf32>
    %251 = tpu.matmul %247, %0, %cst_63 {dimension_numbers = #tpu.dot_dimension_numbers<[1], [0], [0], [1], [0, 0, 1, 1], [], []>} : vector<8x128xf32>, vector<128x384xf32>, vector<8x384xf32> -> vector<8x384xf32>
    %252 = vector.extract_strided_slice %250 {offsets = [0, 0], sizes = [8, 128], strides = [1, 1]} : vector<8x384xf32> to vector<8x128xf32>
    %253 = vector.extract_strided_slice %251 {offsets = [0, 0], sizes = [8, 128], strides = [1, 1]} : vector<8x384xf32> to vector<8x128xf32>
    %254 = arith.addf %252, %253 : vector<8x128xf32>
    %255 = arith.negf %254 : vector<8x128xf32>
    %256 = math.exp %255 : vector<8x128xf32>
    %cst_64 = arith.constant 1.000000e+00 : f32
    %257 = vector.broadcast %cst_64 : f32 to vector<8x128xf32>
    %258 = arith.addf %257, %256 : vector<8x128xf32>
    %259 = arith.divf %257, %258 : vector<8x128xf32>
    %260 = vector.extract_strided_slice %250 {offsets = [0, 128], sizes = [8, 128], strides = [1, 1]} : vector<8x384xf32> to vector<8x128xf32>
    %261 = vector.extract_strided_slice %251 {offsets = [0, 128], sizes = [8, 128], strides = [1, 1]} : vector<8x384xf32> to vector<8x128xf32>
    %262 = arith.addf %260, %261 : vector<8x128xf32>
    %263 = arith.negf %262 : vector<8x128xf32>
    %264 = math.exp %263 : vector<8x128xf32>
    %cst_65 = arith.constant 1.000000e+00 : f32
    %265 = vector.broadcast %cst_65 : f32 to vector<8x128xf32>
    %266 = arith.addf %265, %264 : vector<8x128xf32>
    %267 = arith.divf %265, %266 : vector<8x128xf32>
    %268 = vector.extract_strided_slice %250 {offsets = [0, 256], sizes = [8, 128], strides = [1, 1]} : vector<8x384xf32> to vector<8x128xf32>
    %269 = vector.extract_strided_slice %251 {offsets = [0, 256], sizes = [8, 128], strides = [1, 1]} : vector<8x384xf32> to vector<8x128xf32>
    %270 = vector.broadcast %1 : vector<1x128xf32> to vector<8x128xf32>
    %271 = arith.addf %269, %270 : vector<8x128xf32>
    %272 = arith.mulf %259, %271 : vector<8x128xf32>
    %273 = arith.addf %268, %272 : vector<8x128xf32>
    %274 = math.tanh %273 : vector<8x128xf32>
    %cst_66 = arith.constant 1.000000e+00 : f32
    %275 = vector.broadcast %cst_66 : f32 to vector<8x128xf32>
    %276 = arith.subf %275, %267 : vector<8x128xf32>
    %277 = arith.mulf %276, %274 : vector<8x128xf32>
    %278 = arith.mulf %267, %247 : vector<8x128xf32>
    %279 = arith.addf %277, %278 : vector<8x128xf32>
    %280 = vector.broadcast %c5_i32 : i32 to vector<8x1xi32>
    %281 = arith.cmpi sgt, %2, %280 : vector<8x1xi32>
    %282 = arith.extui %281 : vector<8x1xi1> to vector<8x1xi32>
    %283 = arith.sitofp %282 : vector<8x1xi32> to vector<8x1xf32>
    %284 = vector.broadcast %283 : vector<8x1xf32> to vector<8x128xf32>
    %285 = arith.mulf %284, %279 : vector<8x128xf32>
    %286 = arith.index_cast %c5_i32 : i32 to index
    %c0_67 = arith.constant 0 : index
    %c0_68 = arith.constant 0 : index
    %287 = vector.load %arg14[%286, %c0_67, %c0_68] : memref<8x8x128xf32, #tpu.memory_space<vmem>>, vector<1x8x128xf32>
    %288 = vector.shape_cast %287 : vector<1x8x128xf32> to vector<8x128xf32>
    %289 = vector.shape_cast %285 : vector<8x128xf32> to vector<1x8x128xf32>
    tpu.vector_store %arg14[%286, %c0_67, %c0_68], %289 {strides = array<i32>} : memref<8x8x128xf32, #tpu.memory_space<vmem>>, vector<1x8x128xf32>,
    %cst_69 = arith.constant 1.000000e+00 : f32
    %290 = vector.broadcast %cst_69 : f32 to vector<8x1xf32>
    %291 = arith.subf %290, %283 : vector<8x1xf32>
    %292 = vector.broadcast %291 : vector<8x1xf32> to vector<8x128xf32>
    %293 = arith.mulf %292, %247 : vector<8x128xf32>
    %294 = arith.addf %285, %293 : vector<8x128xf32>
    %c6_i32 = arith.constant 6 : i32
    %295 = arith.index_cast %c6_i32 : i32 to index
    %c0_70 = arith.constant 0 : index
    %c0_71 = arith.constant 0 : index
    %296 = vector.load %arg13[%295, %c0_70, %c0_71] : memref<8x8x384xf32, #tpu.memory_space<vmem>>, vector<1x8x384xf32>
    %297 = vector.shape_cast %296 : vector<1x8x384xf32> to vector<8x384xf32>
    %cst_72 = arith.constant dense<0.000000e+00> : vector<8x384xf32>
    %298 = tpu.matmul %294, %0, %cst_72 {dimension_numbers = #tpu.dot_dimension_numbers<[1], [0], [0], [1], [0, 0, 1, 1], [], []>} : vector<8x128xf32>, vector<128x384xf32>, vector<8x384xf32> -> vector<8x384xf32>
    %299 = vector.extract_strided_slice %297 {offsets = [0, 0], sizes = [8, 128], strides = [1, 1]} : vector<8x384xf32> to vector<8x128xf32>
    %300 = vector.extract_strided_slice %298 {offsets = [0, 0], sizes = [8, 128], strides = [1, 1]} : vector<8x384xf32> to vector<8x128xf32>
    %301 = arith.addf %299, %300 : vector<8x128xf32>
    %302 = arith.negf %301 : vector<8x128xf32>
    %303 = math.exp %302 : vector<8x128xf32>
    %cst_73 = arith.constant 1.000000e+00 : f32
    %304 = vector.broadcast %cst_73 : f32 to vector<8x128xf32>
    %305 = arith.addf %304, %303 : vector<8x128xf32>
    %306 = arith.divf %304, %305 : vector<8x128xf32>
    %307 = vector.extract_strided_slice %297 {offsets = [0, 128], sizes = [8, 128], strides = [1, 1]} : vector<8x384xf32> to vector<8x128xf32>
    %308 = vector.extract_strided_slice %298 {offsets = [0, 128], sizes = [8, 128], strides = [1, 1]} : vector<8x384xf32> to vector<8x128xf32>
    %309 = arith.addf %307, %308 : vector<8x128xf32>
    %310 = arith.negf %309 : vector<8x128xf32>
    %311 = math.exp %310 : vector<8x128xf32>
    %cst_74 = arith.constant 1.000000e+00 : f32
    %312 = vector.broadcast %cst_74 : f32 to vector<8x128xf32>
    %313 = arith.addf %312, %311 : vector<8x128xf32>
    %314 = arith.divf %312, %313 : vector<8x128xf32>
    %315 = vector.extract_strided_slice %297 {offsets = [0, 256], sizes = [8, 128], strides = [1, 1]} : vector<8x384xf32> to vector<8x128xf32>
    %316 = vector.extract_strided_slice %298 {offsets = [0, 256], sizes = [8, 128], strides = [1, 1]} : vector<8x384xf32> to vector<8x128xf32>
    %317 = vector.broadcast %1 : vector<1x128xf32> to vector<8x128xf32>
    %318 = arith.addf %316, %317 : vector<8x128xf32>
    %319 = arith.mulf %306, %318 : vector<8x128xf32>
    %320 = arith.addf %315, %319 : vector<8x128xf32>
    %321 = math.tanh %320 : vector<8x128xf32>
    %cst_75 = arith.constant 1.000000e+00 : f32
    %322 = vector.broadcast %cst_75 : f32 to vector<8x128xf32>
    %323 = arith.subf %322, %314 : vector<8x128xf32>
    %324 = arith.mulf %323, %321 : vector<8x128xf32>
    %325 = arith.mulf %314, %294 : vector<8x128xf32>
    %326 = arith.addf %324, %325 : vector<8x128xf32>
    %327 = vector.broadcast %c6_i32 : i32 to vector<8x1xi32>
    %328 = arith.cmpi sgt, %2, %327 : vector<8x1xi32>
    %329 = arith.extui %328 : vector<8x1xi1> to vector<8x1xi32>
    %330 = arith.sitofp %329 : vector<8x1xi32> to vector<8x1xf32>
    %331 = vector.broadcast %330 : vector<8x1xf32> to vector<8x128xf32>
    %332 = arith.mulf %331, %326 : vector<8x128xf32>
    %333 = arith.index_cast %c6_i32 : i32 to index
    %c0_76 = arith.constant 0 : index
    %c0_77 = arith.constant 0 : index
    %334 = vector.load %arg14[%333, %c0_76, %c0_77] : memref<8x8x128xf32, #tpu.memory_space<vmem>>, vector<1x8x128xf32>
    %335 = vector.shape_cast %334 : vector<1x8x128xf32> to vector<8x128xf32>
    %336 = vector.shape_cast %332 : vector<8x128xf32> to vector<1x8x128xf32>
    tpu.vector_store %arg14[%333, %c0_76, %c0_77], %336 {strides = array<i32>} : memref<8x8x128xf32, #tpu.memory_space<vmem>>, vector<1x8x128xf32>,
    %cst_78 = arith.constant 1.000000e+00 : f32
    %337 = vector.broadcast %cst_78 : f32 to vector<8x1xf32>
    %338 = arith.subf %337, %330 : vector<8x1xf32>
    %339 = vector.broadcast %338 : vector<8x1xf32> to vector<8x128xf32>
    %340 = arith.mulf %339, %294 : vector<8x128xf32>
    %341 = arith.addf %332, %340 : vector<8x128xf32>
    %c7_i32 = arith.constant 7 : i32
    %342 = arith.index_cast %c7_i32 : i32 to index
    %c0_79 = arith.constant 0 : index
    %c0_80 = arith.constant 0 : index
    %343 = vector.load %arg13[%342, %c0_79, %c0_80] : memref<8x8x384xf32, #tpu.memory_space<vmem>>, vector<1x8x384xf32>
    %344 = vector.shape_cast %343 : vector<1x8x384xf32> to vector<8x384xf32>
    %cst_81 = arith.constant dense<0.000000e+00> : vector<8x384xf32>
    %345 = tpu.matmul %341, %0, %cst_81 {dimension_numbers = #tpu.dot_dimension_numbers<[1], [0], [0], [1], [0, 0, 1, 1], [], []>} : vector<8x128xf32>, vector<128x384xf32>, vector<8x384xf32> -> vector<8x384xf32>
    %346 = vector.extract_strided_slice %344 {offsets = [0, 0], sizes = [8, 128], strides = [1, 1]} : vector<8x384xf32> to vector<8x128xf32>
    %347 = vector.extract_strided_slice %345 {offsets = [0, 0], sizes = [8, 128], strides = [1, 1]} : vector<8x384xf32> to vector<8x128xf32>
    %348 = arith.addf %346, %347 : vector<8x128xf32>
    %349 = arith.negf %348 : vector<8x128xf32>
    %350 = math.exp %349 : vector<8x128xf32>
    %cst_82 = arith.constant 1.000000e+00 : f32
    %351 = vector.broadcast %cst_82 : f32 to vector<8x128xf32>
    %352 = arith.addf %351, %350 : vector<8x128xf32>
    %353 = arith.divf %351, %352 : vector<8x128xf32>
    %354 = vector.extract_strided_slice %344 {offsets = [0, 128], sizes = [8, 128], strides = [1, 1]} : vector<8x384xf32> to vector<8x128xf32>
    %355 = vector.extract_strided_slice %345 {offsets = [0, 128], sizes = [8, 128], strides = [1, 1]} : vector<8x384xf32> to vector<8x128xf32>
    %356 = arith.addf %354, %355 : vector<8x128xf32>
    %357 = arith.negf %356 : vector<8x128xf32>
    %358 = math.exp %357 : vector<8x128xf32>
    %cst_83 = arith.constant 1.000000e+00 : f32
    %359 = vector.broadcast %cst_83 : f32 to vector<8x128xf32>
    %360 = arith.addf %359, %358 : vector<8x128xf32>
    %361 = arith.divf %359, %360 : vector<8x128xf32>
    %362 = vector.extract_strided_slice %344 {offsets = [0, 256], sizes = [8, 128], strides = [1, 1]} : vector<8x384xf32> to vector<8x128xf32>
    %363 = vector.extract_strided_slice %345 {offsets = [0, 256], sizes = [8, 128], strides = [1, 1]} : vector<8x384xf32> to vector<8x128xf32>
    %364 = vector.broadcast %1 : vector<1x128xf32> to vector<8x128xf32>
    %365 = arith.addf %363, %364 : vector<8x128xf32>
    %366 = arith.mulf %353, %365 : vector<8x128xf32>
    %367 = arith.addf %362, %366 : vector<8x128xf32>
    %368 = math.tanh %367 : vector<8x128xf32>
    %cst_84 = arith.constant 1.000000e+00 : f32
    %369 = vector.broadcast %cst_84 : f32 to vector<8x128xf32>
    %370 = arith.subf %369, %361 : vector<8x128xf32>
    %371 = arith.mulf %370, %368 : vector<8x128xf32>
    %372 = arith.mulf %361, %341 : vector<8x128xf32>
    %373 = arith.addf %371, %372 : vector<8x128xf32>
    %374 = vector.broadcast %c7_i32 : i32 to vector<8x1xi32>
    %375 = arith.cmpi sgt, %2, %374 : vector<8x1xi32>
    %376 = arith.extui %375 : vector<8x1xi1> to vector<8x1xi32>
    %377 = arith.sitofp %376 : vector<8x1xi32> to vector<8x1xf32>
    %378 = vector.broadcast %377 : vector<8x1xf32> to vector<8x128xf32>
    %379 = arith.mulf %378, %373 : vector<8x128xf32>
    %380 = arith.index_cast %c7_i32 : i32 to index
    %c0_85 = arith.constant 0 : index
    %c0_86 = arith.constant 0 : index
    %381 = vector.load %arg14[%380, %c0_85, %c0_86] : memref<8x8x128xf32, #tpu.memory_space<vmem>>, vector<1x8x128xf32>
    %382 = vector.shape_cast %381 : vector<1x8x128xf32> to vector<8x128xf32>
    %383 = vector.shape_cast %379 : vector<8x128xf32> to vector<1x8x128xf32>
    tpu.vector_store %arg14[%380, %c0_85, %c0_86], %383 {strides = array<i32>} : memref<8x8x128xf32, #tpu.memory_space<vmem>>, vector<1x8x128xf32>,
    %cst_87 = arith.constant 1.000000e+00 : f32
    %384 = vector.broadcast %cst_87 : f32 to vector<8x1xf32>
    %385 = arith.subf %384, %377 : vector<8x1xf32>
    %386 = vector.broadcast %385 : vector<8x1xf32> to vector<8x128xf32>
    %387 = arith.mulf %386, %341 : vector<8x128xf32>
    %388 = arith.addf %379, %387 : vector<8x128xf32>
    %c8_i32 = arith.constant 8 : i32
    %c0_88 = arith.constant 0 : index
    %c0_89 = arith.constant 0 : index
    %c0_90 = arith.constant 0 : index
    %389 = vector.load %arg14[%c0_88, %c0_89, %c0_90] : memref<8x8x128xf32, #tpu.memory_space<vmem>>, vector<8x8x128xf32>
    %390 = vector.shape_cast %389 : vector<8x8x128xf32> to vector<64x128xf32>
    %c0_91 = arith.constant 0 : index
    %c0_92 = arith.constant 0 : index
    %391 = vector.load %arg7[%c0_91, %c0_92] : memref<128x128xf32, #tpu.memory_space<vmem>>, vector<128x128xf32>
    %cst_93 = arith.constant dense<0.000000e+00> : vector<64x128xf32>
    %392 = tpu.matmul %390, %391, %cst_93 {dimension_numbers = #tpu.dot_dimension_numbers<[1], [0], [0], [1], [0, 0, 1, 1], [], []>} : vector<64x128xf32>, vector<128x128xf32>, vector<64x128xf32> -> vector<64x128xf32>
    %393 = vector.shape_cast %392 : vector<64x128xf32> to vector<8x8x128xf32>
    %c0_94 = arith.constant 0 : index
    %c0_95 = arith.constant 0 : index
    %394 = vector.load %arg8[%c0_94, %c0_95] : memref<128x128xf32, #tpu.memory_space<vmem>>, vector<128x128xf32>
    %cst_96 = arith.constant dense<0.000000e+00> : vector<8x128xf32>
    %395 = tpu.matmul %388, %394, %cst_96 {dimension_numbers = #tpu.dot_dimension_numbers<[1], [0], [0], [1], [0, 0, 1, 1], [], []>} : vector<8x128xf32>, vector<128x128xf32>, vector<8x128xf32> -> vector<8x128xf32>
    %396 = tpu.iota {dimensions = array<i32: 0>} : vector<8x8x1xi32>
    %397 = vector.shape_cast %2 : vector<8x1xi32> to vector<1x8x1xi32>
    %398 = vector.broadcast %397 : vector<1x8x1xi32> to vector<8x8x1xi32>
    %399 = arith.cmpi slt, %396, %398 : vector<8x8x1xi32>
    %400 = arith.extui %399 : vector<8x8x1xi1> to vector<8x8x1xi32>
    %401 = arith.sitofp %400 : vector<8x8x1xi32> to vector<8x8x1xf32>
    %402 = vector.shape_cast %395 : vector<8x128xf32> to vector<1x8x128xf32>
    %403 = vector.broadcast %401 : vector<8x8x1xf32> to vector<8x8x128xf32>
    %404 = vector.broadcast %402 : vector<1x8x128xf32> to vector<8x8x128xf32>
    %405 = arith.mulf %403, %404 : vector<8x8x128xf32>
    %406 = arith.addf %393, %405 : vector<8x8x128xf32>
    %407 = arith.negf %406 : vector<8x8x128xf32>
    %408 = math.exp %407 : vector<8x8x128xf32>
    %cst_97 = arith.constant 1.000000e+00 : f32
    %409 = vector.broadcast %cst_97 : f32 to vector<8x8x128xf32>
    %410 = arith.addf %409, %408 : vector<8x8x128xf32>
    %411 = arith.divf %409, %410 : vector<8x8x128xf32>
    %c0_98 = arith.constant 0 : index
    %c0_99 = arith.constant 0 : index
    %412 = vector.load %arg9[%c0_98, %c0_99] : memref<1x128xf32, #tpu.memory_space<vmem>>, vector<1x128xf32>
    %413 = vector.shape_cast %412 : vector<1x128xf32> to vector<1x1x128xf32>
    %414 = vector.broadcast %413 : vector<1x1x128xf32> to vector<8x8x128xf32>
    %415 = arith.mulf %411, %414 : vector<8x8x128xf32>
    %cst_100 = arith.constant dense<0.000000e+00> : vector<8x8xf32>
    %416 = vector.multi_reduction <add>, %415, %cst_100 [2] : vector<8x8x128xf32> to vector<8x8xf32>
    %417 = vector.shape_cast %416 : vector<8x8xf32> to vector<8x8x1xf32>
    %418 = vector.broadcast %417 : vector<8x8x1xf32> to vector<8x8x128xf32>
    %419 = arith.mulf %418, %389 : vector<8x8x128xf32>
    %cst_101 = arith.constant dense<0.000000e+00> : vector<8x128xf32>
    %420 = vector.multi_reduction <add>, %419, %cst_101 [0] : vector<8x8x128xf32> to vector<8x128xf32>
    %c0_102 = arith.constant 0 : index
    %c0_103 = arith.constant 0 : index
    %421 = vector.load %arg10[%c0_102, %c0_103] : memref<128x128xf32, #tpu.memory_space<vmem>>, vector<128x128xf32>
    %cst_104 = arith.constant dense<0.000000e+00> : vector<8x128xf32>
    %422 = tpu.matmul %420, %421, %cst_104 {dimension_numbers = #tpu.dot_dimension_numbers<[1], [0], [0], [1], [0, 0, 1, 1], [], []>} : vector<8x128xf32>, vector<128x128xf32>, vector<8x128xf32> -> vector<8x128xf32>
    %c0_105 = arith.constant 0 : index
    %c0_106 = arith.constant 0 : index
    %423 = vector.load %arg11[%c0_105, %c0_106] : memref<128x128xf32, #tpu.memory_space<vmem>>, vector<128x128xf32>
    %cst_107 = arith.constant dense<0.000000e+00> : vector<8x128xf32>
    %424 = tpu.matmul %388, %423, %cst_107 {dimension_numbers = #tpu.dot_dimension_numbers<[1], [0], [0], [1], [0, 0, 1, 1], [], []>} : vector<8x128xf32>, vector<128x128xf32>, vector<8x128xf32> -> vector<8x128xf32>
    %425 = arith.addf %422, %424 : vector<8x128xf32>
    %c0_108 = arith.constant 0 : index
    %c0_109 = arith.constant 0 : index
    %426 = vector.load %arg12[%c0_108, %c0_109] : memref<8x128xf32, #tpu.memory_space<vmem>>, vector<8x128xf32>
    tpu.vector_store %arg12[%c0_108, %c0_109], %425 {strides = array<i32>} : memref<8x128xf32, #tpu.memory_space<vmem>>, vector<8x128xf32>,
    return
  }
  func.func @transform_0(%arg0: i32) -> (i32, i32, i32) {
    %c0_i32 = arith.constant 0 : i32
    %c0_i32_0 = arith.constant 0 : i32
    %c0_i32_1 = arith.constant 0 : i32
    return %c0_i32, %arg0, %c0_i32_0 : i32, i32, i32
  }
  func.func @transform_1(%arg0: i32) -> (i32, i32) {
    %c0_i32 = arith.constant 0 : i32
    %c0_i32_0 = arith.constant 0 : i32
    return %arg0, %c0_i32 : i32, i32
  }
  func.func @transform_2(%arg0: i32) -> (i32, i32) {
    %c0_i32 = arith.constant 0 : i32
    %c0_i32_0 = arith.constant 0 : i32
    %c0_i32_1 = arith.constant 0 : i32
    return %c0_i32, %c0_i32_0 : i32, i32
  }
  func.func @transform_3(%arg0: i32) -> (i32, i32) {
    %c0_i32 = arith.constant 0 : i32
    %c0_i32_0 = arith.constant 0 : i32
    %c0_i32_1 = arith.constant 0 : i32
    return %c0_i32, %c0_i32_0 : i32, i32
  }
  func.func @transform_4(%arg0: i32) -> (i32, i32) {
    %c0_i32 = arith.constant 0 : i32
    %c0_i32_0 = arith.constant 0 : i32
    %c0_i32_1 = arith.constant 0 : i32
    return %c0_i32, %c0_i32_0 : i32, i32
  }
  func.func @transform_5(%arg0: i32) -> (i32, i32) {
    %c0_i32 = arith.constant 0 : i32
    %c0_i32_0 = arith.constant 0 : i32
    %c0_i32_1 = arith.constant 0 : i32
    return %c0_i32, %c0_i32_0 : i32, i32
  }
  func.func @transform_6(%arg0: i32) -> (i32, i32) {
    %c0_i32 = arith.constant 0 : i32
    %c0_i32_0 = arith.constant 0 : i32
    %c0_i32_1 = arith.constant 0 : i32
    return %c0_i32, %c0_i32_0 : i32, i32
  }
  func.func @transform_7(%arg0: i32) -> (i32, i32) {
    %c0_i32 = arith.constant 0 : i32
    %c0_i32_0 = arith.constant 0 : i32
    %c0_i32_1 = arith.constant 0 : i32
    return %c0_i32, %c0_i32_0 : i32, i32
  }
  func.func @transform_8(%arg0: i32) -> (i32, i32) {
    %c0_i32 = arith.constant 0 : i32
    %c0_i32_0 = arith.constant 0 : i32
    %c0_i32_1 = arith.constant 0 : i32
    return %c0_i32, %c0_i32_0 : i32, i32
  }
  func.func @transform_9(%arg0: i32) -> (i32, i32) {
    %c0_i32 = arith.constant 0 : i32
    %c0_i32_0 = arith.constant 0 : i32
    %c0_i32_1 = arith.constant 0 : i32
    return %c0_i32, %c0_i32_0 : i32, i32
  }
  func.func @transform_10(%arg0: i32) -> (i32, i32) {
    %c0_i32 = arith.constant 0 : i32
    %c0_i32_0 = arith.constant 0 : i32
    %c0_i32_1 = arith.constant 0 : i32
    return %c0_i32, %c0_i32_0 : i32, i32
  }
  func.func @transform_11(%arg0: i32) -> (i32, i32) {
    %c0_i32 = arith.constant 0 : i32
    %c0_i32_0 = arith.constant 0 : i32
    return %arg0, %c0_i32 : i32, i32
  }
}

</mosaic_0001>

<llo_original>
// kernel: tpu_custom_call.1
$region0: #{tpu_custom_call.1}
  #allocation0 [shape = 'u32[]', space=smem, size = 0x4, offset = 0x4, fixed_abs, tag = 'smem constant byte address 0x4 - core index']
  #allocation1 [shape = 'u32[144,128]{1,0:T(1,128)}', space=vmem, size = 0x12000, scoped, tag = 'internal scratch']
  #allocation2 [shape = 'f32[8,8,384]{2,1,0:T(8,128)}', space=vmem, size = 0x18000, scoped, tag = 'scratch operand']
  #allocation3 [shape = 'f32[8,8,128]{2,1,0:T(8,128)}', space=vmem, size = 0x8000, scoped, tag = 'scratch operand']
  %s0 = inlined_call_operand.hbm [shape: f32[8,8,128], index: 0, kind: input, shape index: {}]
  %s1 = inlined_call_operand.vmem [shape: s32[8,1], index: 1, kind: input, shape index: {}]
  %s2 = inlined_call_operand.hbm [shape: f32[128,384], index: 2, kind: input, shape index: {}]
  %s3 = inlined_call_operand.hbm [shape: f32[128,384], index: 3, kind: input, shape index: {}]
  %s4 = inlined_call_operand.vmem [shape: f32[1,384], index: 4, kind: input, shape index: {}]
  %s5 = inlined_call_operand.vmem [shape: f32[1,128], index: 5, kind: input, shape index: {}]
  %s6 = inlined_call_operand.hbm [shape: f32[128,128], index: 6, kind: input, shape index: {}]
  %s7 = inlined_call_operand.hbm [shape: f32[128,128], index: 7, kind: input, shape index: {}]
  %s8 = inlined_call_operand.vmem [shape: f32[1,128], index: 8, kind: input, shape index: {}]
  %s9 = inlined_call_operand.hbm [shape: f32[128,128], index: 9, kind: input, shape index: {}]
  %s10 = inlined_call_operand.hbm [shape: f32[128,128], index: 10, kind: input, shape index: {}]
  %s11 = inlined_call_operand.hbm [shape: f32[8,128], index: 11, kind: output, shape index: {}]
  %s12 = sld [smem:[#allocation0]]
  $region82: #{tpu_custom_call.1} parent=0
    _
  %s14 = ssub.s32 1, %s12
  %s15 = scalar_select 0, %s14, %s12
  $region1: #{tpu_custom_call.1} parent=0
    #allocation4 [shape = 'u8[32768]{0}', space=vmem, size = 0x8000, scoped, tag = 'input window, operand 0, single buffered']
    #allocation5 [shape = 's32[1]{0}', space=sflag, size = 0x4, scoped, tag = 'scoped memory for tpu_custom_call.1']
    #allocation6 [shape = 's32[1]{0}', space=sflag, size = 0x4, scoped, tag = 'scoped memory for tpu_custom_call.1']
    #allocation7 [shape = 'u8[196608]{0}', space=vmem, size = 0x30000, scoped, tag = 'input window, operand 2, single buffered']
    #allocation8 [shape = 's32[1]{0}', space=sflag, size = 0x4, scoped, tag = 'scoped memory for tpu_custom_call.1']
    #allocation9 [shape = 'u8[196608]{0}', space=vmem, size = 0x30000, scoped, tag = 'input window, operand 3, single buffered']
    #allocation10 [shape = 'u8[65536]{0}', space=vmem, size = 0x10000, scoped, tag = 'input window, operand 6, single buffered']
    #allocation11 [shape = 's32[1]{0}', space=sflag, size = 0x4, scoped, tag = 'scoped memory for tpu_custom_call.1']
    #allocation12 [shape = 'u8[65536]{0}', space=vmem, size = 0x10000, scoped, tag = 'input window, operand 7, single buffered']
    #allocation13 [shape = 'u8[65536]{0}', space=vmem, size = 0x10000, scoped, tag = 'input window, operand 9, single buffered']
    #allocation14 [shape = 's32[1]{0}', space=sflag, size = 0x4, scoped, tag = 'scoped memory for tpu_custom_call.1']
    #allocation15 [shape = 'u8[65536]{0}', space=vmem, size = 0x10000, scoped, tag = 'input window, operand 10, single buffered']
    #allocation16 [shape = 'u8[4096]{0}', space=vmem, size = 0x1000, scoped, tag = 'output window, operand 0, single buffered']
    %16 = vsyncpa [#allocation5], 0
    %17 = vsyncpa [#allocation8], 0
    %18 = vsyncpa [#allocation11], 0
    %19 = vsyncpa [#allocation14], 0
    %20 = vsyncpa [#allocation6], 0
    // Predicated region
    $region2: #{tpu_custom_call.1} parent=1 // pred_check
      _
    $region3: #{tpu_custom_call.1} parent=1 // pred_check_branch
      %22 = sbr.rel (0) target = $region5
    $region4: #{tpu_custom_call.1} parent=1 // pred_region
      %s24 = ssub.s32 1024, 1024
      %25 = vsyncadd [#allocation5], %s24
      %s26 = sshll.u32 [#allocation4], 4
      %s27 = int_to_ptr.vmem [resolvable:$true] %s26
      %32 = dma.hbm_to_vmem [thread:$0]  %s0, 1024, %s27, [#allocation5], 128, 128, 8
    $region5: #{tpu_custom_call.1} parent=1 // pred_fallthru
      _
    // Predicated region
    $region6: #{tpu_custom_call.1} parent=1 // pred_check
      _
    $region7: #{tpu_custom_call.1} parent=1 // pred_check_branch
      %34 = sbr.rel (0) target = $region9
    $region8: #{tpu_custom_call.1} parent=1 // pred_region
      _
    $region9: #{tpu_custom_call.1} parent=1 // pred_fallthru
      _
    // Predicated region
    $region10: #{tpu_custom_call.1} parent=1 // pred_check
      _
    $region11: #{tpu_custom_call.1} parent=1 // pred_check_branch
      %36 = sbr.rel (0) target = $region13
    $region12: #{tpu_custom_call.1} parent=1 // pred_region
      %s38 = ssub.s32 6144, 6144
      %39 = vsyncadd [#allocation8], %s38
      %s40 = sshll.u32 [#allocation7], 4
      %s41 = int_to_ptr.vmem [resolvable:$true] %s40
      %46 = dma.hbm_to_vmem [thread:$0]  %s2, 6144, %s41, [#allocation8], 384, 384, 24
    $region13: #{tpu_custom_call.1} parent=1 // pred_fallthru
      _
    // Predicated region
    $region14: #{tpu_custom_call.1} parent=1 // pred_check
      _
    $region15: #{tpu_custom_call.1} parent=1 // pred_check_branch
      %48 = sbr.rel (0) target = $region17
    $region16: #{tpu_custom_call.1} parent=1 // pred_region
      %s50 = ssub.s32 6144, 6144
      %51 = vsyncadd [#allocation8], %s50
      %s52 = sshll.u32 [#allocation9], 4
      %s53 = int_to_ptr.vmem [resolvable:$true] %s52
      %58 = dma.hbm_to_vmem [thread:$0]  %s3, 6144, %s53, [#allocation8], 384, 384, 24
    $region17: #{tpu_custom_call.1} parent=1 // pred_fallthru
      _
    // Predicated region
    $region18: #{tpu_custom_call.1} parent=1 // pred_check
      _
    $region19: #{tpu_custom_call.1} parent=1 // pred_check_branch
      %60 = sbr.rel (0) target = $region21
    $region20: #{tpu_custom_call.1} parent=1 // pred_region
      _
    $region21: #{tpu_custom_call.1} parent=1 // pred_fallthru
      _
    // Predicated region
    $region22: #{tpu_custom_call.1} parent=1 // pred_check
      _
    $region23: #{tpu_custom_call.1} parent=1 // pred_check_branch
      %62 = sbr.rel (0) target = $region25
    $region24: #{tpu_custom_call.1} parent=1 // pred_region
      _
    $region25: #{tpu_custom_call.1} parent=1 // pred_fallthru
      _
    // Predicated region
    $region26: #{tpu_custom_call.1} parent=1 // pred_check
      _
    $region27: #{tpu_custom_call.1} parent=1 // pred_check_branch
      %64 = sbr.rel (0) target = $region29
    $region28: #{tpu_custom_call.1} parent=1 // pred_region
      %s66 = ssub.s32 2048, 2048
      %67 = vsyncadd [#allocation11], %s66
      %s68 = sshll.u32 [#allocation10], 4
      %s69 = int_to_ptr.vmem [resolvable:$true] %s68
      %74 = dma.hbm_to_vmem [thread:$0]  %s6, 2048, %s69, [#allocation11], 128, 128, 8
    $region29: #{tpu_custom_call.1} parent=1 // pred_fallthru
      _
    // Predicated region
    $region30: #{tpu_custom_call.1} parent=1 // pred_check
      _
    $region31: #{tpu_custom_call.1} parent=1 // pred_check_branch
      %76 = sbr.rel (0) target = $region33
    $region32: #{tpu_custom_call.1} parent=1 // pred_region
      %s78 = ssub.s32 2048, 2048
      %79 = vsyncadd [#allocation11], %s78
      %s80 = sshll.u32 [#allocation12], 4
      %s81 = int_to_ptr.vmem [resolvable:$true] %s80
      %86 = dma.hbm_to_vmem [thread:$0]  %s7, 2048, %s81, [#allocation11], 128, 128, 8
    $region33: #{tpu_custom_call.1} parent=1 // pred_fallthru
      _
    // Predicated region
    $region34: #{tpu_custom_call.1} parent=1 // pred_check
      _
    $region35: #{tpu_custom_call.1} parent=1 // pred_check_branch
      %88 = sbr.rel (0) target = $region37
    $region36: #{tpu_custom_call.1} parent=1 // pred_region
      _
    $region37: #{tpu_custom_call.1} parent=1 // pred_fallthru
      _
    // Predicated region
    $region38: #{tpu_custom_call.1} parent=1 // pred_check
      _
    $region39: #{tpu_custom_call.1} parent=1 // pred_check_branch
      %90 = sbr.rel (0) target = $region41
    $region40: #{tpu_custom_call.1} parent=1 // pred_region
      %s92 = ssub.s32 2048, 2048
      %93 = vsyncadd [#allocation14], %s92
      %s94 = sshll.u32 [#allocation13], 4
      %s95 = int_to_ptr.vmem [resolvable:$true] %s94
      %100 = dma.hbm_to_vmem [thread:$0]  %s9, 2048, %s95, [#allocation14], 128, 128, 8
    $region41: #{tpu_custom_call.1} parent=1 // pred_fallthru
      _
    // Predicated region
    $region42: #{tpu_custom_call.1} parent=1 // pred_check
      _
    $region43: #{tpu_custom_call.1} parent=1 // pred_check_branch
      %102 = sbr.rel (0) target = $region45
    $region44: #{tpu_custom_call.1} parent=1 // pred_region
      %s104 = ssub.s32 2048, 2048
      %105 = vsyncadd [#allocation14], %s104
      %s106 = sshll.u32 [#allocation15], 4
      %s107 = int_to_ptr.vmem [resolvable:$true] %s106
      %112 = dma.hbm_to_vmem [thread:$0]  %s10, 2048, %s107, [#allocation14], 128, 128, 8
    $region45: #{tpu_custom_call.1} parent=1 // pred_fallthru
      _
    // Predicated region
    $region46: #{tpu_custom_call.1} parent=1 // pred_check
      _
    $region47: #{tpu_custom_call.1} parent=1 // pred_check_branch
      %114 = sbr.rel (0) target = $region49
    $region48: #{tpu_custom_call.1} parent=1 // pred_region
      %115 = dma.done [#allocation5], 1024
    $region49: #{tpu_custom_call.1} parent=1 // pred_fallthru
      _
    // Predicated region
    $region50: #{tpu_custom_call.1} parent=1 // pred_check
      _
    $region51: #{tpu_custom_call.1} parent=1 // pred_check_branch
      %117 = sbr.rel (0) target = $region53
    $region52: #{tpu_custom_call.1} parent=1 // pred_region
      %118 = dma.done [#allocation8], 6144
    $region53: #{tpu_custom_call.1} parent=1 // pred_fallthru
      _
    // Predicated region
    $region54: #{tpu_custom_call.1} parent=1 // pred_check
      _
    $region55: #{tpu_custom_call.1} parent=1 // pred_check_branch
      %120 = sbr.rel (0) target = $region57
    $region56: #{tpu_custom_call.1} parent=1 // pred_region
      %121 = dma.done [#allocation8], 6144
    $region57: #{tpu_custom_call.1} parent=1 // pred_fallthru
      _
    // Predicated region
    $region58: #{tpu_custom_call.1} parent=1 // pred_check
      _
    $region59: #{tpu_custom_call.1} parent=1 // pred_check_branch
      %123 = sbr.rel (0) target = $region61
    $region60: #{tpu_custom_call.1} parent=1 // pred_region
      %124 = dma.done [#allocation11], 2048
    $region61: #{tpu_custom_call.1} parent=1 // pred_fallthru
      _
    // Predicated region
    $region62: #{tpu_custom_call.1} parent=1 // pred_check
      _
    $region63: #{tpu_custom_call.1} parent=1 // pred_check_branch
      %126 = sbr.rel (0) target = $region65
    $region64: #{tpu_custom_call.1} parent=1 // pred_region
      %127 = dma.done [#allocation11], 2048
    $region65: #{tpu_custom_call.1} parent=1 // pred_fallthru
      _
    // Predicated region
    $region66: #{tpu_custom_call.1} parent=1 // pred_check
      _
    $region67: #{tpu_custom_call.1} parent=1 // pred_check_branch
      %129 = sbr.rel (0) target = $region69
    $region68: #{tpu_custom_call.1} parent=1 // pred_region
      %130 = dma.done [#allocation14], 2048
    $region69: #{tpu_custom_call.1} parent=1 // pred_fallthru
      _
    // Predicated region
    $region70: #{tpu_custom_call.1} parent=1 // pred_check
      _
    $region71: #{tpu_custom_call.1} parent=1 // pred_check_branch
      %132 = sbr.rel (0) target = $region73
    $region72: #{tpu_custom_call.1} parent=1 // pred_region
      %133 = dma.done [#allocation14], 2048
    $region73: #{tpu_custom_call.1} parent=1 // pred_fallthru
      _
    %v134 = vld [vmem:[#allocation9] sm:$0xff]
    %v135 = vld [vmem:[#allocation9 + $0x8] sm:$0xff]
    %v136 = vld [vmem:[#allocation9 + $0x10] sm:$0xff]
    %v137 = vld [vmem:[#allocation9 + $0x18] sm:$0xff]
    %v138 = vld [vmem:[#allocation9 + $0x20] sm:$0xff]
    %v139 = vld [vmem:[#allocation9 + $0x28] sm:$0xff]
    %v140 = vld [vmem:[#allocation9 + $0x30] sm:$0xff]
    %v141 = vld [vmem:[#allocation9 + $0x38] sm:$0xff]
    %v142 = vld [vmem:[#allocation9 + $0x40] sm:$0xff]
    %v143 = vld [vmem:[#allocation9 + $0x48] sm:$0xff]
    %v144 = vld [vmem:[#allocation9 + $0x50] sm:$0xff]
    %v145 = vld [vmem:[#allocation9 + $0x58] sm:$0xff]
    %v146 = vld [vmem:[#allocation9 + $0x60] sm:$0xff]
    %v147 = vld [vmem:[#allocation9 + $0x68] sm:$0xff]
    %v148 = vld [vmem:[#allocation9 + $0x70] sm:$0xff]
    %v149 = vld [vmem:[#allocation9 + $0x78] sm:$0xff]
    %v150 = vld [vmem:[#allocation9 + $0x80] sm:$0xff]
    %v151 = vld [vmem:[#allocation9 + $0x88] sm:$0xff]
    %v152 = vld [vmem:[#allocation9 + $0x90] sm:$0xff]
    %v153 = vld [vmem:[#allocation9 + $0x98] sm:$0xff]
    %v154 = vld [vmem:[#allocation9 + $0xa0] sm:$0xff]
    %v155 = vld [vmem:[#allocation9 + $0xa8] sm:$0xff]
    %v156 = vld [vmem:[#allocation9 + $0xb0] sm:$0xff]
    %v157 = vld [vmem:[#allocation9 + $0xb8] sm:$0xff]
    %v158 = vld [vmem:[#allocation9 + $0xc0] sm:$0xff]
    %v159 = vld [vmem:[#allocation9 + $0xc8] sm:$0xff]
    %v160 = vld [vmem:[#allocation9 + $0xd0] sm:$0xff]
    %v161 = vld [vmem:[#allocation9 + $0xd8] sm:$0xff]
    %v162 = vld [vmem:[#allocation9 + $0xe0] sm:$0xff]
    %v163 = vld [vmem:[#allocation9 + $0xe8] sm:$0xff]
    %v164 = vld [vmem:[#allocation9 + $0xf0] sm:$0xff]
    %v165 = vld [vmem:[#allocation9 + $0xf8] sm:$0xff]
    %v166 = vld [vmem:[#allocation9 + $0x100] sm:$0xff]
    %v167 = vld [vmem:[#allocation9 + $0x108] sm:$0xff]
    %v168 = vld [vmem:[#allocation9 + $0x110] sm:$0xff]
    %v169 = vld [vmem:[#allocation9 + $0x118] sm:$0xff]
    %v170 = vld [vmem:[#allocation9 + $0x120] sm:$0xff]
    %v171 = vld [vmem:[#allocation9 + $0x128] sm:$0xff]
    %v172 = vld [vmem:[#allocation9 + $0x130] sm:$0xff]
    %v173 = vld [vmem:[#allocation9 + $0x138] sm:$0xff]
    %v174 = vld [vmem:[#allocation9 + $0x140] sm:$0xff]
    %v175 = vld [vmem:[#allocation9 + $0x148] sm:$0xff]
    %v176 = vld [vmem:[#allocation9 + $0x150] sm:$0xff]
    %v177 = vld [vmem:[#allocation9 + $0x158] sm:$0xff]
    %v178 = vld [vmem:[#allocation9 + $0x160] sm:$0xff]
    %v179 = vld [vmem:[#allocation9 + $0x168] sm:$0xff]
    %v180 = vld [vmem:[#allocation9 + $0x170] sm:$0xff]
    %v181 = vld [vmem:[#allocation9 + $0x178] sm:$0xff]
    %v182 = vld [vmem:[%s5] sm:$0x1]
    %v183 = vld [vmem:[%s1] sm:$0xff]
    %v184 = vld [vmem:[#allocation4] sm:$0xff]
    %v185 = vld [vmem:[#allocation4 + $0x8] sm:$0xff]
    %v186 = vld [vmem:[#allocation4 + $0x10] sm:$0xff]
    %v187 = vld [vmem:[#allocation4 + $0x18] sm:$0xff]
    %v188 = vld [vmem:[#allocation4 + $0x20] sm:$0xff]
    %v189 = vld [vmem:[#allocation4 + $0x28] sm:$0xff]
    %v190 = vld [vmem:[#allocation4 + $0x30] sm:$0xff]
    %v191 = vld [vmem:[#allocation4 + $0x38] sm:$0xff]
    %v192 = vld [vmem:[#allocation7] sm:$0xff]
    %v193 = vld [vmem:[#allocation7 + $0x8] sm:$0xff]
    %v194 = vld [vmem:[#allocation7 + $0x10] sm:$0xff]
    %v195 = vld [vmem:[#allocation7 + $0x18] sm:$0xff]
    %v196 = vld [vmem:[#allocation7 + $0x20] sm:$0xff]
    %v197 = vld [vmem:[#allocation7 + $0x28] sm:$0xff]
    %v198 = vld [vmem:[#allocation7 + $0x30] sm:$0xff]
    %v199 = vld [vmem:[#allocation7 + $0x38] sm:$0xff]
    %v200 = vld [vmem:[#allocation7 + $0x40] sm:$0xff]
    %v201 = vld [vmem:[#allocation7 + $0x48] sm:$0xff]
    %v202 = vld [vmem:[#allocation7 + $0x50] sm:$0xff]
    %v203 = vld [vmem:[#allocation7 + $0x58] sm:$0xff]
    %v204 = vld [vmem:[#allocation7 + $0x60] sm:$0xff]
    %v205 = vld [vmem:[#allocation7 + $0x68] sm:$0xff]
    %v206 = vld [vmem:[#allocation7 + $0x70] sm:$0xff]
    %v207 = vld [vmem:[#allocation7 + $0x78] sm:$0xff]
    %v208 = vld [vmem:[#allocation7 + $0x80] sm:$0xff]
    %v209 = vld [vmem:[#allocation7 + $0x88] sm:$0xff]
    %v210 = vld [vmem:[#allocation7 + $0x90] sm:$0xff]
    %v211 = vld [vmem:[#allocation7 + $0x98] sm:$0xff]
    %v212 = vld [vmem:[#allocation7 + $0xa0] sm:$0xff]
    %v213 = vld [vmem:[#allocation7 + $0xa8] sm:$0xff]
    %v214 = vld [vmem:[#allocation7 + $0xb0] sm:$0xff]
    %v215 = vld [vmem:[#allocation7 + $0xb8] sm:$0xff]
    %v216 = vld [vmem:[#allocation7 + $0xc0] sm:$0xff]
    %v217 = vld [vmem:[#allocation7 + $0xc8] sm:$0xff]
    %v218 = vld [vmem:[#allocation7 + $0xd0] sm:$0xff]
    %v219 = vld [vmem:[#allocation7 + $0xd8] sm:$0xff]
    %v220 = vld [vmem:[#allocation7 + $0xe0] sm:$0xff]
    %v221 = vld [vmem:[#allocation7 + $0xe8] sm:$0xff]
    %v222 = vld [vmem:[#allocation7 + $0xf0] sm:$0xff]
    %v223 = vld [vmem:[#allocation7 + $0xf8] sm:$0xff]
    %v224 = vld [vmem:[#allocation7 + $0x100] sm:$0xff]
    %v225 = vld [vmem:[#allocation7 + $0x108] sm:$0xff]
    %v226 = vld [vmem:[#allocation7 + $0x110] sm:$0xff]
    %v227 = vld [vmem:[#allocation7 + $0x118] sm:$0xff]
    %v228 = vld [vmem:[#allocation7 + $0x120] sm:$0xff]
    %v229 = vld [vmem:[#allocation7 + $0x128] sm:$0xff]
    %v230 = vld [vmem:[#allocation7 + $0x130] sm:$0xff]
    %v231 = vld [vmem:[#allocation7 + $0x138] sm:$0xff]
    %v232 = vld [vmem:[#allocation7 + $0x140] sm:$0xff]
    %v233 = vld [vmem:[#allocation7 + $0x148] sm:$0xff]
    %v234 = vld [vmem:[#allocation7 + $0x150] sm:$0xff]
    %v235 = vld [vmem:[#allocation7 + $0x158] sm:$0xff]
    %v236 = vld [vmem:[#allocation7 + $0x160] sm:$0xff]
    %v237 = vld [vmem:[#allocation7 + $0x168] sm:$0xff]
    %v238 = vld [vmem:[#allocation7 + $0x170] sm:$0xff]
    %v239 = vld [vmem:[#allocation7 + $0x178] sm:$0xff]
    %v240 = vld [vmem:[%s4] sm:$0x7]
    %v242 = vlaneseq
    %v243 = vshrl.u32 %v242, 7
    %v244 = vsub.s32 0, %v243
    %v245 = vrot.slane %v240, %v244
    %v246 = vlaneseq
    %v247 = vshrl.u32 %v246, 7
    %v248 = vsub.s32 1, %v247
    %v249 = vrot.slane %v240, %v248
    %v250 = vlaneseq
    %v251 = vshrl.u32 %v250, 7
    %v252 = vsub.s32 2, %v251
    %v253 = vrot.slane %v240, %v252
    %257 = vmatprep.subr.mxu0 %v193
    %258 = vmatpush1.msra.mxu0 %v192
    %259 = vmatprep.subr.mxu0 %v196
    %260 = vmatpush1.msra.mxu0 %v195
    %261 = vmatprep.subr.mxu0 %v199
    %262 = vmatpush1.msra.mxu0 %v198
    %263 = vmatprep.subr.mxu0 %v202
    %264 = vmatpush1.msra.mxu0 %v201
    %265 = vmatprep.subr.mxu0 %v205
    %266 = vmatpush1.msra.mxu0 %v204
    %267 = vmatprep.subr.mxu0 %v208
    %268 = vmatpush1.msra.mxu0 %v207
    %269 = vmatprep.subr.mxu0 %v211
    %270 = vmatpush1.msra.mxu0 %v210
    %271 = vmatprep.subr.mxu0 %v214
    %272 = vmatpush1.msra.mxu0 %v213
    %273 = vmatprep.subr.mxu0 %v217
    %274 = vmatpush1.msra.mxu0 %v216
    %275 = vmatprep.subr.mxu0 %v220
    %276 = vmatpush1.msra.mxu0 %v219
    %277 = vmatprep.subr.mxu0 %v223
    %278 = vmatpush1.msra.mxu0 %v222
    %279 = vmatprep.subr.mxu0 %v226
    %280 = vmatpush1.msra.mxu0 %v225
    %281 = vmatprep.subr.mxu0 %v229
    %282 = vmatpush1.msra.mxu0 %v228
    %283 = vmatprep.subr.mxu0 %v232
    %284 = vmatpush1.msra.mxu0 %v231
    %285 = vmatprep.subr.mxu0 %v235
    %286 = vmatpush1.msra.mxu0 %v234
    %287 = vmatprep.subr.mxu0 %v238
    %288 = vmatpush1.msra.mxu0 %v237
    %289 = vmatprep.subr.mxu0 0.0
    %290 = vmatpush1.msra.mxu0 0.0
    %291 = vmatprep.subr.mxu0 0.0
    %292 = vmatpush1.msra.mxu0 0.0
    %293 = vmatprep.subr.mxu0 0.0
    %294 = vmatpush1.msra.mxu0 0.0
    %295 = vmatprep.subr.mxu0 0.0
    %296 = vmatpush1.msra.mxu0 0.0
    %297 = vmatprep.subr.mxu0 0.0
    %298 = vmatpush1.msra.mxu0 0.0
    %299 = vmatprep.subr.mxu0 0.0
    %300 = vmatpush1.msra.mxu0 0.0
    %301 = vmatprep.subr.mxu0 0.0
    %302 = vmatpush1.msra.mxu0 0.0
    %303 = vmatprep.subr.mxu0 0.0
    %304 = vmatpush1.msra.mxu0 0.0
    %305 = vmatprep.subr.mxu0 0.0
    %306 = vmatpush1.msra.mxu0 0.0
    %307 = vmatprep.subr.mxu0 0.0
    %308 = vmatpush1.msra.mxu0 0.0
    %309 = vmatprep.subr.mxu0 0.0
    %310 = vmatpush1.msra.mxu0 0.0
    %311 = vmatprep.subr.mxu0 0.0
    %312 = vmatpush1.msra.mxu0 0.0
    %313 = vmatprep.subr.mxu0 0.0
    %314 = vmatpush1.msra.mxu0 0.0
    %315 = vmatprep.subr.mxu0 0.0
    %316 = vmatpush1.msra.mxu0 0.0
    %317 = vmatprep.subr.mxu0 0.0
    %318 = vmatpush1.msra.mxu0 0.0
    %319 = vmatprep.subr.mxu0 0.0
    %320 = vmatpush1.msra.mxu0 0.0
    %321 = vmatprep.mubr.f32.mxu0 0.0
    %322 = vmatmul.mubr.f32.gmra.mrb[0].mxu0 %v184
    %v323 = vpop.f32.mrb[0].mxu0
    %v324 = vadd.f32 %v245, %v323
    %v325 = vpop.f32.mrb[0].mxu0
    %v326 = vadd.f32 %v249, %v325
    %327 = vmatprep.mubr.f32.mxu0 0.0
    %328 = vmatmul.mubr.f32.gmra.mrb[0].mxu0 %v185
    %v329 = vpop.f32.mrb[0].mxu0
    %v330 = vadd.f32 %v245, %v329
    %v331 = vpop.f32.mrb[0].mxu0
    %v332 = vadd.f32 %v249, %v331
    %333 = vmatprep.mubr.f32.mxu0 0.0
    %334 = vmatmul.mubr.f32.gmra.mrb[0].mxu0 %v186
    %v335 = vpop.f32.mrb[0].mxu0
    %v336 = vadd.f32 %v245, %v335
    %v337 = vpop.f32.mrb[0].mxu0
    %v338 = vadd.f32 %v249, %v337
    %339 = vmatprep.mubr.f32.mxu0 0.0
    %340 = vmatmul.mubr.f32.gmra.mrb[0].mxu0 %v187
    %v341 = vpop.f32.mrb[0].mxu0
    %v342 = vadd.f32 %v245, %v341
    %v343 = vpop.f32.mrb[0].mxu0
    %v344 = vadd.f32 %v249, %v343
    %345 = vmatprep.mubr.f32.mxu0 0.0
    %346 = vmatmul.mubr.f32.gmra.mrb[0].mxu0 %v188
    %v347 = vpop.f32.mrb[0].mxu0
    %v348 = vadd.f32 %v245, %v347
    %v349 = vpop.f32.mrb[0].mxu0
    %v350 = vadd.f32 %v249, %v349
    %351 = vmatprep.mubr.f32.mxu0 0.0
    %352 = vmatmul.mubr.f32.gmra.mrb[0].mxu0 %v189
    %v353 = vpop.f32.mrb[0].mxu0
    %v354 = vadd.f32 %v245, %v353
    %v355 = vpop.f32.mrb[0].mxu0
    %v356 = vadd.f32 %v249, %v355
    %357 = vmatprep.mubr.f32.mxu0 0.0
    %358 = vmatmul.mubr.f32.gmra.mrb[0].mxu0 %v190
    %v359 = vpop.f32.mrb[0].mxu0
    %v360 = vadd.f32 %v245, %v359
    %v361 = vpop.f32.mrb[0].mxu0
    %v362 = vadd.f32 %v249, %v361
    %363 = vmatprep.mubr.f32.mxu0 0.0
    %364 = vmatmul.mubr.f32.gmra.mrb[0].mxu0 %v191
    %v365 = vpop.f32.mrb[0].mxu0
    %v366 = vadd.f32 %v245, %v365
    %v367 = vpop.f32.mrb[0].mxu0
    %v368 = vadd.f32 %v249, %v367
    %369 = vdwg.mxu0
    %370 = vmatprep.subr.mxu0 0.0
    %371 = vmatpush1.msra.mxu0 %v194
    %372 = vmatprep.subr.mxu0 0.0
    %373 = vmatpush1.msra.mxu0 %v197
    %374 = vmatprep.subr.mxu0 0.0
    %375 = vmatpush1.msra.mxu0 %v200
    %376 = vmatprep.subr.mxu0 0.0
    %377 = vmatpush1.msra.mxu0 %v203
    %378 = vmatprep.subr.mxu0 0.0
    %379 = vmatpush1.msra.mxu0 %v206
    %380 = vmatprep.subr.mxu0 0.0
    %381 = vmatpush1.msra.mxu0 %v209
    %382 = vmatprep.subr.mxu0 0.0
    %383 = vmatpush1.msra.mxu0 %v212
    %384 = vmatprep.subr.mxu0 0.0
    %385 = vmatpush1.msra.mxu0 %v215
    %386 = vmatprep.subr.mxu0 0.0
    %387 = vmatpush1.msra.mxu0 %v218
    %388 = vmatprep.subr.mxu0 0.0
    %389 = vmatpush1.msra.mxu0 %v221
    %390 = vmatprep.subr.mxu0 0.0
    %391 = vmatpush1.msra.mxu0 %v224
    %392 = vmatprep.subr.mxu0 0.0
    %393 = vmatpush1.msra.mxu0 %v227
    %394 = vmatprep.subr.mxu0 0.0
    %395 = vmatpush1.msra.mxu0 %v230
    %396 = vmatprep.subr.mxu0 0.0
    %397 = vmatpush1.msra.mxu0 %v233
    %398 = vmatprep.subr.mxu0 0.0
    %399 = vmatpush1.msra.mxu0 %v236
    %400 = vmatprep.subr.mxu0 0.0
    %401 = vmatpush1.msra.mxu0 %v239
    %402 = vmatprep.subr.mxu0 0.0
    %403 = vmatpush1.msra.mxu0 0.0
    %404 = vmatprep.subr.mxu0 0.0
    %405 = vmatpush1.msra.mxu0 0.0
    %406 = vmatprep.subr.mxu0 0.0
    %407 = vmatpush1.msra.mxu0 0.0
    %408 = vmatprep.subr.mxu0 0.0
    %409 = vmatpush1.msra.mxu0 0.0
    %410 = vmatprep.subr.mxu0 0.0
    %411 = vmatpush1.msra.mxu0 0.0
    %412 = vmatprep.subr.mxu0 0.0
    %413 = vmatpush1.msra.mxu0 0.0
    %414 = vmatprep.subr.mxu0 0.0
    %415 = vmatpush1.msra.mxu0 0.0
    %416 = vmatprep.subr.mxu0 0.0
    %417 = vmatpush1.msra.mxu0 0.0
    %418 = vmatprep.subr.mxu0 0.0
    %419 = vmatpush1.msra.mxu0 0.0
    %420 = vmatprep.subr.mxu0 0.0
    %421 = vmatpush1.msra.mxu0 0.0
    %422 = vmatprep.subr.mxu0 0.0
    %423 = vmatpush1.msra.mxu0 0.0
    %424 = vmatprep.subr.mxu0 0.0
    %425 = vmatpush1.msra.mxu0 0.0
    %426 = vmatprep.subr.mxu0 0.0
    %427 = vmatpush1.msra.mxu0 0.0
    %428 = vmatprep.subr.mxu0 0.0
    %429 = vmatpush1.msra.mxu0 0.0
    %430 = vmatprep.subr.mxu0 0.0
    %431 = vmatpush1.msra.mxu0 0.0
    %432 = vmatprep.subr.mxu0 0.0
    %433 = vmatpush1.msra.mxu0 0.0
    %434 = vmatprep.mubr.f32.mxu0 0.0
    %435 = vmatmul.mubr.f32.gmra.mrb[0].mxu0 %v184
    %v436 = vpop.f32.mrb[0].mxu0
    %v437 = vadd.f32 %v253, %v436
    %v438 = vpop.f32.mrb[0].mxu0
    %439 = vmatprep.mubr.f32.mxu0 0.0
    %440 = vmatmul.mubr.f32.gmra.mrb[0].mxu0 %v185
    %v441 = vpop.f32.mrb[0].mxu0
    %v442 = vadd.f32 %v253, %v441
    %v443 = vpop.f32.mrb[0].mxu0
    %444 = vmatprep.mubr.f32.mxu0 0.0
    %445 = vmatmul.mubr.f32.gmra.mrb[0].mxu0 %v186
    %v446 = vpop.f32.mrb[0].mxu0
    %v447 = vadd.f32 %v253, %v446
    %v448 = vpop.f32.mrb[0].mxu0
    %449 = vmatprep.mubr.f32.mxu0 0.0
    %450 = vmatmul.mubr.f32.gmra.mrb[0].mxu0 %v187
    %v451 = vpop.f32.mrb[0].mxu0
    %v452 = vadd.f32 %v253, %v451
    %v453 = vpop.f32.mrb[0].mxu0
    %454 = vmatprep.mubr.f32.mxu0 0.0
    %455 = vmatmul.mubr.f32.gmra.mrb[0].mxu0 %v188
    %v456 = vpop.f32.mrb[0].mxu0
    %v457 = vadd.f32 %v253, %v456
    %v458 = vpop.f32.mrb[0].mxu0
    %459 = vmatprep.mubr.f32.mxu0 0.0
    %460 = vmatmul.mubr.f32.gmra.mrb[0].mxu0 %v189
    %v461 = vpop.f32.mrb[0].mxu0
    %v462 = vadd.f32 %v253, %v461
    %v463 = vpop.f32.mrb[0].mxu0
    %464 = vmatprep.mubr.f32.mxu0 0.0
    %465 = vmatmul.mubr.f32.gmra.mrb[0].mxu0 %v190
    %v466 = vpop.f32.mrb[0].mxu0
    %v467 = vadd.f32 %v253, %v466
    %v468 = vpop.f32.mrb[0].mxu0
    %469 = vmatprep.mubr.f32.mxu0 0.0
    %470 = vmatmul.mubr.f32.gmra.mrb[0].mxu0 %v191
    %v471 = vpop.f32.mrb[0].mxu0
    %v472 = vadd.f32 %v253, %v471
    %v473 = vpop.f32.mrb[0].mxu0
    %474 = vdwg.mxu0
    %475 = vst [vmem:[#allocation2] sm:$0xff] %v324
    %476 = vst [vmem:[#allocation2 + $0x8] sm:$0xff] %v326
    %477 = vst [vmem:[#allocation2 + $0x10] sm:$0xff] %v437
    %478 = vst [vmem:[#allocation2 + $0x18] sm:$0xff] %v330
    %479 = vst [vmem:[#allocation2 + $0x20] sm:$0xff] %v332
    %480 = vst [vmem:[#allocation2 + $0x28] sm:$0xff] %v442
    %481 = vst [vmem:[#allocation2 + $0x30] sm:$0xff] %v336
    %482 = vst [vmem:[#allocation2 + $0x38] sm:$0xff] %v338
    %483 = vst [vmem:[#allocation2 + $0x40] sm:$0xff] %v447
    %484 = vst [vmem:[#allocation2 + $0x48] sm:$0xff] %v342
    %485 = vst [vmem:[#allocation2 + $0x50] sm:$0xff] %v344
    %486 = vst [vmem:[#allocation2 + $0x58] sm:$0xff] %v452
    %487 = vst [vmem:[#allocation2 + $0x60] sm:$0xff] %v348
    %488 = vst [vmem:[#allocation2 + $0x68] sm:$0xff] %v350
    %489 = vst [vmem:[#allocation2 + $0x70] sm:$0xff] %v457
    %490 = vst [vmem:[#allocation2 + $0x78] sm:$0xff] %v354
    %491 = vst [vmem:[#allocation2 + $0x80] sm:$0xff] %v356
    %492 = vst [vmem:[#allocation2 + $0x88] sm:$0xff] %v462
    %493 = vst [vmem:[#allocation2 + $0x90] sm:$0xff] %v360
    %494 = vst [vmem:[#allocation2 + $0x98] sm:$0xff] %v362
    %495 = vst [vmem:[#allocation2 + $0xa0] sm:$0xff] %v467
    %496 = vst [vmem:[#allocation2 + $0xa8] sm:$0xff] %v366
    %497 = vst [vmem:[#allocation2 + $0xb0] sm:$0xff] %v368
    %498 = vst [vmem:[#allocation2 + $0xb8] sm:$0xff] %v472
    %v499 = vld [vmem:[#allocation2] sm:$0xff]
    %v500 = vld [vmem:[#allocation2 + $0x8] sm:$0xff]
    %v501 = vld [vmem:[#allocation2 + $0x10] sm:$0xff]
    %502 = vmatprep.subr.mxu0 %v135
    %503 = vmatpush1.msra.mxu0 %v134
    %504 = vmatprep.subr.mxu0 %v138
    %505 = vmatpush1.msra.mxu0 %v137
    %506 = vmatprep.subr.mxu0 %v141
    %507 = vmatpush1.msra.mxu0 %v140
    %508 = vmatprep.subr.mxu0 %v144
    %509 = vmatpush1.msra.mxu0 %v143
    %510 = vmatprep.subr.mxu0 %v147
    %511 = vmatpush1.msra.mxu0 %v146
    %512 = vmatprep.subr.mxu0 %v150
    %513 = vmatpush1.msra.mxu0 %v149
    %514 = vmatprep.subr.mxu0 %v153
    %515 = vmatpush1.msra.mxu0 %v152
    %516 = vmatprep.subr.mxu0 %v156
    %517 = vmatpush1.msra.mxu0 %v155
    %518 = vmatprep.subr.mxu0 %v159
    %519 = vmatpush1.msra.mxu0 %v158
    %520 = vmatprep.subr.mxu0 %v162
    %521 = vmatpush1.msra.mxu0 %v161
    %522 = vmatprep.subr.mxu0 %v165
    %523 = vmatpush1.msra.mxu0 %v164
    %524 = vmatprep.subr.mxu0 %v168
    %525 = vmatpush1.msra.mxu0 %v167
    %526 = vmatprep.subr.mxu0 %v171
    %527 = vmatpush1.msra.mxu0 %v170
    %528 = vmatprep.subr.mxu0 %v174
    %529 = vmatpush1.msra.mxu0 %v173
    %530 = vmatprep.subr.mxu0 %v177
    %531 = vmatpush1.msra.mxu0 %v176
    %532 = vmatprep.subr.mxu0 %v180
    %533 = vmatpush1.msra.mxu0 %v179
    %534 = vmatprep.subr.mxu0 0.0
    %535 = vmatpush1.msra.mxu0 0.0
    %536 = vmatprep.subr.mxu0 0.0
    %537 = vmatpush1.msra.mxu0 0.0
    %538 = vmatprep.subr.mxu0 0.0
    %539 = vmatpush1.msra.mxu0 0.0
    %540 = vmatprep.subr.mxu0 0.0
    %541 = vmatpush1.msra.mxu0 0.0
    %542 = vmatprep.subr.mxu0 0.0
    %543 = vmatpush1.msra.mxu0 0.0
    %544 = vmatprep.subr.mxu0 0.0
    %545 = vmatpush1.msra.mxu0 0.0
    %546 = vmatprep.subr.mxu0 0.0
    %547 = vmatpush1.msra.mxu0 0.0
    %548 = vmatprep.subr.mxu0 0.0
    %549 = vmatpush1.msra.mxu0 0.0
    %550 = vmatprep.subr.mxu0 0.0
    %551 = vmatpush1.msra.mxu0 0.0
    %552 = vmatprep.subr.mxu0 0.0
    %553 = vmatpush1.msra.mxu0 0.0
    %554 = vmatprep.subr.mxu0 0.0
    %555 = vmatpush1.msra.mxu0 0.0
    %556 = vmatprep.subr.mxu0 0.0
    %557 = vmatpush1.msra.mxu0 0.0
    %558 = vmatprep.subr.mxu0 0.0
    %559 = vmatpush1.msra.mxu0 0.0
    %560 = vmatprep.subr.mxu0 0.0
    %561 = vmatpush1.msra.mxu0 0.0
    %562 = vmatprep.subr.mxu0 0.0
    %563 = vmatpush1.msra.mxu0 0.0
    %564 = vmatprep.subr.mxu0 0.0
    %565 = vmatpush1.msra.mxu0 0.0
    %566 = vmatprep.mubr.f32.mxu0 0.0
    %567 = vmatmul.mubr.f32.gmra.mrb[0].mxu0 0.0
    %v568 = vpop.f32.mrb[0].mxu0
    %v569 = vadd.f32 0.0, %v568
    %v570 = vpop.f32.mrb[0].mxu0
    %v571 = vadd.f32 0.0, %v570
    %572 = vdwg.mxu0
    %573 = vmatprep.subr.mxu0 0.0
    %574 = vmatpush1.msra.mxu0 %v136
    %575 = vmatprep.subr.mxu0 0.0
    %576 = vmatpush1.msra.mxu0 %v139
    %577 = vmatprep.subr.mxu0 0.0
    %578 = vmatpush1.msra.mxu0 %v142
    %579 = vmatprep.subr.mxu0 0.0
    %580 = vmatpush1.msra.mxu0 %v145
    %581 = vmatprep.subr.mxu0 0.0
    %582 = vmatpush1.msra.mxu0 %v148
    %583 = vmatprep.subr.mxu0 0.0
    %584 = vmatpush1.msra.mxu0 %v151
    %585 = vmatprep.subr.mxu0 0.0
    %586 = vmatpush1.msra.mxu0 %v154
    %587 = vmatprep.subr.mxu0 0.0
    %588 = vmatpush1.msra.mxu0 %v157
    %589 = vmatprep.subr.mxu0 0.0
    %590 = vmatpush1.msra.mxu0 %v160
    %591 = vmatprep.subr.mxu0 0.0
    %592 = vmatpush1.msra.mxu0 %v163
    %593 = vmatprep.subr.mxu0 0.0
    %594 = vmatpush1.msra.mxu0 %v166
    %595 = vmatprep.subr.mxu0 0.0
    %596 = vmatpush1.msra.mxu0 %v169
    %597 = vmatprep.subr.mxu0 0.0
    %598 = vmatpush1.msra.mxu0 %v172
    %599 = vmatprep.subr.mxu0 0.0
    %600 = vmatpush1.msra.mxu0 %v175
    %601 = vmatprep.subr.mxu0 0.0
    %602 = vmatpush1.msra.mxu0 %v178
    %603 = vmatprep.subr.mxu0 0.0
    %604 = vmatpush1.msra.mxu0 %v181
    %605 = vmatprep.subr.mxu0 0.0
    %606 = vmatpush1.msra.mxu0 0.0
    %607 = vmatprep.subr.mxu0 0.0
    %608 = vmatpush1.msra.mxu0 0.0
    %609 = vmatprep.subr.mxu0 0.0
    %610 = vmatpush1.msra.mxu0 0.0
    %611 = vmatprep.subr.mxu0 0.0
    %612 = vmatpush1.msra.mxu0 0.0
    %613 = vmatprep.subr.mxu0 0.0
    %614 = vmatpush1.msra.mxu0 0.0
    %615 = vmatprep.subr.mxu0 0.0
    %616 = vmatpush1.msra.mxu0 0.0
    %617 = vmatprep.subr.mxu0 0.0
    %618 = vmatpush1.msra.mxu0 0.0
    %619 = vmatprep.subr.mxu0 0.0
    %620 = vmatpush1.msra.mxu0 0.0
    %621 = vmatprep.subr.mxu0 0.0
    %622 = vmatpush1.msra.mxu0 0.0
    %623 = vmatprep.subr.mxu0 0.0
    %624 = vmatpush1.msra.mxu0 0.0
    %625 = vmatprep.subr.mxu0 0.0
    %626 = vmatpush1.msra.mxu0 0.0
    %627 = vmatprep.subr.mxu0 0.0
    %628 = vmatpush1.msra.mxu0 0.0
    %629 = vmatprep.subr.mxu0 0.0
    %630 = vmatpush1.msra.mxu0 0.0
    %631 = vmatprep.subr.mxu0 0.0
    %632 = vmatpush1.msra.mxu0 0.0
    %633 = vmatprep.subr.mxu0 0.0
    %634 = vmatpush1.msra.mxu0 0.0
    %635 = vmatprep.subr.mxu0 0.0
    %636 = vmatpush1.msra.mxu0 0.0
    %637 = vmatprep.mubr.f32.mxu0 0.0
    %638 = vmatmul.mubr.f32.gmra.mrb[0].mxu0 0.0
    %v639 = vpop.f32.mrb[0].mxu0
    %v640 = vadd.f32 0.0, %v639
    %v641 = vpop.f32.mrb[0].mxu0
    %642 = vdwg.mxu0
    %v643 = vadd.f32 %v499, %v569
    %v644 = vxor.u32 %v643, 2147483648
    %v645 = vmul.f32 %v644, 1.442695
    %v646 = vpow.pop %v645
    %v647 = vadd.f32 %v646, 1.0
    %v648 = vrcp.pop %v647
    %v649 = vmul.f32 1.0, %v648
    %v650 = vadd.f32 %v500, %v571
    %v651 = vxor.u32 %v650, 2147483648
    %v652 = vmul.f32 %v651, 1.442695
    %v653 = vpow.pop %v652
    %v654 = vadd.f32 %v653, 1.0
    %v655 = vrcp.pop %v654
    %v656 = vmul.f32 1.0, %v655
    %v658 = vlaneseq
    %v659 = vshrl.u32 %v658, 7
    %v660 = vsub.s32 0, %v659
    %v661 = vrot.slane %v182, %v660
    %v663 = vadd.f32 %v640, %v661
    %v664 = vmul.f32 %v649, %v663
    %v665 = vadd.f32 %v501, %v664
    %v666 = vtanh.pop %v665
    %v667 = vsub.f32 1.0, %v656
    %v668 = vmul.f32 %v667, %v666
    %v669 = vmul.f32 %v656, 0.0
    %v670 = vadd.f32 %v668, %v669
    %vm671 = vcmp.gt.s32.totalorder %v183, 0
    %v672 = vsel %vm671, 1, 0
    %v673 = vcvt.s32.f32 %v672
    %675 = vset.pattern.permute.xlu0 0
    %676 = vperm.xlu0 %675, %v673
    %v677 = vpop.permute.xlu0 %676
    %v679 = vmul.f32 %v677, %v670
    %680 = vst [vmem:[#allocation3] sm:$0xff] %v679
    %v681 = vsub.f32 1.0, %v673
    %683 = vset.pattern.permute.xlu0 0
    %684 = vperm.xlu0 %683, %v681
    %v685 = vpop.permute.xlu0 %684
    %v687 = vmul.f32 %v685, 0.0
    %v688 = vadd.f32 %v679, %v687
    %s689 = scalar_lea.vmem [#allocation2], 24
    %v690 = vld [vmem:[%s689] sm:$0xff]
    %v691 = vld [vmem:[%s689 + $0x8] sm:$0xff]
    %v692 = vld [vmem:[%s689 + $0x10] sm:$0xff]
    %693 = vmatprep.subr.mxu0 %v135
    %694 = vmatpush1.msra.mxu0 %v134
    %695 = vmatprep.subr.mxu0 %v138
    %696 = vmatpush1.msra.mxu0 %v137
    %697 = vmatprep.subr.mxu0 %v141
    %698 = vmatpush1.msra.mxu0 %v140
    %699 = vmatprep.subr.mxu0 %v144
    %700 = vmatpush1.msra.mxu0 %v143
    %701 = vmatprep.subr.mxu0 %v147
    %702 = vmatpush1.msra.mxu0 %v146
    %703 = vmatprep.subr.mxu0 %v150
    %704 = vmatpush1.msra.mxu0 %v149
    %705 = vmatprep.subr.mxu0 %v153
    %706 = vmatpush1.msra.mxu0 %v152
    %707 = vmatprep.subr.mxu0 %v156
    %708 = vmatpush1.msra.mxu0 %v155
    %709 = vmatprep.subr.mxu0 %v159
    %710 = vmatpush1.msra.mxu0 %v158
    %711 = vmatprep.subr.mxu0 %v162
    %712 = vmatpush1.msra.mxu0 %v161
    %713 = vmatprep.subr.mxu0 %v165
    %714 = vmatpush1.msra.mxu0 %v164
    %715 = vmatprep.subr.mxu0 %v168
    %716 = vmatpush1.msra.mxu0 %v167
    %717 = vmatprep.subr.mxu0 %v171
    %718 = vmatpush1.msra.mxu0 %v170
    %719 = vmatprep.subr.mxu0 %v174
    %720 = vmatpush1.msra.mxu0 %v173
    %721 = vmatprep.subr.mxu0 %v177
    %722 = vmatpush1.msra.mxu0 %v176
    %723 = vmatprep.subr.mxu0 %v180
    %724 = vmatpush1.msra.mxu0 %v179
    %725 = vmatprep.subr.mxu0 0.0
    %726 = vmatpush1.msra.mxu0 0.0
    %727 = vmatprep.subr.mxu0 0.0
    %728 = vmatpush1.msra.mxu0 0.0
    %729 = vmatprep.subr.mxu0 0.0
    %730 = vmatpush1.msra.mxu0 0.0
    %731 = vmatprep.subr.mxu0 0.0
    %732 = vmatpush1.msra.mxu0 0.0
    %733 = vmatprep.subr.mxu0 0.0
    %734 = vmatpush1.msra.mxu0 0.0
    %735 = vmatprep.subr.mxu0 0.0
    %736 = vmatpush1.msra.mxu0 0.0
    %737 = vmatprep.subr.mxu0 0.0
    %738 = vmatpush1.msra.mxu0 0.0
    %739 = vmatprep.subr.mxu0 0.0
    %740 = vmatpush1.msra.mxu0 0.0
    %741 = vmatprep.subr.mxu0 0.0
    %742 = vmatpush1.msra.mxu0 0.0
    %743 = vmatprep.subr.mxu0 0.0
    %744 = vmatpush1.msra.mxu0 0.0
    %745 = vmatprep.subr.mxu0 0.0
    %746 = vmatpush1.msra.mxu0 0.0
    %747 = vmatprep.subr.mxu0 0.0
    %748 = vmatpush1.msra.mxu0 0.0
    %749 = vmatprep.subr.mxu0 0.0
    %750 = vmatpush1.msra.mxu0 0.0
    %751 = vmatprep.subr.mxu0 0.0
    %752 = vmatpush1.msra.mxu0 0.0
    %753 = vmatprep.subr.mxu0 0.0
    %754 = vmatpush1.msra.mxu0 0.0
    %755 = vmatprep.subr.mxu0 0.0
    %756 = vmatpush1.msra.mxu0 0.0
    %757 = vmatprep.mubr.f32.mxu0 0.0
    %758 = vmatmul.mubr.f32.gmra.mrb[0].mxu0 %v688
    %v759 = vpop.f32.mrb[0].mxu0
    %v760 = vadd.f32 0.0, %v759
    %v761 = vpop.f32.mrb[0].mxu0
    %v762 = vadd.f32 0.0, %v761
    %763 = vdwg.mxu0
    %764 = vmatprep.subr.mxu0 0.0
    %765 = vmatpush1.msra.mxu0 %v136
    %766 = vmatprep.subr.mxu0 0.0
    %767 = vmatpush1.msra.mxu0 %v139
    %768 = vmatprep.subr.mxu0 0.0
    %769 = vmatpush1.msra.mxu0 %v142
    %770 = vmatprep.subr.mxu0 0.0
    %771 = vmatpush1.msra.mxu0 %v145
    %772 = vmatprep.subr.mxu0 0.0
    %773 = vmatpush1.msra.mxu0 %v148
    %774 = vmatprep.subr.mxu0 0.0
    %775 = vmatpush1.msra.mxu0 %v151
    %776 = vmatprep.subr.mxu0 0.0
    %777 = vmatpush1.msra.mxu0 %v154
    %778 = vmatprep.subr.mxu0 0.0
    %779 = vmatpush1.msra.mxu0 %v157
    %780 = vmatprep.subr.mxu0 0.0
    %781 = vmatpush1.msra.mxu0 %v160
    %782 = vmatprep.subr.mxu0 0.0
    %783 = vmatpush1.msra.mxu0 %v163
    %784 = vmatprep.subr.mxu0 0.0
    %785 = vmatpush1.msra.mxu0 %v166
    %786 = vmatprep.subr.mxu0 0.0
    %787 = vmatpush1.msra.mxu0 %v169
    %788 = vmatprep.subr.mxu0 0.0
    %789 = vmatpush1.msra.mxu0 %v172
    %790 = vmatprep.subr.mxu0 0.0
    %791 = vmatpush1.msra.mxu0 %v175
    %792 = vmatprep.subr.mxu0 0.0
    %793 = vmatpush1.msra.mxu0 %v178
    %794 = vmatprep.subr.mxu0 0.0
    %795 = vmatpush1.msra.mxu0 %v181
    %796 = vmatprep.subr.mxu0 0.0
    %797 = vmatpush1.msra.mxu0 0.0
    %798 = vmatprep.subr.mxu0 0.0
    %799 = vmatpush1.msra.mxu0 0.0
    %800 = vmatprep.subr.mxu0 0.0
    %801 = vmatpush1.msra.mxu0 0.0
    %802 = vmatprep.subr.mxu0 0.0
    %803 = vmatpush1.msra.mxu0 0.0
    %804 = vmatprep.subr.mxu0 0.0
    %805 = vmatpush1.msra.mxu0 0.0
    %806 = vmatprep.subr.mxu0 0.0
    %807 = vmatpush1.msra.mxu0 0.0
    %808 = vmatprep.subr.mxu0 0.0
    %809 = vmatpush1.msra.mxu0 0.0
    %810 = vmatprep.subr.mxu0 0.0
    %811 = vmatpush1.msra.mxu0 0.0
    %812 = vmatprep.subr.mxu0 0.0
    %813 = vmatpush1.msra.mxu0 0.0
    %814 = vmatprep.subr.mxu0 0.0
    %815 = vmatpush1.msra.mxu0 0.0
    %816 = vmatprep.subr.mxu0 0.0
    %817 = vmatpush1.msra.mxu0 0.0
    %818 = vmatprep.subr.mxu0 0.0
    %819 = vmatpush1.msra.mxu0 0.0
    %820 = vmatprep.subr.mxu0 0.0
    %821 = vmatpush1.msra.mxu0 0.0
    %822 = vmatprep.subr.mxu0 0.0
    %823 = vmatpush1.msra.mxu0 0.0
    %824 = vmatprep.subr.mxu0 0.0
    %825 = vmatpush1.msra.mxu0 0.0
    %826 = vmatprep.subr.mxu0 0.0
    %827 = vmatpush1.msra.mxu0 0.0
    %828 = vmatprep.mubr.f32.mxu0 0.0
    %829 = vmatmul.mubr.f32.gmra.mrb[0].mxu0 %v688
    %v830 = vpop.f32.mrb[0].mxu0
    %v831 = vadd.f32 0.0, %v830
    %v832 = vpop.f32.mrb[0].mxu0
    %833 = vdwg.mxu0
    %v834 = vadd.f32 %v690, %v760
    %v835 = vxor.u32 %v834, 2147483648
    %v836 = vmul.f32 %v835, 1.442695
    %v837 = vpow.pop %v836
    %v838 = vadd.f32 %v837, 1.0
    %v839 = vrcp.pop %v838
    %v840 = vmul.f32 1.0, %v839
    %v841 = vadd.f32 %v691, %v762
    %v842 = vxor.u32 %v841, 2147483648
    %v843 = vmul.f32 %v842, 1.442695
    %v844 = vpow.pop %v843
    %v845 = vadd.f32 %v844, 1.0
    %v846 = vrcp.pop %v845
    %v847 = vmul.f32 1.0, %v846
    %v848 = vadd.f32 %v831, %v661
    %v849 = vmul.f32 %v840, %v848
    %v850 = vadd.f32 %v692, %v849
    %v851 = vtanh.pop %v850
    %v852 = vsub.f32 1.0, %v847
    %v853 = vmul.f32 %v852, %v851
    %v854 = vmul.f32 %v847, %v688
    %v855 = vadd.f32 %v853, %v854
    %vm856 = vcmp.gt.s32.totalorder %v183, 1
    %v857 = vsel %vm856, 1, 0
    %v858 = vcvt.s32.f32 %v857
    %860 = vset.pattern.permute.xlu0 0
    %861 = vperm.xlu0 %860, %v858
    %v862 = vpop.permute.xlu0 %861
    %v864 = vmul.f32 %v862, %v855
    %s865 = scalar_lea.vmem [#allocation3], 8
    %866 = vst [vmem:[%s865] sm:$0xff] %v864
    %v867 = vsub.f32 1.0, %v858
    %869 = vset.pattern.permute.xlu0 0
    %870 = vperm.xlu0 %869, %v867
    %v871 = vpop.permute.xlu0 %870
    %v873 = vmul.f32 %v871, %v688
    %v874 = vadd.f32 %v864, %v873
    %s875 = scalar_lea.vmem [#allocation2], 48
    %v876 = vld [vmem:[%s875] sm:$0xff]
    %v877 = vld [vmem:[%s875 + $0x8] sm:$0xff]
    %v878 = vld [vmem:[%s875 + $0x10] sm:$0xff]
    %879 = vmatprep.subr.mxu0 %v135
    %880 = vmatpush1.msra.mxu0 %v134
    %881 = vmatprep.subr.mxu0 %v138
    %882 = vmatpush1.msra.mxu0 %v137
    %883 = vmatprep.subr.mxu0 %v141
    %884 = vmatpush1.msra.mxu0 %v140
    %885 = vmatprep.subr.mxu0 %v144
    %886 = vmatpush1.msra.mxu0 %v143
    %887 = vmatprep.subr.mxu0 %v147
    %888 = vmatpush1.msra.mxu0 %v146
    %889 = vmatprep.subr.mxu0 %v150
    %890 = vmatpush1.msra.mxu0 %v149
    %891 = vmatprep.subr.mxu0 %v153
    %892 = vmatpush1.msra.mxu0 %v152
    %893 = vmatprep.subr.mxu0 %v156
    %894 = vmatpush1.msra.mxu0 %v155
    %895 = vmatprep.subr.mxu0 %v159
    %896 = vmatpush1.msra.mxu0 %v158
    %897 = vmatprep.subr.mxu0 %v162
    %898 = vmatpush1.msra.mxu0 %v161
    %899 = vmatprep.subr.mxu0 %v165
    %900 = vmatpush1.msra.mxu0 %v164
    %901 = vmatprep.subr.mxu0 %v168
    %902 = vmatpush1.msra.mxu0 %v167
    %903 = vmatprep.subr.mxu0 %v171
    %904 = vmatpush1.msra.mxu0 %v170
    %905 = vmatprep.subr.mxu0 %v174
    %906 = vmatpush1.msra.mxu0 %v173
    %907 = vmatprep.subr.mxu0 %v177
    %908 = vmatpush1.msra.mxu0 %v176
    %909 = vmatprep.subr.mxu0 %v180
    %910 = vmatpush1.msra.mxu0 %v179
    %911 = vmatprep.subr.mxu0 0.0
    %912 = vmatpush1.msra.mxu0 0.0
    %913 = vmatprep.subr.mxu0 0.0
    %914 = vmatpush1.msra.mxu0 0.0
    %915 = vmatprep.subr.mxu0 0.0
    %916 = vmatpush1.msra.mxu0 0.0
    %917 = vmatprep.subr.mxu0 0.0
    %918 = vmatpush1.msra.mxu0 0.0
    %919 = vmatprep.subr.mxu0 0.0
    %920 = vmatpush1.msra.mxu0 0.0
    %921 = vmatprep.subr.mxu0 0.0
    %922 = vmatpush1.msra.mxu0 0.0
    %923 = vmatprep.subr.mxu0 0.0
    %924 = vmatpush1.msra.mxu0 0.0
    %925 = vmatprep.subr.mxu0 0.0
    %926 = vmatpush1.msra.mxu0 0.0
    %927 = vmatprep.subr.mxu0 0.0
    %928 = vmatpush1.msra.mxu0 0.0
    %929 = vmatprep.subr.mxu0 0.0
    %930 = vmatpush1.msra.mxu0 0.0
    %931 = vmatprep.subr.mxu0 0.0
    %932 = vmatpush1.msra.mxu0 0.0
    %933 = vmatprep.subr.mxu0 0.0
    %934 = vmatpush1.msra.mxu0 0.0
    %935 = vmatprep.subr.mxu0 0.0
    %936 = vmatpush1.msra.mxu0 0.0
    %937 = vmatprep.subr.mxu0 0.0
    %938 = vmatpush1.msra.mxu0 0.0
    %939 = vmatprep.subr.mxu0 0.0
    %940 = vmatpush1.msra.mxu0 0.0
    %941 = vmatprep.subr.mxu0 0.0
    %942 = vmatpush1.msra.mxu0 0.0
    %943 = vmatprep.mubr.f32.mxu0 0.0
    %944 = vmatmul.mubr.f32.gmra.mrb[0].mxu0 %v874
    %v945 = vpop.f32.mrb[0].mxu0
    %v946 = vadd.f32 0.0, %v945
    %v947 = vpop.f32.mrb[0].mxu0
    %v948 = vadd.f32 0.0, %v947
    %949 = vdwg.mxu0
    %950 = vmatprep.subr.mxu0 0.0
    %951 = vmatpush1.msra.mxu0 %v136
    %952 = vmatprep.subr.mxu0 0.0
    %953 = vmatpush1.msra.mxu0 %v139
    %954 = vmatprep.subr.mxu0 0.0
    %955 = vmatpush1.msra.mxu0 %v142
    %956 = vmatprep.subr.mxu0 0.0
    %957 = vmatpush1.msra.mxu0 %v145
    %958 = vmatprep.subr.mxu0 0.0
    %959 = vmatpush1.msra.mxu0 %v148
    %960 = vmatprep.subr.mxu0 0.0
    %961 = vmatpush1.msra.mxu0 %v151
    %962 = vmatprep.subr.mxu0 0.0
    %963 = vmatpush1.msra.mxu0 %v154
    %964 = vmatprep.subr.mxu0 0.0
    %965 = vmatpush1.msra.mxu0 %v157
    %966 = vmatprep.subr.mxu0 0.0
    %967 = vmatpush1.msra.mxu0 %v160
    %968 = vmatprep.subr.mxu0 0.0
    %969 = vmatpush1.msra.mxu0 %v163
    %970 = vmatprep.subr.mxu0 0.0
    %971 = vmatpush1.msra.mxu0 %v166
    %972 = vmatprep.subr.mxu0 0.0
    %973 = vmatpush1.msra.mxu0 %v169
    %974 = vmatprep.subr.mxu0 0.0
    %975 = vmatpush1.msra.mxu0 %v172
    %976 = vmatprep.subr.mxu0 0.0
    %977 = vmatpush1.msra.mxu0 %v175
    %978 = vmatprep.subr.mxu0 0.0
    %979 = vmatpush1.msra.mxu0 %v178
    %980 = vmatprep.subr.mxu0 0.0
    %981 = vmatpush1.msra.mxu0 %v181
    %982 = vmatprep.subr.mxu0 0.0
    %983 = vmatpush1.msra.mxu0 0.0
    %984 = vmatprep.subr.mxu0 0.0
    %985 = vmatpush1.msra.mxu0 0.0
    %986 = vmatprep.subr.mxu0 0.0
    %987 = vmatpush1.msra.mxu0 0.0
    %988 = vmatprep.subr.mxu0 0.0
    %989 = vmatpush1.msra.mxu0 0.0
    %990 = vmatprep.subr.mxu0 0.0
    %991 = vmatpush1.msra.mxu0 0.0
    %992 = vmatprep.subr.mxu0 0.0
    %993 = vmatpush1.msra.mxu0 0.0
    %994 = vmatprep.subr.mxu0 0.0
    %995 = vmatpush1.msra.mxu0 0.0
    %996 = vmatprep.subr.mxu0 0.0
    %997 = vmatpush1.msra.mxu0 0.0
    %998 = vmatprep.subr.mxu0 0.0
    %999 = vmatpush1.msra.mxu0 0.0
    %1000 = vmatprep.subr.mxu0 0.0
    %1001 = vmatpush1.msra.mxu0 0.0
    %1002 = vmatprep.subr.mxu0 0.0
    %1003 = vmatpush1.msra.mxu0 0.0
    %1004 = vmatprep.subr.mxu0 0.0
    %1005 = vmatpush1.msra.mxu0 0.0
    %1006 = vmatprep.subr.mxu0 0.0
    %1007 = vmatpush1.msra.mxu0 0.0
    %1008 = vmatprep.subr.mxu0 0.0
    %1009 = vmatpush1.msra.mxu0 0.0
    %1010 = vmatprep.subr.mxu0 0.0
    %1011 = vmatpush1.msra.mxu0 0.0
    %1012 = vmatprep.subr.mxu0 0.0
    %1013 = vmatpush1.msra.mxu0 0.0
    %1014 = vmatprep.mubr.f32.mxu0 0.0
    %1015 = vmatmul.mubr.f32.gmra.mrb[0].mxu0 %v874
    %v1016 = vpop.f32.mrb[0].mxu0
    %v1017 = vadd.f32 0.0, %v1016
    %v1018 = vpop.f32.mrb[0].mxu0
    %1019 = vdwg.mxu0
    %v1020 = vadd.f32 %v876, %v946
    %v1021 = vxor.u32 %v1020, 2147483648
    %v1022 = vmul.f32 %v1021, 1.442695
    %v1023 = vpow.pop %v1022
    %v1024 = vadd.f32 %v1023, 1.0
    %v1025 = vrcp.pop %v1024
    %v1026 = vmul.f32 1.0, %v1025
    %v1027 = vadd.f32 %v877, %v948
    %v1028 = vxor.u32 %v1027, 2147483648
    %v1029 = vmul.f32 %v1028, 1.442695
    %v1030 = vpow.pop %v1029
    %v1031 = vadd.f32 %v1030, 1.0
    %v1032 = vrcp.pop %v1031
    %v1033 = vmul.f32 1.0, %v1032
    %v1034 = vadd.f32 %v1017, %v661
    %v1035 = vmul.f32 %v1026, %v1034
    %v1036 = vadd.f32 %v878, %v1035
    %v1037 = vtanh.pop %v1036
    %v1038 = vsub.f32 1.0, %v1033
    %v1039 = vmul.f32 %v1038, %v1037
    %v1040 = vmul.f32 %v1033, %v874
    %v1041 = vadd.f32 %v1039, %v1040
    %vm1042 = vcmp.gt.s32.totalorder %v183, 2
    %v1043 = vsel %vm1042, 1, 0
    %v1044 = vcvt.s32.f32 %v1043
    %1046 = vset.pattern.permute.xlu0 0
    %1047 = vperm.xlu0 %1046, %v1044
    %v1048 = vpop.permute.xlu0 %1047
    %v1050 = vmul.f32 %v1048, %v1041
    %s1051 = scalar_lea.vmem [#allocation3], 16
    %1052 = vst [vmem:[%s1051] sm:$0xff] %v1050
    %v1053 = vsub.f32 1.0, %v1044
    %1055 = vset.pattern.permute.xlu0 0
    %1056 = vperm.xlu0 %1055, %v1053
    %v1057 = vpop.permute.xlu0 %1056
    %v1059 = vmul.f32 %v1057, %v874
    %v1060 = vadd.f32 %v1050, %v1059
    %s1061 = scalar_lea.vmem [#allocation2], 72
    %v1062 = vld [vmem:[%s1061] sm:$0xff]
    %v1063 = vld [vmem:[%s1061 + $0x8] sm:$0xff]
    %v1064 = vld [vmem:[%s1061 + $0x10] sm:$0xff]
    %1065 = vmatprep.subr.mxu0 %v135
    %1066 = vmatpush1.msra.mxu0 %v134
    %1067 = vmatprep.subr.mxu0 %v138
    %1068 = vmatpush1.msra.mxu0 %v137
    %1069 = vmatprep.subr.mxu0 %v141
    %1070 = vmatpush1.msra.mxu0 %v140
    %1071 = vmatprep.subr.mxu0 %v144
    %1072 = vmatpush1.msra.mxu0 %v143
    %1073 = vmatprep.subr.mxu0 %v147
    %1074 = vmatpush1.msra.mxu0 %v146
    %1075 = vmatprep.subr.mxu0 %v150
    %1076 = vmatpush1.msra.mxu0 %v149
    %1077 = vmatprep.subr.mxu0 %v153
    %1078 = vmatpush1.msra.mxu0 %v152
    %1079 = vmatprep.subr.mxu0 %v156
    %1080 = vmatpush1.msra.mxu0 %v155
    %1081 = vmatprep.subr.mxu0 %v159
    %1082 = vmatpush1.msra.mxu0 %v158
    %1083 = vmatprep.subr.mxu0 %v162
    %1084 = vmatpush1.msra.mxu0 %v161
    %1085 = vmatprep.subr.mxu0 %v165
    %1086 = vmatpush1.msra.mxu0 %v164
    %1087 = vmatprep.subr.mxu0 %v168
    %1088 = vmatpush1.msra.mxu0 %v167
    %1089 = vmatprep.subr.mxu0 %v171
    %1090 = vmatpush1.msra.mxu0 %v170
    %1091 = vmatprep.subr.mxu0 %v174
    %1092 = vmatpush1.msra.mxu0 %v173
    %1093 = vmatprep.subr.mxu0 %v177
    %1094 = vmatpush1.msra.mxu0 %v176
    %1095 = vmatprep.subr.mxu0 %v180
    %1096 = vmatpush1.msra.mxu0 %v179
    %1097 = vmatprep.subr.mxu0 0.0
    %1098 = vmatpush1.msra.mxu0 0.0
    %1099 = vmatprep.subr.mxu0 0.0
    %1100 = vmatpush1.msra.mxu0 0.0
    %1101 = vmatprep.subr.mxu0 0.0
    %1102 = vmatpush1.msra.mxu0 0.0
    %1103 = vmatprep.subr.mxu0 0.0
    %1104 = vmatpush1.msra.mxu0 0.0
    %1105 = vmatprep.subr.mxu0 0.0
    %1106 = vmatpush1.msra.mxu0 0.0
    %1107 = vmatprep.subr.mxu0 0.0
    %1108 = vmatpush1.msra.mxu0 0.0
    %1109 = vmatprep.subr.mxu0 0.0
    %1110 = vmatpush1.msra.mxu0 0.0
    %1111 = vmatprep.subr.mxu0 0.0
    %1112 = vmatpush1.msra.mxu0 0.0
    %1113 = vmatprep.subr.mxu0 0.0
    %1114 = vmatpush1.msra.mxu0 0.0
    %1115 = vmatprep.subr.mxu0 0.0
    %1116 = vmatpush1.msra.mxu0 0.0
    %1117 = vmatprep.subr.mxu0 0.0
    %1118 = vmatpush1.msra.mxu0 0.0
    %1119 = vmatprep.subr.mxu0 0.0
    %1120 = vmatpush1.msra.mxu0 0.0
    %1121 = vmatprep.subr.mxu0 0.0
    %1122 = vmatpush1.msra.mxu0 0.0
    %1123 = vmatprep.subr.mxu0 0.0
    %1124 = vmatpush1.msra.mxu0 0.0
    %1125 = vmatprep.subr.mxu0 0.0
    %1126 = vmatpush1.msra.mxu0 0.0
    %1127 = vmatprep.subr.mxu0 0.0
    %1128 = vmatpush1.msra.mxu0 0.0
    %1129 = vmatprep.mubr.f32.mxu0 0.0
    %1130 = vmatmul.mubr.f32.gmra.mrb[0].mxu0 %v1060
    %v1131 = vpop.f32.mrb[0].mxu0
    %v1132 = vadd.f32 0.0, %v1131
    %v1133 = vpop.f32.mrb[0].mxu0
    %v1134 = vadd.f32 0.0, %v1133
    %1135 = vdwg.mxu0
    %1136 = vmatprep.subr.mxu0 0.0
    %1137 = vmatpush1.msra.mxu0 %v136
    %1138 = vmatprep.subr.mxu0 0.0
    %1139 = vmatpush1.msra.mxu0 %v139
    %1140 = vmatprep.subr.mxu0 0.0
    %1141 = vmatpush1.msra.mxu0 %v142
    %1142 = vmatprep.subr.mxu0 0.0
    %1143 = vmatpush1.msra.mxu0 %v145
    %1144 = vmatprep.subr.mxu0 0.0
    %1145 = vmatpush1.msra.mxu0 %v148
    %1146 = vmatprep.subr.mxu0 0.0
    %1147 = vmatpush1.msra.mxu0 %v151
    %1148 = vmatprep.subr.mxu0 0.0
    %1149 = vmatpush1.msra.mxu0 %v154
    %1150 = vmatprep.subr.mxu0 0.0
    %1151 = vmatpush1.msra.mxu0 %v157
    %1152 = vmatprep.subr.mxu0 0.0
    %1153 = vmatpush1.msra.mxu0 %v160
    %1154 = vmatprep.subr.mxu0 0.0
    %1155 = vmatpush1.msra.mxu0 %v163
    %1156 = vmatprep.subr.mxu0 0.0
    %1157 = vmatpush1.msra.mxu0 %v166
    %1158 = vmatprep.subr.mxu0 0.0
    %1159 = vmatpush1.msra.mxu0 %v169
    %1160 = vmatprep.subr.mxu0 0.0
    %1161 = vmatpush1.msra.mxu0 %v172
    %1162 = vmatprep.subr.mxu0 0.0
    %1163 = vmatpush1.msra.mxu0 %v175
    %1164 = vmatprep.subr.mxu0 0.0
    %1165 = vmatpush1.msra.mxu0 %v178
    %1166 = vmatprep.subr.mxu0 0.0
    %1167 = vmatpush1.msra.mxu0 %v181
    %1168 = vmatprep.subr.mxu0 0.0
    %1169 = vmatpush1.msra.mxu0 0.0
    %1170 = vmatprep.subr.mxu0 0.0
    %1171 = vmatpush1.msra.mxu0 0.0
    %1172 = vmatprep.subr.mxu0 0.0
    %1173 = vmatpush1.msra.mxu0 0.0
    %1174 = vmatprep.subr.mxu0 0.0
    %1175 = vmatpush1.msra.mxu0 0.0
    %1176 = vmatprep.subr.mxu0 0.0
    %1177 = vmatpush1.msra.mxu0 0.0
    %1178 = vmatprep.subr.mxu0 0.0
    %1179 = vmatpush1.msra.mxu0 0.0
    %1180 = vmatprep.subr.mxu0 0.0
    %1181 = vmatpush1.msra.mxu0 0.0
    %1182 = vmatprep.subr.mxu0 0.0
    %1183 = vmatpush1.msra.mxu0 0.0
    %1184 = vmatprep.subr.mxu0 0.0
    %1185 = vmatpush1.msra.mxu0 0.0
    %1186 = vmatprep.subr.mxu0 0.0
    %1187 = vmatpush1.msra.mxu0 0.0
    %1188 = vmatprep.subr.mxu0 0.0
    %1189 = vmatpush1.msra.mxu0 0.0
    %1190 = vmatprep.subr.mxu0 0.0
    %1191 = vmatpush1.msra.mxu0 0.0
    %1192 = vmatprep.subr.mxu0 0.0
    %1193 = vmatpush1.msra.mxu0 0.0
    %1194 = vmatprep.subr.mxu0 0.0
    %1195 = vmatpush1.msra.mxu0 0.0
    %1196 = vmatprep.subr.mxu0 0.0
    %1197 = vmatpush1.msra.mxu0 0.0
    %1198 = vmatprep.subr.mxu0 0.0
    %1199 = vmatpush1.msra.mxu0 0.0
    %1200 = vmatprep.mubr.f32.mxu0 0.0
    %1201 = vmatmul.mubr.f32.gmra.mrb[0].mxu0 %v1060
    %v1202 = vpop.f32.mrb[0].mxu0
    %v1203 = vadd.f32 0.0, %v1202
    %v1204 = vpop.f32.mrb[0].mxu0
    %1205 = vdwg.mxu0
    %v1206 = vadd.f32 %v1062, %v1132
    %v1207 = vxor.u32 %v1206, 2147483648
    %v1208 = vmul.f32 %v1207, 1.442695
    %v1209 = vpow.pop %v1208
    %v1210 = vadd.f32 %v1209, 1.0
    %v1211 = vrcp.pop %v1210
    %v1212 = vmul.f32 1.0, %v1211
    %v1213 = vadd.f32 %v1063, %v1134
    %v1214 = vxor.u32 %v1213, 2147483648
    %v1215 = vmul.f32 %v1214, 1.442695
    %v1216 = vpow.pop %v1215
    %v1217 = vadd.f32 %v1216, 1.0
    %v1218 = vrcp.pop %v1217
    %v1219 = vmul.f32 1.0, %v1218
    %v1220 = vadd.f32 %v1203, %v661
    %v1221 = vmul.f32 %v1212, %v1220
    %v1222 = vadd.f32 %v1064, %v1221
    %v1223 = vtanh.pop %v1222
    %v1224 = vsub.f32 1.0, %v1219
    %v1225 = vmul.f32 %v1224, %v1223
    %v1226 = vmul.f32 %v1219, %v1060
    %v1227 = vadd.f32 %v1225, %v1226
    %vm1228 = vcmp.gt.s32.totalorder %v183, 3
    %v1229 = vsel %vm1228, 1, 0
    %v1230 = vcvt.s32.f32 %v1229
    %1232 = vset.pattern.permute.xlu0 0
    %1233 = vperm.xlu0 %1232, %v1230
    %v1234 = vpop.permute.xlu0 %1233
    %v1236 = vmul.f32 %v1234, %v1227
    %s1237 = scalar_lea.vmem [#allocation3], 24
    %1238 = vst [vmem:[%s1237] sm:$0xff] %v1236
    %v1239 = vsub.f32 1.0, %v1230
    %1241 = vset.pattern.permute.xlu0 0
    %1242 = vperm.xlu0 %1241, %v1239
    %v1243 = vpop.permute.xlu0 %1242
    %v1245 = vmul.f32 %v1243, %v1060
    %v1246 = vadd.f32 %v1236, %v1245
    %s1247 = scalar_lea.vmem [#allocation2], 96
    %v1248 = vld [vmem:[%s1247] sm:$0xff]
    %v1249 = vld [vmem:[%s1247 + $0x8] sm:$0xff]
    %v1250 = vld [vmem:[%s1247 + $0x10] sm:$0xff]
    %1251 = vmatprep.subr.mxu0 %v135
    %1252 = vmatpush1.msra.mxu0 %v134
    %1253 = vmatprep.subr.mxu0 %v138
    %1254 = vmatpush1.msra.mxu0 %v137
    %1255 = vmatprep.subr.mxu0 %v141
    %1256 = vmatpush1.msra.mxu0 %v140
    %1257 = vmatprep.subr.mxu0 %v144
    %1258 = vmatpush1.msra.mxu0 %v143
    %1259 = vmatprep.subr.mxu0 %v147
    %1260 = vmatpush1.msra.mxu0 %v146
    %1261 = vmatprep.subr.mxu0 %v150
    %1262 = vmatpush1.msra.mxu0 %v149
    %1263 = vmatprep.subr.mxu0 %v153
    %1264 = vmatpush1.msra.mxu0 %v152
    %1265 = vmatprep.subr.mxu0 %v156
    %1266 = vmatpush1.msra.mxu0 %v155
    %1267 = vmatprep.subr.mxu0 %v159
    %1268 = vmatpush1.msra.mxu0 %v158
    %1269 = vmatprep.subr.mxu0 %v162
    %1270 = vmatpush1.msra.mxu0 %v161
    %1271 = vmatprep.subr.mxu0 %v165
    %1272 = vmatpush1.msra.mxu0 %v164
    %1273 = vmatprep.subr.mxu0 %v168
    %1274 = vmatpush1.msra.mxu0 %v167
    %1275 = vmatprep.subr.mxu0 %v171
    %1276 = vmatpush1.msra.mxu0 %v170
    %1277 = vmatprep.subr.mxu0 %v174
    %1278 = vmatpush1.msra.mxu0 %v173
    %1279 = vmatprep.subr.mxu0 %v177
    %1280 = vmatpush1.msra.mxu0 %v176
    %1281 = vmatprep.subr.mxu0 %v180
    %1282 = vmatpush1.msra.mxu0 %v179
    %1283 = vmatprep.subr.mxu0 0.0
    %1284 = vmatpush1.msra.mxu0 0.0
    %1285 = vmatprep.subr.mxu0 0.0
    %1286 = vmatpush1.msra.mxu0 0.0
    %1287 = vmatprep.subr.mxu0 0.0
    %1288 = vmatpush1.msra.mxu0 0.0
    %1289 = vmatprep.subr.mxu0 0.0
    %1290 = vmatpush1.msra.mxu0 0.0
    %1291 = vmatprep.subr.mxu0 0.0
    %1292 = vmatpush1.msra.mxu0 0.0
    %1293 = vmatprep.subr.mxu0 0.0
    %1294 = vmatpush1.msra.mxu0 0.0
    %1295 = vmatprep.subr.mxu0 0.0
    %1296 = vmatpush1.msra.mxu0 0.0
    %1297 = vmatprep.subr.mxu0 0.0
    %1298 = vmatpush1.msra.mxu0 0.0
    %1299 = vmatprep.subr.mxu0 0.0
    %1300 = vmatpush1.msra.mxu0 0.0
    %1301 = vmatprep.subr.mxu0 0.0
    %1302 = vmatpush1.msra.mxu0 0.0
    %1303 = vmatprep.subr.mxu0 0.0
    %1304 = vmatpush1.msra.mxu0 0.0
    %1305 = vmatprep.subr.mxu0 0.0
    %1306 = vmatpush1.msra.mxu0 0.0
    %1307 = vmatprep.subr.mxu0 0.0
    %1308 = vmatpush1.msra.mxu0 0.0
    %1309 = vmatprep.subr.mxu0 0.0
    %1310 = vmatpush1.msra.mxu0 0.0
    %1311 = vmatprep.subr.mxu0 0.0
    %1312 = vmatpush1.msra.mxu0 0.0
    %1313 = vmatprep.subr.mxu0 0.0
    %1314 = vmatpush1.msra.mxu0 0.0
    %1315 = vmatprep.mubr.f32.mxu0 0.0
    %1316 = vmatmul.mubr.f32.gmra.mrb[0].mxu0 %v1246
    %v1317 = vpop.f32.mrb[0].mxu0
    %v1318 = vadd.f32 0.0, %v1317
    %v1319 = vpop.f32.mrb[0].mxu0
    %v1320 = vadd.f32 0.0, %v1319
    %1321 = vdwg.mxu0
    %1322 = vmatprep.subr.mxu0 0.0
    %1323 = vmatpush1.msra.mxu0 %v136
    %1324 = vmatprep.subr.mxu0 0.0
    %1325 = vmatpush1.msra.mxu0 %v139
    %1326 = vmatprep.subr.mxu0 0.0
    %1327 = vmatpush1.msra.mxu0 %v142
    %1328 = vmatprep.subr.mxu0 0.0
    %1329 = vmatpush1.msra.mxu0 %v145
    %1330 = vmatprep.subr.mxu0 0.0
    %1331 = vmatpush1.msra.mxu0 %v148
    %1332 = vmatprep.subr.mxu0 0.0
    %1333 = vmatpush1.msra.mxu0 %v151
    %1334 = vmatprep.subr.mxu0 0.0
    %1335 = vmatpush1.msra.mxu0 %v154
    %1336 = vmatprep.subr.mxu0 0.0
    %1337 = vmatpush1.msra.mxu0 %v157
    %1338 = vmatprep.subr.mxu0 0.0
    %1339 = vmatpush1.msra.mxu0 %v160
    %1340 = vmatprep.subr.mxu0 0.0
    %1341 = vmatpush1.msra.mxu0 %v163
    %1342 = vmatprep.subr.mxu0 0.0
    %1343 = vmatpush1.msra.mxu0 %v166
    %1344 = vmatprep.subr.mxu0 0.0
    %1345 = vmatpush1.msra.mxu0 %v169
    %1346 = vmatprep.subr.mxu0 0.0
    %1347 = vmatpush1.msra.mxu0 %v172
    %1348 = vmatprep.subr.mxu0 0.0
    %1349 = vmatpush1.msra.mxu0 %v175
    %1350 = vmatprep.subr.mxu0 0.0
    %1351 = vmatpush1.msra.mxu0 %v178
    %1352 = vmatprep.subr.mxu0 0.0
    %1353 = vmatpush1.msra.mxu0 %v181
    %1354 = vmatprep.subr.mxu0 0.0
    %1355 = vmatpush1.msra.mxu0 0.0
    %1356 = vmatprep.subr.mxu0 0.0
    %1357 = vmatpush1.msra.mxu0 0.0
    %1358 = vmatprep.subr.mxu0 0.0
    %1359 = vmatpush1.msra.mxu0 0.0
    %1360 = vmatprep.subr.mxu0 0.0
    %1361 = vmatpush1.msra.mxu0 0.0
    %1362 = vmatprep.subr.mxu0 0.0
    %1363 = vmatpush1.msra.mxu0 0.0
    %1364 = vmatprep.subr.mxu0 0.0
    %1365 = vmatpush1.msra.mxu0 0.0
    %1366 = vmatprep.subr.mxu0 0.0
    %1367 = vmatpush1.msra.mxu0 0.0
    %1368 = vmatprep.subr.mxu0 0.0
    %1369 = vmatpush1.msra.mxu0 0.0
    %1370 = vmatprep.subr.mxu0 0.0
    %1371 = vmatpush1.msra.mxu0 0.0
    %1372 = vmatprep.subr.mxu0 0.0
    %1373 = vmatpush1.msra.mxu0 0.0
    %1374 = vmatprep.subr.mxu0 0.0
    %1375 = vmatpush1.msra.mxu0 0.0
    %1376 = vmatprep.subr.mxu0 0.0
    %1377 = vmatpush1.msra.mxu0 0.0
    %1378 = vmatprep.subr.mxu0 0.0
    %1379 = vmatpush1.msra.mxu0 0.0
    %1380 = vmatprep.subr.mxu0 0.0
    %1381 = vmatpush1.msra.mxu0 0.0
    %1382 = vmatprep.subr.mxu0 0.0
    %1383 = vmatpush1.msra.mxu0 0.0
    %1384 = vmatprep.subr.mxu0 0.0
    %1385 = vmatpush1.msra.mxu0 0.0
    %1386 = vmatprep.mubr.f32.mxu0 0.0
    %1387 = vmatmul.mubr.f32.gmra.mrb[0].mxu0 %v1246
    %v1388 = vpop.f32.mrb[0].mxu0
    %v1389 = vadd.f32 0.0, %v1388
    %v1390 = vpop.f32.mrb[0].mxu0
    %1391 = vdwg.mxu0
    %v1392 = vadd.f32 %v1248, %v1318
    %v1393 = vxor.u32 %v1392, 2147483648
    %v1394 = vmul.f32 %v1393, 1.442695
    %v1395 = vpow.pop %v1394
    %v1396 = vadd.f32 %v1395, 1.0
    %v1397 = vrcp.pop %v1396
    %v1398 = vmul.f32 1.0, %v1397
    %v1399 = vadd.f32 %v1249, %v1320
    %v1400 = vxor.u32 %v1399, 2147483648
    %v1401 = vmul.f32 %v1400, 1.442695
    %v1402 = vpow.pop %v1401
    %v1403 = vadd.f32 %v1402, 1.0
    %v1404 = vrcp.pop %v1403
    %v1405 = vmul.f32 1.0, %v1404
    %v1406 = vadd.f32 %v1389, %v661
    %v1407 = vmul.f32 %v1398, %v1406
    %v1408 = vadd.f32 %v1250, %v1407
    %v1409 = vtanh.pop %v1408
    %v1410 = vsub.f32 1.0, %v1405
    %v1411 = vmul.f32 %v1410, %v1409
    %v1412 = vmul.f32 %v1405, %v1246
    %v1413 = vadd.f32 %v1411, %v1412
    %vm1414 = vcmp.gt.s32.totalorder %v183, 4
    %v1415 = vsel %vm1414, 1, 0
    %v1416 = vcvt.s32.f32 %v1415
    %1418 = vset.pattern.permute.xlu0 0
    %1419 = vperm.xlu0 %1418, %v1416
    %v1420 = vpop.permute.xlu0 %1419
    %v1422 = vmul.f32 %v1420, %v1413
    %s1423 = scalar_lea.vmem [#allocation3], 32
    %1424 = vst [vmem:[%s1423] sm:$0xff] %v1422
    %v1425 = vsub.f32 1.0, %v1416
    %1427 = vset.pattern.permute.xlu0 0
    %1428 = vperm.xlu0 %1427, %v1425
    %v1429 = vpop.permute.xlu0 %1428
    %v1431 = vmul.f32 %v1429, %v1246
    %v1432 = vadd.f32 %v1422, %v1431
    %s1433 = scalar_lea.vmem [#allocation2], 120
    %v1434 = vld [vmem:[%s1433] sm:$0xff]
    %v1435 = vld [vmem:[%s1433 + $0x8] sm:$0xff]
    %v1436 = vld [vmem:[%s1433 + $0x10] sm:$0xff]
    %1437 = vmatprep.subr.mxu0 %v135
    %1438 = vmatpush1.msra.mxu0 %v134
    %1439 = vmatprep.subr.mxu0 %v138
    %1440 = vmatpush1.msra.mxu0 %v137
    %1441 = vmatprep.subr.mxu0 %v141
    %1442 = vmatpush1.msra.mxu0 %v140
    %1443 = vmatprep.subr.mxu0 %v144
    %1444 = vmatpush1.msra.mxu0 %v143
    %1445 = vmatprep.subr.mxu0 %v147
    %1446 = vmatpush1.msra.mxu0 %v146
    %1447 = vmatprep.subr.mxu0 %v150
    %1448 = vmatpush1.msra.mxu0 %v149
    %1449 = vmatprep.subr.mxu0 %v153
    %1450 = vmatpush1.msra.mxu0 %v152
    %1451 = vmatprep.subr.mxu0 %v156
    %1452 = vmatpush1.msra.mxu0 %v155
    %1453 = vmatprep.subr.mxu0 %v159
    %1454 = vmatpush1.msra.mxu0 %v158
    %1455 = vmatprep.subr.mxu0 %v162
    %1456 = vmatpush1.msra.mxu0 %v161
    %1457 = vmatprep.subr.mxu0 %v165
    %1458 = vmatpush1.msra.mxu0 %v164
    %1459 = vmatprep.subr.mxu0 %v168
    %1460 = vmatpush1.msra.mxu0 %v167
    %1461 = vmatprep.subr.mxu0 %v171
    %1462 = vmatpush1.msra.mxu0 %v170
    %1463 = vmatprep.subr.mxu0 %v174
    %1464 = vmatpush1.msra.mxu0 %v173
    %1465 = vmatprep.subr.mxu0 %v177
    %1466 = vmatpush1.msra.mxu0 %v176
    %1467 = vmatprep.subr.mxu0 %v180
    %1468 = vmatpush1.msra.mxu0 %v179
    %1469 = vmatprep.subr.mxu0 0.0
    %1470 = vmatpush1.msra.mxu0 0.0
    %1471 = vmatprep.subr.mxu0 0.0
    %1472 = vmatpush1.msra.mxu0 0.0
    %1473 = vmatprep.subr.mxu0 0.0
    %1474 = vmatpush1.msra.mxu0 0.0
    %1475 = vmatprep.subr.mxu0 0.0
    %1476 = vmatpush1.msra.mxu0 0.0
    %1477 = vmatprep.subr.mxu0 0.0
    %1478 = vmatpush1.msra.mxu0 0.0
    %1479 = vmatprep.subr.mxu0 0.0
    %1480 = vmatpush1.msra.mxu0 0.0
    %1481 = vmatprep.subr.mxu0 0.0
    %1482 = vmatpush1.msra.mxu0 0.0
    %1483 = vmatprep.subr.mxu0 0.0
    %1484 = vmatpush1.msra.mxu0 0.0
    %1485 = vmatprep.subr.mxu0 0.0
    %1486 = vmatpush1.msra.mxu0 0.0
    %1487 = vmatprep.subr.mxu0 0.0
    %1488 = vmatpush1.msra.mxu0 0.0
    %1489 = vmatprep.subr.mxu0 0.0
    %1490 = vmatpush1.msra.mxu0 0.0
    %1491 = vmatprep.subr.mxu0 0.0
    %1492 = vmatpush1.msra.mxu0 0.0
    %1493 = vmatprep.subr.mxu0 0.0
    %1494 = vmatpush1.msra.mxu0 0.0
    %1495 = vmatprep.subr.mxu0 0.0
    %1496 = vmatpush1.msra.mxu0 0.0
    %1497 = vmatprep.subr.mxu0 0.0
    %1498 = vmatpush1.msra.mxu0 0.0
    %1499 = vmatprep.subr.mxu0 0.0
    %1500 = vmatpush1.msra.mxu0 0.0
    %1501 = vmatprep.mubr.f32.mxu0 0.0
    %1502 = vmatmul.mubr.f32.gmra.mrb[0].mxu0 %v1432
    %v1503 = vpop.f32.mrb[0].mxu0
    %v1504 = vadd.f32 0.0, %v1503
    %v1505 = vpop.f32.mrb[0].mxu0
    %v1506 = vadd.f32 0.0, %v1505
    %1507 = vdwg.mxu0
    %1508 = vmatprep.subr.mxu0 0.0
    %1509 = vmatpush1.msra.mxu0 %v136
    %1510 = vmatprep.subr.mxu0 0.0
    %1511 = vmatpush1.msra.mxu0 %v139
    %1512 = vmatprep.subr.mxu0 0.0
    %1513 = vmatpush1.msra.mxu0 %v142
    %1514 = vmatprep.subr.mxu0 0.0
    %1515 = vmatpush1.msra.mxu0 %v145
    %1516 = vmatprep.subr.mxu0 0.0
    %1517 = vmatpush1.msra.mxu0 %v148
    %1518 = vmatprep.subr.mxu0 0.0
    %1519 = vmatpush1.msra.mxu0 %v151
    %1520 = vmatprep.subr.mxu0 0.0
    %1521 = vmatpush1.msra.mxu0 %v154
    %1522 = vmatprep.subr.mxu0 0.0
    %1523 = vmatpush1.msra.mxu0 %v157
    %1524 = vmatprep.subr.mxu0 0.0
    %1525 = vmatpush1.msra.mxu0 %v160
    %1526 = vmatprep.subr.mxu0 0.0
    %1527 = vmatpush1.msra.mxu0 %v163
    %1528 = vmatprep.subr.mxu0 0.0
    %1529 = vmatpush1.msra.mxu0 %v166
    %1530 = vmatprep.subr.mxu0 0.0
    %1531 = vmatpush1.msra.mxu0 %v169
    %1532 = vmatprep.subr.mxu0 0.0
    %1533 = vmatpush1.msra.mxu0 %v172
    %1534 = vmatprep.subr.mxu0 0.0
    %1535 = vmatpush1.msra.mxu0 %v175
    %1536 = vmatprep.subr.mxu0 0.0
    %1537 = vmatpush1.msra.mxu0 %v178
    %1538 = vmatprep.subr.mxu0 0.0
    %1539 = vmatpush1.msra.mxu0 %v181
    %1540 = vmatprep.subr.mxu0 0.0
    %1541 = vmatpush1.msra.mxu0 0.0
    %1542 = vmatprep.subr.mxu0 0.0
    %1543 = vmatpush1.msra.mxu0 0.0
    %1544 = vmatprep.subr.mxu0 0.0
    %1545 = vmatpush1.msra.mxu0 0.0
    %1546 = vmatprep.subr.mxu0 0.0
    %1547 = vmatpush1.msra.mxu0 0.0
    %1548 = vmatprep.subr.mxu0 0.0
    %1549 = vmatpush1.msra.mxu0 0.0
    %1550 = vmatprep.subr.mxu0 0.0
    %1551 = vmatpush1.msra.mxu0 0.0
    %1552 = vmatprep.subr.mxu0 0.0
    %1553 = vmatpush1.msra.mxu0 0.0
    %1554 = vmatprep.subr.mxu0 0.0
    %1555 = vmatpush1.msra.mxu0 0.0
    %1556 = vmatprep.subr.mxu0 0.0
    %1557 = vmatpush1.msra.mxu0 0.0
    %1558 = vmatprep.subr.mxu0 0.0
    %1559 = vmatpush1.msra.mxu0 0.0
    %1560 = vmatprep.subr.mxu0 0.0
    %1561 = vmatpush1.msra.mxu0 0.0
    %1562 = vmatprep.subr.mxu0 0.0
    %1563 = vmatpush1.msra.mxu0 0.0
    %1564 = vmatprep.subr.mxu0 0.0
    %1565 = vmatpush1.msra.mxu0 0.0
    %1566 = vmatprep.subr.mxu0 0.0
    %1567 = vmatpush1.msra.mxu0 0.0
    %1568 = vmatprep.subr.mxu0 0.0
    %1569 = vmatpush1.msra.mxu0 0.0
    %1570 = vmatprep.subr.mxu0 0.0
    %1571 = vmatpush1.msra.mxu0 0.0
    %1572 = vmatprep.mubr.f32.mxu0 0.0
    %1573 = vmatmul.mubr.f32.gmra.mrb[0].mxu0 %v1432
    %v1574 = vpop.f32.mrb[0].mxu0
    %v1575 = vadd.f32 0.0, %v1574
    %v1576 = vpop.f32.mrb[0].mxu0
    %1577 = vdwg.mxu0
    %v1578 = vadd.f32 %v1434, %v1504
    %v1579 = vxor.u32 %v1578, 2147483648
    %v1580 = vmul.f32 %v1579, 1.442695
    %v1581 = vpow.pop %v1580
    %v1582 = vadd.f32 %v1581, 1.0
    %v1583 = vrcp.pop %v1582
    %v1584 = vmul.f32 1.0, %v1583
    %v1585 = vadd.f32 %v1435, %v1506
    %v1586 = vxor.u32 %v1585, 2147483648
    %v1587 = vmul.f32 %v1586, 1.442695
    %v1588 = vpow.pop %v1587
    %v1589 = vadd.f32 %v1588, 1.0
    %v1590 = vrcp.pop %v1589
    %v1591 = vmul.f32 1.0, %v1590
    %v1592 = vadd.f32 %v1575, %v661
    %v1593 = vmul.f32 %v1584, %v1592
    %v1594 = vadd.f32 %v1436, %v1593
    %v1595 = vtanh.pop %v1594
    %v1596 = vsub.f32 1.0, %v1591
    %v1597 = vmul.f32 %v1596, %v1595
    %v1598 = vmul.f32 %v1591, %v1432
    %v1599 = vadd.f32 %v1597, %v1598
    %vm1600 = vcmp.gt.s32.totalorder %v183, 5
    %v1601 = vsel %vm1600, 1, 0
    %v1602 = vcvt.s32.f32 %v1601
    %1604 = vset.pattern.permute.xlu0 0
    %1605 = vperm.xlu0 %1604, %v1602
    %v1606 = vpop.permute.xlu0 %1605
    %v1608 = vmul.f32 %v1606, %v1599
    %s1609 = scalar_lea.vmem [#allocation3], 40
    %1610 = vst [vmem:[%s1609] sm:$0xff] %v1608
    %v1611 = vsub.f32 1.0, %v1602
    %1613 = vset.pattern.permute.xlu0 0
    %1614 = vperm.xlu0 %1613, %v1611
    %v1615 = vpop.permute.xlu0 %1614
    %v1617 = vmul.f32 %v1615, %v1432
    %v1618 = vadd.f32 %v1608, %v1617
    %s1619 = scalar_lea.vmem [#allocation2], 144
    %v1620 = vld [vmem:[%s1619] sm:$0xff]
    %v1621 = vld [vmem:[%s1619 + $0x8] sm:$0xff]
    %v1622 = vld [vmem:[%s1619 + $0x10] sm:$0xff]
    %1623 = vmatprep.subr.mxu0 %v135
    %1624 = vmatpush1.msra.mxu0 %v134
    %1625 = vmatprep.subr.mxu0 %v138
    %1626 = vmatpush1.msra.mxu0 %v137
    %1627 = vmatprep.subr.mxu0 %v141
    %1628 = vmatpush1.msra.mxu0 %v140
    %1629 = vmatprep.subr.mxu0 %v144
    %1630 = vmatpush1.msra.mxu0 %v143
    %1631 = vmatprep.subr.mxu0 %v147
    %1632 = vmatpush1.msra.mxu0 %v146
    %1633 = vmatprep.subr.mxu0 %v150
    %1634 = vmatpush1.msra.mxu0 %v149
    %1635 = vmatprep.subr.mxu0 %v153
    %1636 = vmatpush1.msra.mxu0 %v152
    %1637 = vmatprep.subr.mxu0 %v156
    %1638 = vmatpush1.msra.mxu0 %v155
    %1639 = vmatprep.subr.mxu0 %v159
    %1640 = vmatpush1.msra.mxu0 %v158
    %1641 = vmatprep.subr.mxu0 %v162
    %1642 = vmatpush1.msra.mxu0 %v161
    %1643 = vmatprep.subr.mxu0 %v165
    %1644 = vmatpush1.msra.mxu0 %v164
    %1645 = vmatprep.subr.mxu0 %v168
    %1646 = vmatpush1.msra.mxu0 %v167
    %1647 = vmatprep.subr.mxu0 %v171
    %1648 = vmatpush1.msra.mxu0 %v170
    %1649 = vmatprep.subr.mxu0 %v174
    %1650 = vmatpush1.msra.mxu0 %v173
    %1651 = vmatprep.subr.mxu0 %v177
    %1652 = vmatpush1.msra.mxu0 %v176
    %1653 = vmatprep.subr.mxu0 %v180
    %1654 = vmatpush1.msra.mxu0 %v179
    %1655 = vmatprep.subr.mxu0 0.0
    %1656 = vmatpush1.msra.mxu0 0.0
    %1657 = vmatprep.subr.mxu0 0.0
    %1658 = vmatpush1.msra.mxu0 0.0
    %1659 = vmatprep.subr.mxu0 0.0
    %1660 = vmatpush1.msra.mxu0 0.0
    %1661 = vmatprep.subr.mxu0 0.0
    %1662 = vmatpush1.msra.mxu0 0.0
    %1663 = vmatprep.subr.mxu0 0.0
    %1664 = vmatpush1.msra.mxu0 0.0
    %1665 = vmatprep.subr.mxu0 0.0
    %1666 = vmatpush1.msra.mxu0 0.0
    %1667 = vmatprep.subr.mxu0 0.0
    %1668 = vmatpush1.msra.mxu0 0.0
    %1669 = vmatprep.subr.mxu0 0.0
    %1670 = vmatpush1.msra.mxu0 0.0
    %1671 = vmatprep.subr.mxu0 0.0
    %1672 = vmatpush1.msra.mxu0 0.0
    %1673 = vmatprep.subr.mxu0 0.0
    %1674 = vmatpush1.msra.mxu0 0.0
    %1675 = vmatprep.subr.mxu0 0.0
    %1676 = vmatpush1.msra.mxu0 0.0
    %1677 = vmatprep.subr.mxu0 0.0
    %1678 = vmatpush1.msra.mxu0 0.0
    %1679 = vmatprep.subr.mxu0 0.0
    %1680 = vmatpush1.msra.mxu0 0.0
    %1681 = vmatprep.subr.mxu0 0.0
    %1682 = vmatpush1.msra.mxu0 0.0
    %1683 = vmatprep.subr.mxu0 0.0
    %1684 = vmatpush1.msra.mxu0 0.0
    %1685 = vmatprep.subr.mxu0 0.0
    %1686 = vmatpush1.msra.mxu0 0.0
    %1687 = vmatprep.mubr.f32.mxu0 0.0
    %1688 = vmatmul.mubr.f32.gmra.mrb[0].mxu0 %v1618
    %v1689 = vpop.f32.mrb[0].mxu0
    %v1690 = vadd.f32 0.0, %v1689
    %v1691 = vpop.f32.mrb[0].mxu0
    %v1692 = vadd.f32 0.0, %v1691
    %1693 = vdwg.mxu0
    %1694 = vmatprep.subr.mxu0 0.0
    %1695 = vmatpush1.msra.mxu0 %v136
    %1696 = vmatprep.subr.mxu0 0.0
    %1697 = vmatpush1.msra.mxu0 %v139
    %1698 = vmatprep.subr.mxu0 0.0
    %1699 = vmatpush1.msra.mxu0 %v142
    %1700 = vmatprep.subr.mxu0 0.0
    %1701 = vmatpush1.msra.mxu0 %v145
    %1702 = vmatprep.subr.mxu0 0.0
    %1703 = vmatpush1.msra.mxu0 %v148
    %1704 = vmatprep.subr.mxu0 0.0
    %1705 = vmatpush1.msra.mxu0 %v151
    %1706 = vmatprep.subr.mxu0 0.0
    %1707 = vmatpush1.msra.mxu0 %v154
    %1708 = vmatprep.subr.mxu0 0.0
    %1709 = vmatpush1.msra.mxu0 %v157
    %1710 = vmatprep.subr.mxu0 0.0
    %1711 = vmatpush1.msra.mxu0 %v160
    %1712 = vmatprep.subr.mxu0 0.0
    %1713 = vmatpush1.msra.mxu0 %v163
    %1714 = vmatprep.subr.mxu0 0.0
    %1715 = vmatpush1.msra.mxu0 %v166
    %1716 = vmatprep.subr.mxu0 0.0
    %1717 = vmatpush1.msra.mxu0 %v169
    %1718 = vmatprep.subr.mxu0 0.0
    %1719 = vmatpush1.msra.mxu0 %v172
    %1720 = vmatprep.subr.mxu0 0.0
    %1721 = vmatpush1.msra.mxu0 %v175
    %1722 = vmatprep.subr.mxu0 0.0
    %1723 = vmatpush1.msra.mxu0 %v178
    %1724 = vmatprep.subr.mxu0 0.0
    %1725 = vmatpush1.msra.mxu0 %v181
    %1726 = vmatprep.subr.mxu0 0.0
    %1727 = vmatpush1.msra.mxu0 0.0
    %1728 = vmatprep.subr.mxu0 0.0
    %1729 = vmatpush1.msra.mxu0 0.0
    %1730 = vmatprep.subr.mxu0 0.0
    %1731 = vmatpush1.msra.mxu0 0.0
    %1732 = vmatprep.subr.mxu0 0.0
    %1733 = vmatpush1.msra.mxu0 0.0
    %1734 = vmatprep.subr.mxu0 0.0
    %1735 = vmatpush1.msra.mxu0 0.0
    %1736 = vmatprep.subr.mxu0 0.0
    %1737 = vmatpush1.msra.mxu0 0.0
    %1738 = vmatprep.subr.mxu0 0.0
    %1739 = vmatpush1.msra.mxu0 0.0
    %1740 = vmatprep.subr.mxu0 0.0
    %1741 = vmatpush1.msra.mxu0 0.0
    %1742 = vmatprep.subr.mxu0 0.0
    %1743 = vmatpush1.msra.mxu0 0.0
    %1744 = vmatprep.subr.mxu0 0.0
    %1745 = vmatpush1.msra.mxu0 0.0
    %1746 = vmatprep.subr.mxu0 0.0
    %1747 = vmatpush1.msra.mxu0 0.0
    %1748 = vmatprep.subr.mxu0 0.0
    %1749 = vmatpush1.msra.mxu0 0.0
    %1750 = vmatprep.subr.mxu0 0.0
    %1751 = vmatpush1.msra.mxu0 0.0
    %1752 = vmatprep.subr.mxu0 0.0
    %1753 = vmatpush1.msra.mxu0 0.0
    %1754 = vmatprep.subr.mxu0 0.0
    %1755 = vmatpush1.msra.mxu0 0.0
    %1756 = vmatprep.subr.mxu0 0.0
    %1757 = vmatpush1.msra.mxu0 0.0
    %1758 = vmatprep.mubr.f32.mxu0 0.0
    %1759 = vmatmul.mubr.f32.gmra.mrb[0].mxu0 %v1618
    %v1760 = vpop.f32.mrb[0].mxu0
    %v1761 = vadd.f32 0.0, %v1760
    %v1762 = vpop.f32.mrb[0].mxu0
    %1763 = vdwg.mxu0
    %v1764 = vadd.f32 %v1620, %v1690
    %v1765 = vxor.u32 %v1764, 2147483648
    %v1766 = vmul.f32 %v1765, 1.442695
    %v1767 = vpow.pop %v1766
    %v1768 = vadd.f32 %v1767, 1.0
    %v1769 = vrcp.pop %v1768
    %v1770 = vmul.f32 1.0, %v1769
    %v1771 = vadd.f32 %v1621, %v1692
    %v1772 = vxor.u32 %v1771, 2147483648
    %v1773 = vmul.f32 %v1772, 1.442695
    %v1774 = vpow.pop %v1773
    %v1775 = vadd.f32 %v1774, 1.0
    %v1776 = vrcp.pop %v1775
    %v1777 = vmul.f32 1.0, %v1776
    %v1778 = vadd.f32 %v1761, %v661
    %v1779 = vmul.f32 %v1770, %v1778
    %v1780 = vadd.f32 %v1622, %v1779
    %v1781 = vtanh.pop %v1780
    %v1782 = vsub.f32 1.0, %v1777
    %v1783 = vmul.f32 %v1782, %v1781
    %v1784 = vmul.f32 %v1777, %v1618
    %v1785 = vadd.f32 %v1783, %v1784
    %vm1786 = vcmp.gt.s32.totalorder %v183, 6
    %v1787 = vsel %vm1786, 1, 0
    %v1788 = vcvt.s32.f32 %v1787
    %1790 = vset.pattern.permute.xlu0 0
    %1791 = vperm.xlu0 %1790, %v1788
    %v1792 = vpop.permute.xlu0 %1791
    %v1794 = vmul.f32 %v1792, %v1785
    %s1795 = scalar_lea.vmem [#allocation3], 48
    %1796 = vst [vmem:[%s1795] sm:$0xff] %v1794
    %v1797 = vsub.f32 1.0, %v1788
    %1799 = vset.pattern.permute.xlu0 0
    %1800 = vperm.xlu0 %1799, %v1797
    %v1801 = vpop.permute.xlu0 %1800
    %v1803 = vmul.f32 %v1801, %v1618
    %v1804 = vadd.f32 %v1794, %v1803
    %s1805 = scalar_lea.vmem [#allocation2], 168
    %v1806 = vld [vmem:[%s1805] sm:$0xff]
    %v1807 = vld [vmem:[%s1805 + $0x8] sm:$0xff]
    %v1808 = vld [vmem:[%s1805 + $0x10] sm:$0xff]
    %1809 = vmatprep.subr.mxu0 %v135
    %1810 = vmatpush1.msra.mxu0 %v134
    %1811 = vmatprep.subr.mxu0 %v138
    %1812 = vmatpush1.msra.mxu0 %v137
    %1813 = vmatprep.subr.mxu0 %v141
    %1814 = vmatpush1.msra.mxu0 %v140
    %1815 = vmatprep.subr.mxu0 %v144
    %1816 = vmatpush1.msra.mxu0 %v143
    %1817 = vmatprep.subr.mxu0 %v147
    %1818 = vmatpush1.msra.mxu0 %v146
    %1819 = vmatprep.subr.mxu0 %v150
    %1820 = vmatpush1.msra.mxu0 %v149
    %1821 = vmatprep.subr.mxu0 %v153
    %1822 = vmatpush1.msra.mxu0 %v152
    %1823 = vmatprep.subr.mxu0 %v156
    %1824 = vmatpush1.msra.mxu0 %v155
    %1825 = vmatprep.subr.mxu0 %v159
    %1826 = vmatpush1.msra.mxu0 %v158
    %1827 = vmatprep.subr.mxu0 %v162
    %1828 = vmatpush1.msra.mxu0 %v161
    %1829 = vmatprep.subr.mxu0 %v165
    %1830 = vmatpush1.msra.mxu0 %v164
    %1831 = vmatprep.subr.mxu0 %v168
    %1832 = vmatpush1.msra.mxu0 %v167
    %1833 = vmatprep.subr.mxu0 %v171
    %1834 = vmatpush1.msra.mxu0 %v170
    %1835 = vmatprep.subr.mxu0 %v174
    %1836 = vmatpush1.msra.mxu0 %v173
    %1837 = vmatprep.subr.mxu0 %v177
    %1838 = vmatpush1.msra.mxu0 %v176
    %1839 = vmatprep.subr.mxu0 %v180
    %1840 = vmatpush1.msra.mxu0 %v179
    %1841 = vmatprep.subr.mxu0 0.0
    %1842 = vmatpush1.msra.mxu0 0.0
    %1843 = vmatprep.subr.mxu0 0.0
    %1844 = vmatpush1.msra.mxu0 0.0
    %1845 = vmatprep.subr.mxu0 0.0
    %1846 = vmatpush1.msra.mxu0 0.0
    %1847 = vmatprep.subr.mxu0 0.0
    %1848 = vmatpush1.msra.mxu0 0.0
    %1849 = vmatprep.subr.mxu0 0.0
    %1850 = vmatpush1.msra.mxu0 0.0
    %1851 = vmatprep.subr.mxu0 0.0
    %1852 = vmatpush1.msra.mxu0 0.0
    %1853 = vmatprep.subr.mxu0 0.0
    %1854 = vmatpush1.msra.mxu0 0.0
    %1855 = vmatprep.subr.mxu0 0.0
    %1856 = vmatpush1.msra.mxu0 0.0
    %1857 = vmatprep.subr.mxu0 0.0
    %1858 = vmatpush1.msra.mxu0 0.0
    %1859 = vmatprep.subr.mxu0 0.0
    %1860 = vmatpush1.msra.mxu0 0.0
    %1861 = vmatprep.subr.mxu0 0.0
    %1862 = vmatpush1.msra.mxu0 0.0
    %1863 = vmatprep.subr.mxu0 0.0
    %1864 = vmatpush1.msra.mxu0 0.0
    %1865 = vmatprep.subr.mxu0 0.0
    %1866 = vmatpush1.msra.mxu0 0.0
    %1867 = vmatprep.subr.mxu0 0.0
    %1868 = vmatpush1.msra.mxu0 0.0
    %1869 = vmatprep.subr.mxu0 0.0
    %1870 = vmatpush1.msra.mxu0 0.0
    %1871 = vmatprep.subr.mxu0 0.0
    %1872 = vmatpush1.msra.mxu0 0.0
    %1873 = vmatprep.mubr.f32.mxu0 0.0
    %1874 = vmatmul.mubr.f32.gmra.mrb[0].mxu0 %v1804
    %v1875 = vpop.f32.mrb[0].mxu0
    %v1876 = vadd.f32 0.0, %v1875
    %v1877 = vpop.f32.mrb[0].mxu0
    %v1878 = vadd.f32 0.0, %v1877
    %1879 = vdwg.mxu0
    %1880 = vmatprep.subr.mxu0 0.0
    %1881 = vmatpush1.msra.mxu0 %v136
    %1882 = vmatprep.subr.mxu0 0.0
    %1883 = vmatpush1.msra.mxu0 %v139
    %1884 = vmatprep.subr.mxu0 0.0
    %1885 = vmatpush1.msra.mxu0 %v142
    %1886 = vmatprep.subr.mxu0 0.0
    %1887 = vmatpush1.msra.mxu0 %v145
    %1888 = vmatprep.subr.mxu0 0.0
    %1889 = vmatpush1.msra.mxu0 %v148
    %1890 = vmatprep.subr.mxu0 0.0
    %1891 = vmatpush1.msra.mxu0 %v151
    %1892 = vmatprep.subr.mxu0 0.0
    %1893 = vmatpush1.msra.mxu0 %v154
    %1894 = vmatprep.subr.mxu0 0.0
    %1895 = vmatpush1.msra.mxu0 %v157
    %1896 = vmatprep.subr.mxu0 0.0
    %1897 = vmatpush1.msra.mxu0 %v160
    %1898 = vmatprep.subr.mxu0 0.0
    %1899 = vmatpush1.msra.mxu0 %v163
    %1900 = vmatprep.subr.mxu0 0.0
    %1901 = vmatpush1.msra.mxu0 %v166
    %1902 = vmatprep.subr.mxu0 0.0
    %1903 = vmatpush1.msra.mxu0 %v169
    %1904 = vmatprep.subr.mxu0 0.0
    %1905 = vmatpush1.msra.mxu0 %v172
    %1906 = vmatprep.subr.mxu0 0.0
    %1907 = vmatpush1.msra.mxu0 %v175
    %1908 = vmatprep.subr.mxu0 0.0
    %1909 = vmatpush1.msra.mxu0 %v178
    %1910 = vmatprep.subr.mxu0 0.0
    %1911 = vmatpush1.msra.mxu0 %v181
    %1912 = vmatprep.subr.mxu0 0.0
    %1913 = vmatpush1.msra.mxu0 0.0
    %1914 = vmatprep.subr.mxu0 0.0
    %1915 = vmatpush1.msra.mxu0 0.0
    %1916 = vmatprep.subr.mxu0 0.0
    %1917 = vmatpush1.msra.mxu0 0.0
    %1918 = vmatprep.subr.mxu0 0.0
    %1919 = vmatpush1.msra.mxu0 0.0
    %1920 = vmatprep.subr.mxu0 0.0
    %1921 = vmatpush1.msra.mxu0 0.0
    %1922 = vmatprep.subr.mxu0 0.0
    %1923 = vmatpush1.msra.mxu0 0.0
    %1924 = vmatprep.subr.mxu0 0.0
    %1925 = vmatpush1.msra.mxu0 0.0
    %1926 = vmatprep.subr.mxu0 0.0
    %1927 = vmatpush1.msra.mxu0 0.0
    %1928 = vmatprep.subr.mxu0 0.0
    %1929 = vmatpush1.msra.mxu0 0.0
    %1930 = vmatprep.subr.mxu0 0.0
    %1931 = vmatpush1.msra.mxu0 0.0
    %1932 = vmatprep.subr.mxu0 0.0
    %1933 = vmatpush1.msra.mxu0 0.0
    %1934 = vmatprep.subr.mxu0 0.0
    %1935 = vmatpush1.msra.mxu0 0.0
    %1936 = vmatprep.subr.mxu0 0.0
    %1937 = vmatpush1.msra.mxu0 0.0
    %1938 = vmatprep.subr.mxu0 0.0
    %1939 = vmatpush1.msra.mxu0 0.0
    %1940 = vmatprep.subr.mxu0 0.0
    %1941 = vmatpush1.msra.mxu0 0.0
    %1942 = vmatprep.subr.mxu0 0.0
    %1943 = vmatpush1.msra.mxu0 0.0
    %1944 = vmatprep.mubr.f32.mxu0 0.0
    %1945 = vmatmul.mubr.f32.gmra.mrb[0].mxu0 %v1804
    %v1946 = vpop.f32.mrb[0].mxu0
    %v1947 = vadd.f32 0.0, %v1946
    %v1948 = vpop.f32.mrb[0].mxu0
    %1949 = vdwg.mxu0
    %v1950 = vadd.f32 %v1806, %v1876
    %v1951 = vxor.u32 %v1950, 2147483648
    %v1952 = vmul.f32 %v1951, 1.442695
    %v1953 = vpow.pop %v1952
    %v1954 = vadd.f32 %v1953, 1.0
    %v1955 = vrcp.pop %v1954
    %v1956 = vmul.f32 1.0, %v1955
    %v1957 = vadd.f32 %v1807, %v1878
    %v1958 = vxor.u32 %v1957, 2147483648
    %v1959 = vmul.f32 %v1958, 1.442695
    %v1960 = vpow.pop %v1959
    %v1961 = vadd.f32 %v1960, 1.0
    %v1962 = vrcp.pop %v1961
    %v1963 = vmul.f32 1.0, %v1962
    %v1964 = vadd.f32 %v1947, %v661
    %v1965 = vmul.f32 %v1956, %v1964
    %v1966 = vadd.f32 %v1808, %v1965
    %v1967 = vtanh.pop %v1966
    %v1968 = vsub.f32 1.0, %v1963
    %v1969 = vmul.f32 %v1968, %v1967
    %v1970 = vmul.f32 %v1963, %v1804
    %v1971 = vadd.f32 %v1969, %v1970
    %vm1972 = vcmp.gt.s32.totalorder %v183, 7
    %v1973 = vsel %vm1972, 1, 0
    %v1974 = vcvt.s32.f32 %v1973
    %1976 = vset.pattern.permute.xlu0 0
    %1977 = vperm.xlu0 %1976, %v1974
    %v1978 = vpop.permute.xlu0 %1977
    %v1980 = vmul.f32 %v1978, %v1971
    %s1981 = scalar_lea.vmem [#allocation3], 56
    %1982 = vst [vmem:[%s1981] sm:$0xff] %v1980
    %v1983 = vsub.f32 1.0, %v1974
    %1985 = vset.pattern.permute.xlu0 0
    %1986 = vperm.xlu0 %1985, %v1983
    %v1987 = vpop.permute.xlu0 %1986
    %v1989 = vmul.f32 %v1987, %v1804
    %v1990 = vadd.f32 %v1980, %v1989
    %v1991 = vld [vmem:[#allocation3] sm:$0xff]
    %v1992 = vld [vmem:[#allocation3 + $0x8] sm:$0xff]
    %v1993 = vld [vmem:[#allocation3 + $0x10] sm:$0xff]
    %v1994 = vld [vmem:[#allocation3 + $0x18] sm:$0xff]
    %v1995 = vld [vmem:[#allocation3 + $0x20] sm:$0xff]
    %v1996 = vld [vmem:[#allocation3 + $0x28] sm:$0xff]
    %v1997 = vld [vmem:[#allocation3 + $0x30] sm:$0xff]
    %v1998 = vld [vmem:[#allocation3 + $0x38] sm:$0xff]
    %v1999 = vld [vmem:[#allocation10] sm:$0xff]
    %v2000 = vld [vmem:[#allocation10 + $0x8] sm:$0xff]
    %v2001 = vld [vmem:[#allocation10 + $0x10] sm:$0xff]
    %v2002 = vld [vmem:[#allocation10 + $0x18] sm:$0xff]
    %v2003 = vld [vmem:[#allocation10 + $0x20] sm:$0xff]
    %v2004 = vld [vmem:[#allocation10 + $0x28] sm:$0xff]
    %v2005 = vld [vmem:[#allocation10 + $0x30] sm:$0xff]
    %v2006 = vld [vmem:[#allocation10 + $0x38] sm:$0xff]
    %v2007 = vld [vmem:[#allocation10 + $0x40] sm:$0xff]
    %v2008 = vld [vmem:[#allocation10 + $0x48] sm:$0xff]
    %v2009 = vld [vmem:[#allocation10 + $0x50] sm:$0xff]
    %v2010 = vld [vmem:[#allocation10 + $0x58] sm:$0xff]
    %v2011 = vld [vmem:[#allocation10 + $0x60] sm:$0xff]
    %v2012 = vld [vmem:[#allocation10 + $0x68] sm:$0xff]
    %v2013 = vld [vmem:[#allocation10 + $0x70] sm:$0xff]
    %v2014 = vld [vmem:[#allocation10 + $0x78] sm:$0xff]
    %2015 = vmatprep.subr.mxu0 0.0
    %2016 = vmatpush1.msra.mxu0 %v1999
    %2017 = vmatprep.subr.mxu0 0.0
    %2018 = vmatpush1.msra.mxu0 %v2000
    %2019 = vmatprep.subr.mxu0 0.0
    %2020 = vmatpush1.msra.mxu0 %v2001
    %2021 = vmatprep.subr.mxu0 0.0
    %2022 = vmatpush1.msra.mxu0 %v2002
    %2023 = vmatprep.subr.mxu0 0.0
    %2024 = vmatpush1.msra.mxu0 %v2003
    %2025 = vmatprep.subr.mxu0 0.0
    %2026 = vmatpush1.msra.mxu0 %v2004
    %2027 = vmatprep.subr.mxu0 0.0
    %2028 = vmatpush1.msra.mxu0 %v2005
    %2029 = vmatprep.subr.mxu0 0.0
    %2030 = vmatpush1.msra.mxu0 %v2006
    %2031 = vmatprep.subr.mxu0 0.0
    %2032 = vmatpush1.msra.mxu0 %v2007
    %2033 = vmatprep.subr.mxu0 0.0
    %2034 = vmatpush1.msra.mxu0 %v2008
    %2035 = vmatprep.subr.mxu0 0.0
    %2036 = vmatpush1.msra.mxu0 %v2009
    %2037 = vmatprep.subr.mxu0 0.0
    %2038 = vmatpush1.msra.mxu0 %v2010
    %2039 = vmatprep.subr.mxu0 0.0
    %2040 = vmatpush1.msra.mxu0 %v2011
    %2041 = vmatprep.subr.mxu0 0.0
    %2042 = vmatpush1.msra.mxu0 %v2012
    %2043 = vmatprep.subr.mxu0 0.0
    %2044 = vmatpush1.msra.mxu0 %v2013
    %2045 = vmatprep.subr.mxu0 0.0
    %2046 = vmatpush1.msra.mxu0 %v2014
    %2047 = vmatprep.subr.mxu0 0.0
    %2048 = vmatpush1.msra.mxu0 0.0
    %2049 = vmatprep.subr.mxu0 0.0
    %2050 = vmatpush1.msra.mxu0 0.0
    %2051 = vmatprep.subr.mxu0 0.0
    %2052 = vmatpush1.msra.mxu0 0.0
    %2053 = vmatprep.subr.mxu0 0.0
    %2054 = vmatpush1.msra.mxu0 0.0
    %2055 = vmatprep.subr.mxu0 0.0
    %2056 = vmatpush1.msra.mxu0 0.0
    %2057 = vmatprep.subr.mxu0 0.0
    %2058 = vmatpush1.msra.mxu0 0.0
    %2059 = vmatprep.subr.mxu0 0.0
    %2060 = vmatpush1.msra.mxu0 0.0
    %2061 = vmatprep.subr.mxu0 0.0
    %2062 = vmatpush1.msra.mxu0 0.0
    %2063 = vmatprep.subr.mxu0 0.0
    %2064 = vmatpush1.msra.mxu0 0.0
    %2065 = vmatprep.subr.mxu0 0.0
    %2066 = vmatpush1.msra.mxu0 0.0
    %2067 = vmatprep.subr.mxu0 0.0
    %2068 = vmatpush1.msra.mxu0 0.0
    %2069 = vmatprep.subr.mxu0 0.0
    %2070 = vmatpush1.msra.mxu0 0.0
    %2071 = vmatprep.subr.mxu0 0.0
    %2072 = vmatpush1.msra.mxu0 0.0
    %2073 = vmatprep.subr.mxu0 0.0
    %2074 = vmatpush1.msra.mxu0 0.0
    %2075 = vmatprep.subr.mxu0 0.0
    %2076 = vmatpush1.msra.mxu0 0.0
    %2077 = vmatprep.subr.mxu0 0.0
    %2078 = vmatpush1.msra.mxu0 0.0
    %2079 = vmatprep.mubr.f32.mxu0 0.0
    %2080 = vmatmul.mubr.f32.gmra.mrb[0].mxu0 %v1991
    %v2081 = vpop.f32.mrb[0].mxu0
    %v2082 = vadd.f32 0.0, %v2081
    %v2083 = vpop.f32.mrb[0].mxu0
    %2084 = vmatprep.mubr.f32.mxu0 0.0
    %2085 = vmatmul.mubr.f32.gmra.mrb[0].mxu0 %v1992
    %v2086 = vpop.f32.mrb[0].mxu0
    %v2087 = vadd.f32 0.0, %v2086
    %v2088 = vpop.f32.mrb[0].mxu0
    %2089 = vmatprep.mubr.f32.mxu0 0.0
    %2090 = vmatmul.mubr.f32.gmra.mrb[0].mxu0 %v1993
    %v2091 = vpop.f32.mrb[0].mxu0
    %v2092 = vadd.f32 0.0, %v2091
    %v2093 = vpop.f32.mrb[0].mxu0
    %2094 = vmatprep.mubr.f32.mxu0 0.0
    %2095 = vmatmul.mubr.f32.gmra.mrb[0].mxu0 %v1994
    %v2096 = vpop.f32.mrb[0].mxu0
    %v2097 = vadd.f32 0.0, %v2096
    %v2098 = vpop.f32.mrb[0].mxu0
    %2099 = vmatprep.mubr.f32.mxu0 0.0
    %2100 = vmatmul.mubr.f32.gmra.mrb[0].mxu0 %v1995
    %v2101 = vpop.f32.mrb[0].mxu0
    %v2102 = vadd.f32 0.0, %v2101
    %v2103 = vpop.f32.mrb[0].mxu0
    %2104 = vmatprep.mubr.f32.mxu0 0.0
    %2105 = vmatmul.mubr.f32.gmra.mrb[0].mxu0 %v1996
    %v2106 = vpop.f32.mrb[0].mxu0
    %v2107 = vadd.f32 0.0, %v2106
    %v2108 = vpop.f32.mrb[0].mxu0
    %2109 = vmatprep.mubr.f32.mxu0 0.0
    %2110 = vmatmul.mubr.f32.gmra.mrb[0].mxu0 %v1997
    %v2111 = vpop.f32.mrb[0].mxu0
    %v2112 = vadd.f32 0.0, %v2111
    %v2113 = vpop.f32.mrb[0].mxu0
    %2114 = vmatprep.mubr.f32.mxu0 0.0
    %2115 = vmatmul.mubr.f32.gmra.mrb[0].mxu0 %v1998
    %v2116 = vpop.f32.mrb[0].mxu0
    %v2117 = vadd.f32 0.0, %v2116
    %v2118 = vpop.f32.mrb[0].mxu0
    %2119 = vdwg.mxu0
    %v2120 = vld [vmem:[#allocation12] sm:$0xff]
    %v2121 = vld [vmem:[#allocation12 + $0x8] sm:$0xff]
    %v2122 = vld [vmem:[#allocation12 + $0x10] sm:$0xff]
    %v2123 = vld [vmem:[#allocation12 + $0x18] sm:$0xff]
    %v2124 = vld [vmem:[#allocation12 + $0x20] sm:$0xff]
    %v2125 = vld [vmem:[#allocation12 + $0x28] sm:$0xff]
    %v2126 = vld [vmem:[#allocation12 + $0x30] sm:$0xff]
    %v2127 = vld [vmem:[#allocation12 + $0x38] sm:$0xff]
    %v2128 = vld [vmem:[#allocation12 + $0x40] sm:$0xff]
    %v2129 = vld [vmem:[#allocation12 + $0x48] sm:$0xff]
    %v2130 = vld [vmem:[#allocation12 + $0x50] sm:$0xff]
    %v2131 = vld [vmem:[#allocation12 + $0x58] sm:$0xff]
    %v2132 = vld [vmem:[#allocation12 + $0x60] sm:$0xff]
    %v2133 = vld [vmem:[#allocation12 + $0x68] sm:$0xff]
    %v2134 = vld [vmem:[#allocation12 + $0x70] sm:$0xff]
    %v2135 = vld [vmem:[#allocation12 + $0x78] sm:$0xff]
    %2136 = vmatprep.subr.mxu0 0.0
    %2137 = vmatpush1.msra.mxu0 %v2120
    %2138 = vmatprep.subr.mxu0 0.0
    %2139 = vmatpush1.msra.mxu0 %v2121
    %2140 = vmatprep.subr.mxu0 0.0
    %2141 = vmatpush1.msra.mxu0 %v2122
    %2142 = vmatprep.subr.mxu0 0.0
    %2143 = vmatpush1.msra.mxu0 %v2123
    %2144 = vmatprep.subr.mxu0 0.0
    %2145 = vmatpush1.msra.mxu0 %v2124
    %2146 = vmatprep.subr.mxu0 0.0
    %2147 = vmatpush1.msra.mxu0 %v2125
    %2148 = vmatprep.subr.mxu0 0.0
    %2149 = vmatpush1.msra.mxu0 %v2126
    %2150 = vmatprep.subr.mxu0 0.0
    %2151 = vmatpush1.msra.mxu0 %v2127
    %2152 = vmatprep.subr.mxu0 0.0
    %2153 = vmatpush1.msra.mxu0 %v2128
    %2154 = vmatprep.subr.mxu0 0.0
    %2155 = vmatpush1.msra.mxu0 %v2129
    %2156 = vmatprep.subr.mxu0 0.0
    %2157 = vmatpush1.msra.mxu0 %v2130
    %2158 = vmatprep.subr.mxu0 0.0
    %2159 = vmatpush1.msra.mxu0 %v2131
    %2160 = vmatprep.subr.mxu0 0.0
    %2161 = vmatpush1.msra.mxu0 %v2132
    %2162 = vmatprep.subr.mxu0 0.0
    %2163 = vmatpush1.msra.mxu0 %v2133
    %2164 = vmatprep.subr.mxu0 0.0
    %2165 = vmatpush1.msra.mxu0 %v2134
    %2166 = vmatprep.subr.mxu0 0.0
    %2167 = vmatpush1.msra.mxu0 %v2135
    %2168 = vmatprep.subr.mxu0 0.0
    %2169 = vmatpush1.msra.mxu0 0.0
    %2170 = vmatprep.subr.mxu0 0.0
    %2171 = vmatpush1.msra.mxu0 0.0
    %2172 = vmatprep.subr.mxu0 0.0
    %2173 = vmatpush1.msra.mxu0 0.0
    %2174 = vmatprep.subr.mxu0 0.0
    %2175 = vmatpush1.msra.mxu0 0.0
    %2176 = vmatprep.subr.mxu0 0.0
    %2177 = vmatpush1.msra.mxu0 0.0
    %2178 = vmatprep.subr.mxu0 0.0
    %2179 = vmatpush1.msra.mxu0 0.0
    %2180 = vmatprep.subr.mxu0 0.0
    %2181 = vmatpush1.msra.mxu0 0.0
    %2182 = vmatprep.subr.mxu0 0.0
    %2183 = vmatpush1.msra.mxu0 0.0
    %2184 = vmatprep.subr.mxu0 0.0
    %2185 = vmatpush1.msra.mxu0 0.0
    %2186 = vmatprep.subr.mxu0 0.0
    %2187 = vmatpush1.msra.mxu0 0.0
    %2188 = vmatprep.subr.mxu0 0.0
    %2189 = vmatpush1.msra.mxu0 0.0
    %2190 = vmatprep.subr.mxu0 0.0
    %2191 = vmatpush1.msra.mxu0 0.0
    %2192 = vmatprep.subr.mxu0 0.0
    %2193 = vmatpush1.msra.mxu0 0.0
    %2194 = vmatprep.subr.mxu0 0.0
    %2195 = vmatpush1.msra.mxu0 0.0
    %2196 = vmatprep.subr.mxu0 0.0
    %2197 = vmatpush1.msra.mxu0 0.0
    %2198 = vmatprep.subr.mxu0 0.0
    %2199 = vmatpush1.msra.mxu0 0.0
    %2200 = vmatprep.mubr.f32.mxu0 0.0
    %2201 = vmatmul.mubr.f32.gmra.mrb[0].mxu0 %v1990
    %v2202 = vpop.f32.mrb[0].mxu0
    %v2203 = vadd.f32 0.0, %v2202
    %v2204 = vpop.f32.mrb[0].mxu0
    %2205 = vdwg.mxu0
    %v2206 = vmul.f32 %v677, %v2203
    %v2207 = vmul.f32 %v862, %v2203
    %v2208 = vmul.f32 %v1048, %v2203
    %v2209 = vmul.f32 %v1234, %v2203
    %v2210 = vmul.f32 %v1420, %v2203
    %v2211 = vmul.f32 %v1606, %v2203
    %v2212 = vmul.f32 %v1792, %v2203
    %v2213 = vmul.f32 %v1978, %v2203
    %v2214 = vadd.f32 %v2082, %v2206
    %v2215 = vadd.f32 %v2087, %v2207
    %v2216 = vadd.f32 %v2092, %v2208
    %v2217 = vadd.f32 %v2097, %v2209
    %v2218 = vadd.f32 %v2102, %v2210
    %v2219 = vadd.f32 %v2107, %v2211
    %v2220 = vadd.f32 %v2112, %v2212
    %v2221 = vadd.f32 %v2117, %v2213
    %v2222 = vxor.u32 %v2214, 2147483648
    %v2223 = vxor.u32 %v2215, 2147483648
    %v2224 = vxor.u32 %v2216, 2147483648
    %v2225 = vxor.u32 %v2217, 2147483648
    %v2226 = vxor.u32 %v2218, 2147483648
    %v2227 = vxor.u32 %v2219, 2147483648
    %v2228 = vxor.u32 %v2220, 2147483648
    %v2229 = vxor.u32 %v2221, 2147483648
    %v2230 = vmul.f32 %v2222, 1.442695
    %v2231 = vpow.pop %v2230
    %v2232 = vmul.f32 %v2223, 1.442695
    %v2233 = vpow.pop %v2232
    %v2234 = vmul.f32 %v2224, 1.442695
    %v2235 = vpow.pop %v2234
    %v2236 = vmul.f32 %v2225, 1.442695
    %v2237 = vpow.pop %v2236
    %v2238 = vmul.f32 %v2226, 1.442695
    %v2239 = vpow.pop %v2238
    %v2240 = vmul.f32 %v2227, 1.442695
    %v2241 = vpow.pop %v2240
    %v2242 = vmul.f32 %v2228, 1.442695
    %v2243 = vpow.pop %v2242
    %v2244 = vmul.f32 %v2229, 1.442695
    %v2245 = vpow.pop %v2244
    %v2246 = vadd.f32 %v2231, 1.0
    %v2247 = vadd.f32 %v2233, 1.0
    %v2248 = vadd.f32 %v2235, 1.0
    %v2249 = vadd.f32 %v2237, 1.0
    %v2250 = vadd.f32 %v2239, 1.0
    %v2251 = vadd.f32 %v2241, 1.0
    %v2252 = vadd.f32 %v2243, 1.0
    %v2253 = vadd.f32 %v2245, 1.0
    %v2254 = vrcp.pop %v2246
    %v2255 = vmul.f32 1.0, %v2254
    %v2256 = vrcp.pop %v2247
    %v2257 = vmul.f32 1.0, %v2256
    %v2258 = vrcp.pop %v2248
    %v2259 = vmul.f32 1.0, %v2258
    %v2260 = vrcp.pop %v2249
    %v2261 = vmul.f32 1.0, %v2260
    %v2262 = vrcp.pop %v2250
    %v2263 = vmul.f32 1.0, %v2262
    %v2264 = vrcp.pop %v2251
    %v2265 = vmul.f32 1.0, %v2264
    %v2266 = vrcp.pop %v2252
    %v2267 = vmul.f32 1.0, %v2266
    %v2268 = vrcp.pop %v2253
    %v2269 = vmul.f32 1.0, %v2268
    %v2270 = vld [vmem:[%s8] sm:$0x1]
    %v2272 = vlaneseq
    %v2273 = vshrl.u32 %v2272, 7
    %v2274 = vsub.s32 0, %v2273
    %v2275 = vrot.slane %v2270, %v2274
    %v2277 = vmul.f32 %v2255, %v2275
    %v2278 = vmul.f32 %v2257, %v2275
    %v2279 = vmul.f32 %v2259, %v2275
    %v2280 = vmul.f32 %v2261, %v2275
    %v2281 = vmul.f32 %v2263, %v2275
    %v2282 = vmul.f32 %v2265, %v2275
    %v2283 = vmul.f32 %v2267, %v2275
    %v2284 = vmul.f32 %v2269, %v2275
    %2285 = vadd.xlane.f32.xlu0 %v2277
    %v2286 = vpop.xlane.xlu0 %2285
    %2287 = vadd.xlane.f32.xlu0 %v2278
    %v2288 = vpop.xlane.xlu0 %2287
    %2289 = vadd.xlane.f32.xlu0 %v2279
    %v2290 = vpop.xlane.xlu0 %2289
    %2291 = vadd.xlane.f32.xlu0 %v2280
    %v2292 = vpop.xlane.xlu0 %2291
    %2293 = vadd.xlane.f32.xlu0 %v2281
    %v2294 = vpop.xlane.xlu0 %2293
    %2295 = vadd.xlane.f32.xlu0 %v2282
    %v2296 = vpop.xlane.xlu0 %2295
    %2297 = vadd.xlane.f32.xlu0 %v2283
    %v2298 = vpop.xlane.xlu0 %2297
    %2299 = vadd.xlane.f32.xlu0 %v2284
    %v2300 = vpop.xlane.xlu0 %2299
    %v2301 = vmul.f32 %v2286, %v1991
    %v2302 = vmul.f32 %v2288, %v1992
    %v2303 = vmul.f32 %v2290, %v1993
    %v2304 = vmul.f32 %v2292, %v1994
    %v2305 = vmul.f32 %v2294, %v1995
    %v2306 = vmul.f32 %v2296, %v1996
    %v2307 = vmul.f32 %v2298, %v1997
    %v2308 = vmul.f32 %v2300, %v1998
    %v2309 = vadd.f32 %v2301, %v2302
    %v2310 = vadd.f32 %v2309, %v2303
    %v2311 = vadd.f32 %v2310, %v2304
    %v2312 = vadd.f32 %v2311, %v2305
    %v2313 = vadd.f32 %v2312, %v2306
    %v2314 = vadd.f32 %v2313, %v2307
    %v2315 = vadd.f32 %v2314, %v2308
    %v2316 = vld [vmem:[#allocation13] sm:$0xff]
    %v2317 = vld [vmem:[#allocation13 + $0x8] sm:$0xff]
    %v2318 = vld [vmem:[#allocation13 + $0x10] sm:$0xff]
    %v2319 = vld [vmem:[#allocation13 + $0x18] sm:$0xff]
    %v2320 = vld [vmem:[#allocation13 + $0x20] sm:$0xff]
    %v2321 = vld [vmem:[#allocation13 + $0x28] sm:$0xff]
    %v2322 = vld [vmem:[#allocation13 + $0x30] sm:$0xff]
    %v2323 = vld [vmem:[#allocation13 + $0x38] sm:$0xff]
    %v2324 = vld [vmem:[#allocation13 + $0x40] sm:$0xff]
    %v2325 = vld [vmem:[#allocation13 + $0x48] sm:$0xff]
    %v2326 = vld [vmem:[#allocation13 + $0x50] sm:$0xff]
    %v2327 = vld [vmem:[#allocation13 + $0x58] sm:$0xff]
    %v2328 = vld [vmem:[#allocation13 + $0x60] sm:$0xff]
    %v2329 = vld [vmem:[#allocation13 + $0x68] sm:$0xff]
    %v2330 = vld [vmem:[#allocation13 + $0x70] sm:$0xff]
    %v2331 = vld [vmem:[#allocation13 + $0x78] sm:$0xff]
    %v2332 = vld [vmem:[#allocation15] sm:$0xff]
    %v2333 = vld [vmem:[#allocation15 + $0x8] sm:$0xff]
    %v2334 = vld [vmem:[#allocation15 + $0x10] sm:$0xff]
    %v2335 = vld [vmem:[#allocation15 + $0x18] sm:$0xff]
    %v2336 = vld [vmem:[#allocation15 + $0x20] sm:$0xff]
    %v2337 = vld [vmem:[#allocation15 + $0x28] sm:$0xff]
    %v2338 = vld [vmem:[#allocation15 + $0x30] sm:$0xff]
    %v2339 = vld [vmem:[#allocation15 + $0x38] sm:$0xff]
    %v2340 = vld [vmem:[#allocation15 + $0x40] sm:$0xff]
    %v2341 = vld [vmem:[#allocation15 + $0x48] sm:$0xff]
    %v2342 = vld [vmem:[#allocation15 + $0x50] sm:$0xff]
    %v2343 = vld [vmem:[#allocation15 + $0x58] sm:$0xff]
    %v2344 = vld [vmem:[#allocation15 + $0x60] sm:$0xff]
    %v2345 = vld [vmem:[#allocation15 + $0x68] sm:$0xff]
    %v2346 = vld [vmem:[#allocation15 + $0x70] sm:$0xff]
    %v2347 = vld [vmem:[#allocation15 + $0x78] sm:$0xff]
    %2348 = vmatprep.subr.mxu0 0.0
    %2349 = vmatpush1.msra.mxu0 %v2332
    %2350 = vmatprep.subr.mxu0 0.0
    %2351 = vmatpush1.msra.mxu0 %v2333
    %2352 = vmatprep.subr.mxu0 0.0
    %2353 = vmatpush1.msra.mxu0 %v2334
    %2354 = vmatprep.subr.mxu0 0.0
    %2355 = vmatpush1.msra.mxu0 %v2335
    %2356 = vmatprep.subr.mxu0 0.0
    %2357 = vmatpush1.msra.mxu0 %v2336
    %2358 = vmatprep.subr.mxu0 0.0
    %2359 = vmatpush1.msra.mxu0 %v2337
    %2360 = vmatprep.subr.mxu0 0.0
    %2361 = vmatpush1.msra.mxu0 %v2338
    %2362 = vmatprep.subr.mxu0 0.0
    %2363 = vmatpush1.msra.mxu0 %v2339
    %2364 = vmatprep.subr.mxu0 0.0
    %2365 = vmatpush1.msra.mxu0 %v2340
    %2366 = vmatprep.subr.mxu0 0.0
    %2367 = vmatpush1.msra.mxu0 %v2341
    %2368 = vmatprep.subr.mxu0 0.0
    %2369 = vmatpush1.msra.mxu0 %v2342
    %2370 = vmatprep.subr.mxu0 0.0
    %2371 = vmatpush1.msra.mxu0 %v2343
    %2372 = vmatprep.subr.mxu0 0.0
    %2373 = vmatpush1.msra.mxu0 %v2344
    %2374 = vmatprep.subr.mxu0 0.0
    %2375 = vmatpush1.msra.mxu0 %v2345
    %2376 = vmatprep.subr.mxu0 0.0
    %2377 = vmatpush1.msra.mxu0 %v2346
    %2378 = vmatprep.subr.mxu0 0.0
    %2379 = vmatpush1.msra.mxu0 %v2347
    %2380 = vmatprep.subr.mxu0 0.0
    %2381 = vmatpush1.msra.mxu0 0.0
    %2382 = vmatprep.subr.mxu0 0.0
    %2383 = vmatpush1.msra.mxu0 0.0
    %2384 = vmatprep.subr.mxu0 0.0
    %2385 = vmatpush1.msra.mxu0 0.0
    %2386 = vmatprep.subr.mxu0 0.0
    %2387 = vmatpush1.msra.mxu0 0.0
    %2388 = vmatprep.subr.mxu0 0.0
    %2389 = vmatpush1.msra.mxu0 0.0
    %2390 = vmatprep.subr.mxu0 0.0
    %2391 = vmatpush1.msra.mxu0 0.0
    %2392 = vmatprep.subr.mxu0 0.0
    %2393 = vmatpush1.msra.mxu0 0.0
    %2394 = vmatprep.subr.mxu0 0.0
    %2395 = vmatpush1.msra.mxu0 0.0
    %2396 = vmatprep.subr.mxu0 0.0
    %2397 = vmatpush1.msra.mxu0 0.0
    %2398 = vmatprep.subr.mxu0 0.0
    %2399 = vmatpush1.msra.mxu0 0.0
    %2400 = vmatprep.subr.mxu0 0.0
    %2401 = vmatpush1.msra.mxu0 0.0
    %2402 = vmatprep.subr.mxu0 0.0
    %2403 = vmatpush1.msra.mxu0 0.0
    %2404 = vmatprep.subr.mxu0 0.0
    %2405 = vmatpush1.msra.mxu0 0.0
    %2406 = vmatprep.subr.mxu0 0.0
    %2407 = vmatpush1.msra.mxu0 0.0
    %2408 = vmatprep.subr.mxu0 0.0
    %2409 = vmatpush1.msra.mxu0 0.0
    %2410 = vmatprep.subr.mxu0 0.0
    %2411 = vmatpush1.msra.mxu0 0.0
    %2412 = vmatprep.mubr.f32.mxu0 0.0
    %2413 = vmatmul.mubr.f32.gmra.mrb[0].mxu0 %v1990
    %v2414 = vpop.f32.mrb[0].mxu0
    %v2415 = vadd.f32 0.0, %v2414
    %v2416 = vpop.f32.mrb[0].mxu0
    %2417 = vdwg.mxu0
    %2418 = vmatprep.subr.mxu0 0.0
    %2419 = vmatpush1.msra.mxu0 %v2316
    %2420 = vmatprep.subr.mxu0 0.0
    %2421 = vmatpush1.msra.mxu0 %v2317
    %2422 = vmatprep.subr.mxu0 0.0
    %2423 = vmatpush1.msra.mxu0 %v2318
    %2424 = vmatprep.subr.mxu0 0.0
    %2425 = vmatpush1.msra.mxu0 %v2319
    %2426 = vmatprep.subr.mxu0 0.0
    %2427 = vmatpush1.msra.mxu0 %v2320
    %2428 = vmatprep.subr.mxu0 0.0
    %2429 = vmatpush1.msra.mxu0 %v2321
    %2430 = vmatprep.subr.mxu0 0.0
    %2431 = vmatpush1.msra.mxu0 %v2322
    %2432 = vmatprep.subr.mxu0 0.0
    %2433 = vmatpush1.msra.mxu0 %v2323
    %2434 = vmatprep.subr.mxu0 0.0
    %2435 = vmatpush1.msra.mxu0 %v2324
    %2436 = vmatprep.subr.mxu0 0.0
    %2437 = vmatpush1.msra.mxu0 %v2325
    %2438 = vmatprep.subr.mxu0 0.0
    %2439 = vmatpush1.msra.mxu0 %v2326
    %2440 = vmatprep.subr.mxu0 0.0
    %2441 = vmatpush1.msra.mxu0 %v2327
    %2442 = vmatprep.subr.mxu0 0.0
    %2443 = vmatpush1.msra.mxu0 %v2328
    %2444 = vmatprep.subr.mxu0 0.0
    %2445 = vmatpush1.msra.mxu0 %v2329
    %2446 = vmatprep.subr.mxu0 0.0
    %2447 = vmatpush1.msra.mxu0 %v2330
    %2448 = vmatprep.subr.mxu0 0.0
    %2449 = vmatpush1.msra.mxu0 %v2331
    %2450 = vmatprep.subr.mxu0 0.0
    %2451 = vmatpush1.msra.mxu0 0.0
    %2452 = vmatprep.subr.mxu0 0.0
    %2453 = vmatpush1.msra.mxu0 0.0
    %2454 = vmatprep.subr.mxu0 0.0
    %2455 = vmatpush1.msra.mxu0 0.0
    %2456 = vmatprep.subr.mxu0 0.0
    %2457 = vmatpush1.msra.mxu0 0.0
    %2458 = vmatprep.subr.mxu0 0.0
    %2459 = vmatpush1.msra.mxu0 0.0
    %2460 = vmatprep.subr.mxu0 0.0
    %2461 = vmatpush1.msra.mxu0 0.0
    %2462 = vmatprep.subr.mxu0 0.0
    %2463 = vmatpush1.msra.mxu0 0.0
    %2464 = vmatprep.subr.mxu0 0.0
    %2465 = vmatpush1.msra.mxu0 0.0
    %2466 = vmatprep.subr.mxu0 0.0
    %2467 = vmatpush1.msra.mxu0 0.0
    %2468 = vmatprep.subr.mxu0 0.0
    %2469 = vmatpush1.msra.mxu0 0.0
    %2470 = vmatprep.subr.mxu0 0.0
    %2471 = vmatpush1.msra.mxu0 0.0
    %2472 = vmatprep.subr.mxu0 0.0
    %2473 = vmatpush1.msra.mxu0 0.0
    %2474 = vmatprep.subr.mxu0 0.0
    %2475 = vmatpush1.msra.mxu0 0.0
    %2476 = vmatprep.subr.mxu0 0.0
    %2477 = vmatpush1.msra.mxu0 0.0
    %2478 = vmatprep.subr.mxu0 0.0
    %2479 = vmatpush1.msra.mxu0 0.0
    %2480 = vmatprep.subr.mxu0 0.0
    %2481 = vmatpush1.msra.mxu0 0.0
    %2482 = vmatprep.mubr.f32.mxu0 0.0
    %2483 = vmatmul.mubr.f32.gmra.mrb[0].mxu0 %v2315
    %v2484 = vpop.f32.mrb[0].mxu0
    %v2485 = vadd.f32 %v2415, %v2484
    %v2486 = vpop.f32.mrb[0].mxu0
    %2487 = vdwg.mxu0
    %2488 = vst [vmem:[#allocation16] sm:$0xff] %v2485
    // Predicated region
    $region74: #{tpu_custom_call.1} parent=1 // pred_check
      _
    $region75: #{tpu_custom_call.1} parent=1 // pred_check_branch
      %2490 = sbr.rel (0) target = $region77
    $region76: #{tpu_custom_call.1} parent=1 // pred_region
      %s2492 = ssub.s32 128, 128
      %2493 = vsyncadd [#allocation6], %s2492
      %s2495 = sshll.u32 [#allocation16], 4
      %s2496 = int_to_ptr.vmem [resolvable:$true] %s2495
      %2498 = dma.vmem_to_hbm [thread:$0]  %s2496, 128, %s11, [#allocation6]
    $region77: #{tpu_custom_call.1} parent=1 // pred_fallthru
      _
    // Predicated region
    $region78: #{tpu_custom_call.1} parent=1 // pred_check
      _
    $region79: #{tpu_custom_call.1} parent=1 // pred_check_branch
      %2500 = sbr.rel (0) target = $region81
    $region80: #{tpu_custom_call.1} parent=1 // pred_region
      %2501 = dma.done [#allocation6], 128
    $region81: #{tpu_custom_call.1} parent=1 // pred_fallthru
      _
    %2502 = vsyncpa [#allocation5], 1
    %2503 = vsyncpa [#allocation8], 1
    %2504 = vsyncpa [#allocation11], 1
    %2505 = vsyncpa [#allocation14], 1
    %2506 = vsyncpa [#allocation6], 1

</llo_original>
